<compile_context>
chip_gen: v5e
topology: v5e:2x2
jax: 0.10.0
libtpu: 0.0.40
codegen_flags: <defaults>
</compile_context>

<pallas_src>
import functools
import math

import jax
import jax.numpy as jnp
from jax.experimental import pallas as pl
from jax.experimental.pallas import tpu as pltpu

# ---- small synthetic config (prot_bert is 1024-hidden/30-layer; we shrink) ----
VOCAB = 30
HIDDEN = 32
LAYERS = 2
HEADS = 2
HEAD_DIM = HIDDEN // HEADS
INTER = 64
MAX_POS = 64
HEAD_DIMS = [512, 256, 128, 32, 1]      # exactly as in the PyTorch module's head
LN_EPS = 1e-12

VMEM_SPEC = pl.BlockSpec(memory_space=pltpu.MemorySpace.VMEM)


# -------------------------- in-kernel helpers --------------------------

def _ln(x, g, b):
    mu = jnp.mean(x, axis=-1, keepdims=True)
    var = jnp.mean(jnp.square(x - mu), axis=-1, keepdims=True)
    return (x - mu) * jax.lax.rsqrt(var + LN_EPS) * g + b


def _gelu(x):
    # TODO(synk): HF BERT uses exact erf-GELU; tanh-approx GELU used for Mosaic-safe lowering.
    return 0.5 * x * (1.0 + jnp.tanh(0.7978845608028654 * (x + 0.044715 * x * x * x)))


# -------------------------- single fused forward kernel --------------------------

def _bert_forward_kernel(B, S,
                         x_ref, bias_ref, watt_ref, batt_ref, wo_ref,
                         wi_ref, wf_ref, bi_ref, vec_ref, poolw_ref,
                         hw0_ref, hw1_ref, hw2_ref, hw3_ref, hw4_ref, hb_ref,
                         o_ref):
    """Whole BertFinetuneModel forward in one kernel.

    x_ref   : (B*S, H)    embeddings sum (word+pos+type), pre-LayerNorm
    bias_ref: (B, 1, S)   additive attention-mask bias
    watt_ref: (3*LAYERS*HEADS, H, D)   q|k|v head-major weights (scale folded into q)
    batt_ref: (3*LAYERS*HEADS, 1, D)   q|k|v head-major biases
    wo_ref  : (LAYERS*HEADS, D, H)     per-head output-projection weights
    wi_ref  : (LAYERS, H, INTER), wf_ref: (LAYERS, INTER, H), bi_ref: (LAYERS, 1, INTER)
    vec_ref : (3 + 6*LAYERS, H)  packed [emb_ln_g, emb_ln_b,
                                         per-layer (bo, ln1_g, ln1_b, bf, ln2_g, ln2_b),
                                         pool_b]
    poolw_ref: (H, H); hw*_ref: MLP-head weights; hb_ref: (1, sum(HEAD_DIMS)) packed biases
    o_ref   : (B, 1) logits
    """
    H, D, NH, NL = HIDDEN, HEAD_DIM, HEADS, LAYERS

    x = x_ref[...]                                            # (B*S, H) f32
    x = _ln(x, vec_ref[0:1, :], vec_ref[1:2, :])              # embeddings LayerNorm (fused)
    bias = bias_ref[...]                                      # (B, 1, S) mask bias

    for l in range(NL):
        # ---- self-attention: per-head projections (head-major weights), batched over B ----
        attn = None
        for h in range(NH):
            idx = l * NH + h
            q = jnp.dot(x, watt_ref[0 * NL * NH + idx],
                        preferred_element_type=jnp.float32) + batt_ref[0 * NL * NH + idx]
            k = jnp.dot(x, watt_ref[1 * NL * NH + idx],
                        preferred_element_type=jnp.float32) + batt_ref[1 * NL * NH + idx]
            v = jnp.dot(x, watt_ref[2 * NL * NH + idx],
                        preferred_element_type=jnp.float32) + batt_ref[2 * NL * NH + idx]
            q3 = q.reshape(B, S, D)
            k3 = k.reshape(B, S, D)
            v3 = v.reshape(B, S, D)
            # scale already folded into the Q weights at init time
            s = jnp.einsum('bqd,bkd->bqk', q3, k3,
                           preferred_element_type=jnp.float32) + bias      # (B, S, S)
            m = jnp.max(s, axis=-1, keepdims=True)
            p = jnp.exp(s - m)
            denom = jnp.sum(p, axis=-1, keepdims=True)
            p = p * pl.reciprocal(denom, approx=True)                      # EUP slot, ~free
            ctx = jnp.einsum('bqk,bkd->bqd', p, v3,
                             preferred_element_type=jnp.float32)           # (B, S, D)
            # Per-head output projection, accumulated over heads (no head merge/concat).
            contrib = jnp.dot(ctx.reshape(B * S, D), wo_ref[idx],
                              preferred_element_type=jnp.float32)          # (B*S, H)
            attn = contrib if attn is None else attn + contrib

        vb = 2 + 6 * l
        attn = attn + vec_ref[vb:vb + 1, :]                                # + bo
        x1 = _ln(attn + x, vec_ref[vb + 1:vb + 2, :], vec_ref[vb + 2:vb + 3, :])

        # ---- FFN (GELU) + residual + LayerNorm ----
        h1 = _gelu(jnp.dot(x1, wi_ref[l],
                           preferred_element_type=jnp.float32) + bi_ref[l])
        ff = jnp.dot(h1, wf_ref[l],
                     preferred_element_type=jnp.float32) + vec_ref[vb + 3:vb + 4, :]
        x = _ln(ff + x1, vec_ref[vb + 4:vb + 5, :], vec_ref[vb + 5:vb + 6, :])

    # ---- pooler on CLS tokens: plain slice of the resident activation ----
    cls = x.reshape(B, S, H)[:, 0:1, :].reshape(B, H)                      # (B, H)
    pb_row = 2 + 6 * NL
    pooled = jnp.tanh(jnp.dot(cls, poolw_ref[...],
                              preferred_element_type=jnp.float32)
                      + vec_ref[pb_row:pb_row + 1, :])

    # ---- 5-layer MLP head (Linear->ReLU x4, Linear->1); only (B,1) leaves the kernel ----
    hws = (hw0_ref, hw1_ref, hw2_ref, hw3_ref, hw4_ref)
    act = pooled
    off = 0
    for i, d in enumerate(HEAD_DIMS):
        act = jnp.dot(act, hws[i][...],
                      preferred_element_type=jnp.float32) + hb_ref[:, off:off + d]
        if i < len(HEAD_DIMS) - 1:
            act = jnp.maximum(act, 0.0)
        off += d
    o_ref[...] = act.astype(o_ref.dtype)


# -------------------------- parameters --------------------------

def init_params(key):
    keys = iter(jax.random.split(key, 256))

    def normal(shape):
        return 0.02 * jax.random.normal(next(keys), shape, jnp.float32)

    p = {
        "word_emb": normal((VOCAB, HIDDEN)),
        "pos_emb": normal((MAX_POS, HIDDEN)),
        "type_emb": normal((2, HIDDEN)),
    }

    scale = 1.0 / math.sqrt(HEAD_DIM)
    wq, wk, wv, bq, bk, bv, wo = [], [], [], [], [], [], []
    wi, wf, bi = [], [], []
    # Packed (rows of H) slab: emb LN, per-layer [bo, ln1_g, ln1_b, bf, ln2_g, ln2_b], pool_b.
    vec_rows = [jnp.ones((HIDDEN,), jnp.float32),     # emb LN gamma
                jnp.zeros((HIDDEN,), jnp.float32)]    # emb LN beta
    for _ in range(LAYERS):
        for _h in range(HEADS):
            wq.append(normal((HIDDEN, HEAD_DIM)) * scale)   # fold 1/sqrt(D) into Q weights
            wk.append(normal((HIDDEN, HEAD_DIM)))
            wv.append(normal((HIDDEN, HEAD_DIM)))
            bq.append(jnp.zeros((1, HEAD_DIM), jnp.float32))   # (zero bias -> scale is moot)
            bk.append(jnp.zeros((1, HEAD_DIM), jnp.float32))
            bv.append(jnp.zeros((1, HEAD_DIM), jnp.float32))
            wo.append(normal((HEAD_DIM, HIDDEN)))
        wi.append(normal((HIDDEN, INTER)))
        bi.append(jnp.zeros((1, INTER), jnp.float32))
        wf.append(normal((INTER, HIDDEN)))
        vec_rows += [jnp.zeros((HIDDEN,), jnp.float32),   # bo
                     jnp.ones((HIDDEN,), jnp.float32),    # ln1 gamma
                     jnp.zeros((HIDDEN,), jnp.float32),   # ln1 beta
                     jnp.zeros((HIDDEN,), jnp.float32),   # bf
                     jnp.ones((HIDDEN,), jnp.float32),    # ln2 gamma
                     jnp.zeros((HIDDEN,), jnp.float32)]   # ln2 beta
    vec_rows.append(jnp.zeros((HIDDEN,), jnp.float32))    # pooler bias

    # Head-major attention params, flattened to 3-D for clean leading-dim indexing:
    #   index = sel*(LAYERS*HEADS) + layer*HEADS + head, sel in {q,k,v}.
    p["w_att"] = jnp.concatenate([jnp.stack(wq), jnp.stack(wk), jnp.stack(wv)], axis=0)
    p["b_att"] = jnp.concatenate([jnp.stack(bq), jnp.stack(bk), jnp.stack(bv)], axis=0)
    p["wo"] = jnp.stack(wo)                 # (LAYERS*HEADS, D, H)
    p["wi"] = jnp.stack(wi)                 # (LAYERS, H, INTER)
    p["wf"] = jnp.stack(wf)                 # (LAYERS, INTER, H)
    p["bi"] = jnp.stack(bi)                 # (LAYERS, 1, INTER)
    p["vec"] = jnp.stack(vec_rows)          # (3 + 6*LAYERS, H)
    p["pool_w"] = normal((HIDDEN, HIDDEN))

    head_w, head_b = [], []
    in_dim = HIDDEN                          # == bert_model.pooler.dense.out_features
    for out_dim in HEAD_DIMS:
        head_w.append(normal((in_dim, out_dim)))
        head_b.append(jnp.zeros((out_dim,), jnp.float32))
        in_dim = out_dim
    p["head_w"] = head_w
    p["head_b"] = jnp.concatenate(head_b).reshape(1, -1)   # (1, 929) packed biases
    return p


# -------------------------- forward pass --------------------------

def bert_finetune_forward(params, input_ids, attention_mask):
    B, S = input_ids.shape

    # Embedding gather + sum stays in plain JAX (tiny, fused by XLA).
    we = jnp.take(params["word_emb"], input_ids, axis=0)               # (B,S,H)
    pe = params["pos_emb"][:S][None, :, :]
    te = params["type_emb"][0][None, None, :]                          # token_type_ids == 0
    x0 = (we + pe + te).reshape(B * S, HIDDEN)

    # HF-style extended attention mask bias, kept at (B,1,S); broadcast inside the kernel.
    bias = ((1.0 - attention_mask.astype(jnp.float32)) * -10000.0).reshape(B, 1, S)

    ins = [x0, bias,
           params["w_att"], params["b_att"], params["wo"],
           params["wi"], params["wf"], params["bi"],
           params["vec"], params["pool_w"],
           *params["head_w"], params["head_b"]]

    # TODO(synk): dropout from the PyTorch module is omitted (inference/eval-mode parity).
    return pl.pallas_call(
        functools.partial(_bert_forward_kernel, B, S),
        out_shape=jax.ShapeDtypeStruct((B, 1), jnp.float32),
        in_specs=[VMEM_SPEC] * len(ins),
        out_specs=VMEM_SPEC,
    )(*ins)                                                            # (B, 1) logits


# -------------------------- main --------------------------

if __name__ == "__main__":
    key = jax.random.PRNGKey(0)
    pkey, dkey = jax.random.split(key)
    params = init_params(pkey)

    B, S = 2, 8
    input_ids = jax.random.randint(dkey, (B, S), 0, VOCAB, dtype=jnp.int32)
    attention_mask = jnp.ones((B, S), jnp.int32).at[1, -2:].set(0)      # padding on sample 1

    fwd = jax.jit(functools.partial(bert_finetune_forward, params))
    out = fwd(input_ids, attention_mask)
    jax.block_until_ready(out)
    assert out.shape == (B, 1) and out.dtype == jnp.float32
    print("KERNEL_OK")
</pallas_src>

<mosaic_0001>
module attributes {stable_mosaic.version = 11 : i64} {
  func.func @_bert_forward_kernel(%arg0: memref<16x32xf32, #tpu.memory_space<vmem>>, %arg1: memref<2x1x8xf32, #tpu.memory_space<vmem>>, %arg2: memref<12x32x16xf32, #tpu.memory_space<vmem>>, %arg3: memref<12x1x16xf32, #tpu.memory_space<vmem>>, %arg4: memref<4x16x32xf32, #tpu.memory_space<vmem>>, %arg5: memref<2x32x64xf32, #tpu.memory_space<vmem>>, %arg6: memref<2x64x32xf32, #tpu.memory_space<vmem>>, %arg7: memref<2x1x64xf32, #tpu.memory_space<vmem>>, %arg8: memref<15x32xf32, #tpu.memory_space<vmem>>, %arg9: memref<32x32xf32, #tpu.memory_space<vmem>>, %arg10: memref<32x512xf32, #tpu.memory_space<vmem>>, %arg11: memref<512x256xf32, #tpu.memory_space<vmem>>, %arg12: memref<256x128xf32, #tpu.memory_space<vmem>>, %arg13: memref<128x32xf32, #tpu.memory_space<vmem>>, %arg14: memref<32x1xf32, #tpu.memory_space<vmem>>, %arg15: memref<1x929xf32, #tpu.memory_space<vmem>>, %arg16: memref<2x1xf32, #tpu.memory_space<vmem>>) attributes {dimension_semantics = [], scalar_prefetch = 0 : i64, scratch_operands = 0 : i64, tpu.core_type = #tpu.core_type<tc>} {
    %c0 = arith.constant 0 : index
    %c0_0 = arith.constant 0 : index
    %0 = vector.load %arg0[%c0, %c0_0] : memref<16x32xf32, #tpu.memory_space<vmem>>, vector<16x32xf32>
    %c0_1 = arith.constant 0 : index
    %c0_2 = arith.constant 0 : index
    %1 = vector.load %arg8[%c0_1, %c0_2] : memref<15x32xf32, #tpu.memory_space<vmem>>, vector<1x32xf32>
    %c1 = arith.constant 1 : index
    %c0_3 = arith.constant 0 : index
    %2 = vector.load %arg8[%c1, %c0_3] : memref<15x32xf32, #tpu.memory_space<vmem>>, vector<1x32xf32>
    %cst = arith.constant dense<0.000000e+00> : vector<16xf32>
    %3 = vector.multi_reduction <add>, %0, %cst [1] : vector<16x32xf32> to vector<16xf32>
    %4 = vector.shape_cast %3 : vector<16xf32> to vector<16x1xf32>
    %cst_4 = arith.constant 3.200000e+01 : f32
    %5 = vector.broadcast %cst_4 : f32 to vector<16x1xf32>
    %6 = arith.divf %4, %5 : vector<16x1xf32>
    %7 = vector.broadcast %6 : vector<16x1xf32> to vector<16x32xf32>
    %8 = arith.subf %0, %7 : vector<16x32xf32>
    %9 = arith.mulf %8, %8 : vector<16x32xf32>
    %cst_5 = arith.constant dense<0.000000e+00> : vector<16xf32>
    %10 = vector.multi_reduction <add>, %9, %cst_5 [1] : vector<16x32xf32> to vector<16xf32>
    %11 = vector.shape_cast %10 : vector<16xf32> to vector<16x1xf32>
    %cst_6 = arith.constant 3.200000e+01 : f32
    %12 = vector.broadcast %cst_6 : f32 to vector<16x1xf32>
    %13 = arith.divf %11, %12 : vector<16x1xf32>
    %14 = vector.broadcast %6 : vector<16x1xf32> to vector<16x32xf32>
    %15 = arith.subf %0, %14 : vector<16x32xf32>
    %cst_7 = arith.constant 9.99999996E-13 : f32
    %16 = vector.broadcast %cst_7 : f32 to vector<16x1xf32>
    %17 = arith.addf %13, %16 : vector<16x1xf32>
    %18 = math.rsqrt %17 : vector<16x1xf32>
    %19 = vector.broadcast %18 : vector<16x1xf32> to vector<16x32xf32>
    %20 = arith.mulf %15, %19 : vector<16x32xf32>
    %21 = vector.broadcast %1 : vector<1x32xf32> to vector<16x32xf32>
    %22 = arith.mulf %20, %21 : vector<16x32xf32>
    %23 = vector.broadcast %2 : vector<1x32xf32> to vector<16x32xf32>
    %24 = arith.addf %22, %23 : vector<16x32xf32>
    %c0_8 = arith.constant 0 : index
    %c0_9 = arith.constant 0 : index
    %c0_10 = arith.constant 0 : index
    %25 = vector.load %arg1[%c0_8, %c0_9, %c0_10] : memref<2x1x8xf32, #tpu.memory_space<vmem>>, vector<2x1x8xf32>
    %c0_11 = arith.constant 0 : index
    %c0_12 = arith.constant 0 : index
    %c0_13 = arith.constant 0 : index
    %26 = vector.load %arg2[%c0_11, %c0_12, %c0_13] : memref<12x32x16xf32, #tpu.memory_space<vmem>>, vector<1x32x16xf32>
    %27 = vector.shape_cast %26 : vector<1x32x16xf32> to vector<32x16xf32>
    %cst_14 = arith.constant dense<0.000000e+00> : vector<16x16xf32>
    %28 = tpu.matmul %24, %27, %cst_14 {dimension_numbers = #tpu.dot_dimension_numbers<[1], [0], [0], [1], [0, 0, 1, 1], [], []>} : vector<16x32xf32>, vector<32x16xf32>, vector<16x16xf32> -> vector<16x16xf32>
    %c0_15 = arith.constant 0 : index
    %c0_16 = arith.constant 0 : index
    %c0_17 = arith.constant 0 : index
    %29 = vector.load %arg3[%c0_15, %c0_16, %c0_17] : memref<12x1x16xf32, #tpu.memory_space<vmem>>, vector<1x1x16xf32>
    %30 = vector.shape_cast %29 : vector<1x1x16xf32> to vector<1x16xf32>
    %31 = vector.broadcast %30 : vector<1x16xf32> to vector<16x16xf32>
    %32 = arith.addf %28, %31 : vector<16x16xf32>
    %c4 = arith.constant 4 : index
    %c0_18 = arith.constant 0 : index
    %c0_19 = arith.constant 0 : index
    %33 = vector.load %arg2[%c4, %c0_18, %c0_19] : memref<12x32x16xf32, #tpu.memory_space<vmem>>, vector<1x32x16xf32>
    %34 = vector.shape_cast %33 : vector<1x32x16xf32> to vector<32x16xf32>
    %cst_20 = arith.constant dense<0.000000e+00> : vector<16x16xf32>
    %35 = tpu.matmul %24, %34, %cst_20 {dimension_numbers = #tpu.dot_dimension_numbers<[1], [0], [0], [1], [0, 0, 1, 1], [], []>} : vector<16x32xf32>, vector<32x16xf32>, vector<16x16xf32> -> vector<16x16xf32>
    %c4_21 = arith.constant 4 : index
    %c0_22 = arith.constant 0 : index
    %c0_23 = arith.constant 0 : index
    %36 = vector.load %arg3[%c4_21, %c0_22, %c0_23] : memref<12x1x16xf32, #tpu.memory_space<vmem>>, vector<1x1x16xf32>
    %37 = vector.shape_cast %36 : vector<1x1x16xf32> to vector<1x16xf32>
    %38 = vector.broadcast %37 : vector<1x16xf32> to vector<16x16xf32>
    %39 = arith.addf %35, %38 : vector<16x16xf32>
    %c8 = arith.constant 8 : index
    %c0_24 = arith.constant 0 : index
    %c0_25 = arith.constant 0 : index
    %40 = vector.load %arg2[%c8, %c0_24, %c0_25] : memref<12x32x16xf32, #tpu.memory_space<vmem>>, vector<1x32x16xf32>
    %41 = vector.shape_cast %40 : vector<1x32x16xf32> to vector<32x16xf32>
    %cst_26 = arith.constant dense<0.000000e+00> : vector<16x16xf32>
    %42 = tpu.matmul %24, %41, %cst_26 {dimension_numbers = #tpu.dot_dimension_numbers<[1], [0], [0], [1], [0, 0, 1, 1], [], []>} : vector<16x32xf32>, vector<32x16xf32>, vector<16x16xf32> -> vector<16x16xf32>
    %c8_27 = arith.constant 8 : index
    %c0_28 = arith.constant 0 : index
    %c0_29 = arith.constant 0 : index
    %43 = vector.load %arg3[%c8_27, %c0_28, %c0_29] : memref<12x1x16xf32, #tpu.memory_space<vmem>>, vector<1x1x16xf32>
    %44 = vector.shape_cast %43 : vector<1x1x16xf32> to vector<1x16xf32>
    %45 = vector.broadcast %44 : vector<1x16xf32> to vector<16x16xf32>
    %46 = arith.addf %42, %45 : vector<16x16xf32>
    %47 = vector.shape_cast %32 : vector<16x16xf32> to vector<2x8x16xf32>
    %48 = vector.shape_cast %39 : vector<16x16xf32> to vector<2x8x16xf32>
    %49 = vector.shape_cast %46 : vector<16x16xf32> to vector<2x8x16xf32>
    "tpu.trace_start"() <{level = 10 : i32, message = "bqd,bkd->bqk"}> : () -> ()
    %cst_30 = arith.constant dense<0.000000e+00> : vector<2x8x8xf32>
    %50 = tpu.matmul %47, %48, %cst_30 {dimension_numbers = #tpu.dot_dimension_numbers<[2], [2], [1], [1], [0, 0, 0, 1, 1, 1], [0], [0]>} : vector<2x8x16xf32>, vector<2x8x16xf32>, vector<2x8x8xf32> -> vector<2x8x8xf32>
    "tpu.trace_stop"() : () -> ()
    %51 = vector.broadcast %25 : vector<2x1x8xf32> to vector<2x8x8xf32>
    %52 = arith.addf %50, %51 : vector<2x8x8xf32>
    %cst_31 = arith.constant dense<0xFF800000> : vector<2x8xf32>
    %53 = vector.multi_reduction <maximumf>, %52, %cst_31 [2] : vector<2x8x8xf32> to vector<2x8xf32>
    %54 = vector.shape_cast %53 : vector<2x8xf32> to vector<2x8x1xf32>
    %55 = vector.broadcast %54 : vector<2x8x1xf32> to vector<2x8x8xf32>
    %56 = arith.subf %52, %55 : vector<2x8x8xf32>
    %57 = math.exp %56 : vector<2x8x8xf32>
    %cst_32 = arith.constant dense<0.000000e+00> : vector<2x8xf32>
    %58 = vector.multi_reduction <add>, %57, %cst_32 [2] : vector<2x8x8xf32> to vector<2x8xf32>
    %59 = vector.shape_cast %58 : vector<2x8xf32> to vector<2x8x1xf32>
    %60 = tpu.reciprocal %59 {approx = true} : vector<2x8x1xf32> -> vector<2x8x1xf32>
    %61 = vector.broadcast %60 : vector<2x8x1xf32> to vector<2x8x8xf32>
    %62 = arith.mulf %57, %61 : vector<2x8x8xf32>
    "tpu.trace_start"() <{level = 10 : i32, message = "bqk,bkd->bqd"}> : () -> ()
    %cst_33 = arith.constant dense<0.000000e+00> : vector<2x8x16xf32>
    %63 = tpu.matmul %62, %49, %cst_33 {dimension_numbers = #tpu.dot_dimension_numbers<[2], [1], [1], [2], [0, 0, 0, 1, 1, 2], [0], [0]>} : vector<2x8x8xf32>, vector<2x8x16xf32>, vector<2x8x16xf32> -> vector<2x8x16xf32>
    "tpu.trace_stop"() : () -> ()
    %64 = vector.shape_cast %63 : vector<2x8x16xf32> to vector<16x16xf32>
    %c0_34 = arith.constant 0 : index
    %c0_35 = arith.constant 0 : index
    %c0_36 = arith.constant 0 : index
    %65 = vector.load %arg4[%c0_34, %c0_35, %c0_36] : memref<4x16x32xf32, #tpu.memory_space<vmem>>, vector<1x16x32xf32>
    %66 = vector.shape_cast %65 : vector<1x16x32xf32> to vector<16x32xf32>
    %cst_37 = arith.constant dense<0.000000e+00> : vector<16x32xf32>
    %67 = tpu.matmul %64, %66, %cst_37 {dimension_numbers = #tpu.dot_dimension_numbers<[1], [0], [0], [1], [0, 0, 1, 1], [], []>} : vector<16x16xf32>, vector<16x32xf32>, vector<16x32xf32> -> vector<16x32xf32>
    %c1_38 = arith.constant 1 : index
    %c0_39 = arith.constant 0 : index
    %c0_40 = arith.constant 0 : index
    %68 = vector.load %arg2[%c1_38, %c0_39, %c0_40] : memref<12x32x16xf32, #tpu.memory_space<vmem>>, vector<1x32x16xf32>
    %69 = vector.shape_cast %68 : vector<1x32x16xf32> to vector<32x16xf32>
    %cst_41 = arith.constant dense<0.000000e+00> : vector<16x16xf32>
    %70 = tpu.matmul %24, %69, %cst_41 {dimension_numbers = #tpu.dot_dimension_numbers<[1], [0], [0], [1], [0, 0, 1, 1], [], []>} : vector<16x32xf32>, vector<32x16xf32>, vector<16x16xf32> -> vector<16x16xf32>
    %c1_42 = arith.constant 1 : index
    %c0_43 = arith.constant 0 : index
    %c0_44 = arith.constant 0 : index
    %71 = vector.load %arg3[%c1_42, %c0_43, %c0_44] : memref<12x1x16xf32, #tpu.memory_space<vmem>>, vector<1x1x16xf32>
    %72 = vector.shape_cast %71 : vector<1x1x16xf32> to vector<1x16xf32>
    %73 = vector.broadcast %72 : vector<1x16xf32> to vector<16x16xf32>
    %74 = arith.addf %70, %73 : vector<16x16xf32>
    %c5 = arith.constant 5 : index
    %c0_45 = arith.constant 0 : index
    %c0_46 = arith.constant 0 : index
    %75 = vector.load %arg2[%c5, %c0_45, %c0_46] : memref<12x32x16xf32, #tpu.memory_space<vmem>>, vector<1x32x16xf32>
    %76 = vector.shape_cast %75 : vector<1x32x16xf32> to vector<32x16xf32>
    %cst_47 = arith.constant dense<0.000000e+00> : vector<16x16xf32>
    %77 = tpu.matmul %24, %76, %cst_47 {dimension_numbers = #tpu.dot_dimension_numbers<[1], [0], [0], [1], [0, 0, 1, 1], [], []>} : vector<16x32xf32>, vector<32x16xf32>, vector<16x16xf32> -> vector<16x16xf32>
    %c5_48 = arith.constant 5 : index
    %c0_49 = arith.constant 0 : index
    %c0_50 = arith.constant 0 : index
    %78 = vector.load %arg3[%c5_48, %c0_49, %c0_50] : memref<12x1x16xf32, #tpu.memory_space<vmem>>, vector<1x1x16xf32>
    %79 = vector.shape_cast %78 : vector<1x1x16xf32> to vector<1x16xf32>
    %80 = vector.broadcast %79 : vector<1x16xf32> to vector<16x16xf32>
    %81 = arith.addf %77, %80 : vector<16x16xf32>
    %c9 = arith.constant 9 : index
    %c0_51 = arith.constant 0 : index
    %c0_52 = arith.constant 0 : index
    %82 = vector.load %arg2[%c9, %c0_51, %c0_52] : memref<12x32x16xf32, #tpu.memory_space<vmem>>, vector<1x32x16xf32>
    %83 = vector.shape_cast %82 : vector<1x32x16xf32> to vector<32x16xf32>
    %cst_53 = arith.constant dense<0.000000e+00> : vector<16x16xf32>
    %84 = tpu.matmul %24, %83, %cst_53 {dimension_numbers = #tpu.dot_dimension_numbers<[1], [0], [0], [1], [0, 0, 1, 1], [], []>} : vector<16x32xf32>, vector<32x16xf32>, vector<16x16xf32> -> vector<16x16xf32>
    %c9_54 = arith.constant 9 : index
    %c0_55 = arith.constant 0 : index
    %c0_56 = arith.constant 0 : index
    %85 = vector.load %arg3[%c9_54, %c0_55, %c0_56] : memref<12x1x16xf32, #tpu.memory_space<vmem>>, vector<1x1x16xf32>
    %86 = vector.shape_cast %85 : vector<1x1x16xf32> to vector<1x16xf32>
    %87 = vector.broadcast %86 : vector<1x16xf32> to vector<16x16xf32>
    %88 = arith.addf %84, %87 : vector<16x16xf32>
    %89 = vector.shape_cast %74 : vector<16x16xf32> to vector<2x8x16xf32>
    %90 = vector.shape_cast %81 : vector<16x16xf32> to vector<2x8x16xf32>
    %91 = vector.shape_cast %88 : vector<16x16xf32> to vector<2x8x16xf32>
    "tpu.trace_start"() <{level = 10 : i32, message = "bqd,bkd->bqk"}> : () -> ()
    %cst_57 = arith.constant dense<0.000000e+00> : vector<2x8x8xf32>
    %92 = tpu.matmul %89, %90, %cst_57 {dimension_numbers = #tpu.dot_dimension_numbers<[2], [2], [1], [1], [0, 0, 0, 1, 1, 1], [0], [0]>} : vector<2x8x16xf32>, vector<2x8x16xf32>, vector<2x8x8xf32> -> vector<2x8x8xf32>
    "tpu.trace_stop"() : () -> ()
    %93 = vector.broadcast %25 : vector<2x1x8xf32> to vector<2x8x8xf32>
    %94 = arith.addf %92, %93 : vector<2x8x8xf32>
    %cst_58 = arith.constant dense<0xFF800000> : vector<2x8xf32>
    %95 = vector.multi_reduction <maximumf>, %94, %cst_58 [2] : vector<2x8x8xf32> to vector<2x8xf32>
    %96 = vector.shape_cast %95 : vector<2x8xf32> to vector<2x8x1xf32>
    %97 = vector.broadcast %96 : vector<2x8x1xf32> to vector<2x8x8xf32>
    %98 = arith.subf %94, %97 : vector<2x8x8xf32>
    %99 = math.exp %98 : vector<2x8x8xf32>
    %cst_59 = arith.constant dense<0.000000e+00> : vector<2x8xf32>
    %100 = vector.multi_reduction <add>, %99, %cst_59 [2] : vector<2x8x8xf32> to vector<2x8xf32>
    %101 = vector.shape_cast %100 : vector<2x8xf32> to vector<2x8x1xf32>
    %102 = tpu.reciprocal %101 {approx = true} : vector<2x8x1xf32> -> vector<2x8x1xf32>
    %103 = vector.broadcast %102 : vector<2x8x1xf32> to vector<2x8x8xf32>
    %104 = arith.mulf %99, %103 : vector<2x8x8xf32>
    "tpu.trace_start"() <{level = 10 : i32, message = "bqk,bkd->bqd"}> : () -> ()
    %cst_60 = arith.constant dense<0.000000e+00> : vector<2x8x16xf32>
    %105 = tpu.matmul %104, %91, %cst_60 {dimension_numbers = #tpu.dot_dimension_numbers<[2], [1], [1], [2], [0, 0, 0, 1, 1, 2], [0], [0]>} : vector<2x8x8xf32>, vector<2x8x16xf32>, vector<2x8x16xf32> -> vector<2x8x16xf32>
    "tpu.trace_stop"() : () -> ()
    %106 = vector.shape_cast %105 : vector<2x8x16xf32> to vector<16x16xf32>
    %c1_61 = arith.constant 1 : index
    %c0_62 = arith.constant 0 : index
    %c0_63 = arith.constant 0 : index
    %107 = vector.load %arg4[%c1_61, %c0_62, %c0_63] : memref<4x16x32xf32, #tpu.memory_space<vmem>>, vector<1x16x32xf32>
    %108 = vector.shape_cast %107 : vector<1x16x32xf32> to vector<16x32xf32>
    %cst_64 = arith.constant dense<0.000000e+00> : vector<16x32xf32>
    %109 = tpu.matmul %106, %108, %cst_64 {dimension_numbers = #tpu.dot_dimension_numbers<[1], [0], [0], [1], [0, 0, 1, 1], [], []>} : vector<16x16xf32>, vector<16x32xf32>, vector<16x32xf32> -> vector<16x32xf32>
    %110 = arith.addf %67, %109 : vector<16x32xf32>
    %c2 = arith.constant 2 : index
    %c0_65 = arith.constant 0 : index
    %111 = vector.load %arg8[%c2, %c0_65] : memref<15x32xf32, #tpu.memory_space<vmem>>, vector<1x32xf32>
    %112 = vector.broadcast %111 : vector<1x32xf32> to vector<16x32xf32>
    %113 = arith.addf %110, %112 : vector<16x32xf32>
    %114 = arith.addf %113, %24 : vector<16x32xf32>
    %c3 = arith.constant 3 : index
    %c0_66 = arith.constant 0 : index
    %115 = vector.load %arg8[%c3, %c0_66] : memref<15x32xf32, #tpu.memory_space<vmem>>, vector<1x32xf32>
    %c4_67 = arith.constant 4 : index
    %c0_68 = arith.constant 0 : index
    %116 = vector.load %arg8[%c4_67, %c0_68] : memref<15x32xf32, #tpu.memory_space<vmem>>, vector<1x32xf32>
    %cst_69 = arith.constant dense<0.000000e+00> : vector<16xf32>
    %117 = vector.multi_reduction <add>, %114, %cst_69 [1] : vector<16x32xf32> to vector<16xf32>
    %118 = vector.shape_cast %117 : vector<16xf32> to vector<16x1xf32>
    %cst_70 = arith.constant 3.200000e+01 : f32
    %119 = vector.broadcast %cst_70 : f32 to vector<16x1xf32>
    %120 = arith.divf %118, %119 : vector<16x1xf32>
    %121 = vector.broadcast %120 : vector<16x1xf32> to vector<16x32xf32>
    %122 = arith.subf %114, %121 : vector<16x32xf32>
    %123 = arith.mulf %122, %122 : vector<16x32xf32>
    %cst_71 = arith.constant dense<0.000000e+00> : vector<16xf32>
    %124 = vector.multi_reduction <add>, %123, %cst_71 [1] : vector<16x32xf32> to vector<16xf32>
    %125 = vector.shape_cast %124 : vector<16xf32> to vector<16x1xf32>
    %cst_72 = arith.constant 3.200000e+01 : f32
    %126 = vector.broadcast %cst_72 : f32 to vector<16x1xf32>
    %127 = arith.divf %125, %126 : vector<16x1xf32>
    %128 = vector.broadcast %120 : vector<16x1xf32> to vector<16x32xf32>
    %129 = arith.subf %114, %128 : vector<16x32xf32>
    %cst_73 = arith.constant 9.99999996E-13 : f32
    %130 = vector.broadcast %cst_73 : f32 to vector<16x1xf32>
    %131 = arith.addf %127, %130 : vector<16x1xf32>
    %132 = math.rsqrt %131 : vector<16x1xf32>
    %133 = vector.broadcast %132 : vector<16x1xf32> to vector<16x32xf32>
    %134 = arith.mulf %129, %133 : vector<16x32xf32>
    %135 = vector.broadcast %115 : vector<1x32xf32> to vector<16x32xf32>
    %136 = arith.mulf %134, %135 : vector<16x32xf32>
    %137 = vector.broadcast %116 : vector<1x32xf32> to vector<16x32xf32>
    %138 = arith.addf %136, %137 : vector<16x32xf32>
    %c0_74 = arith.constant 0 : index
    %c0_75 = arith.constant 0 : index
    %c0_76 = arith.constant 0 : index
    %139 = vector.load %arg5[%c0_74, %c0_75, %c0_76] : memref<2x32x64xf32, #tpu.memory_space<vmem>>, vector<1x32x64xf32>
    %140 = vector.shape_cast %139 : vector<1x32x64xf32> to vector<32x64xf32>
    %cst_77 = arith.constant dense<0.000000e+00> : vector<16x64xf32>
    %141 = tpu.matmul %138, %140, %cst_77 {dimension_numbers = #tpu.dot_dimension_numbers<[1], [0], [0], [1], [0, 0, 1, 1], [], []>} : vector<16x32xf32>, vector<32x64xf32>, vector<16x64xf32> -> vector<16x64xf32>
    %c0_78 = arith.constant 0 : index
    %c0_79 = arith.constant 0 : index
    %c0_80 = arith.constant 0 : index
    %142 = vector.load %arg7[%c0_78, %c0_79, %c0_80] : memref<2x1x64xf32, #tpu.memory_space<vmem>>, vector<1x1x64xf32>
    %143 = vector.shape_cast %142 : vector<1x1x64xf32> to vector<1x64xf32>
    %144 = vector.broadcast %143 : vector<1x64xf32> to vector<16x64xf32>
    %145 = arith.addf %141, %144 : vector<16x64xf32>
    %cst_81 = arith.constant 5.000000e-01 : f32
    %146 = vector.broadcast %cst_81 : f32 to vector<16x64xf32>
    %147 = arith.mulf %146, %145 : vector<16x64xf32>
    %cst_82 = arith.constant 4.471500e-02 : f32
    %148 = vector.broadcast %cst_82 : f32 to vector<16x64xf32>
    %149 = arith.mulf %148, %145 : vector<16x64xf32>
    %150 = arith.mulf %149, %145 : vector<16x64xf32>
    %151 = arith.mulf %150, %145 : vector<16x64xf32>
    %152 = arith.addf %145, %151 : vector<16x64xf32>
    %cst_83 = arith.constant 0.797884583 : f32
    %153 = vector.broadcast %cst_83 : f32 to vector<16x64xf32>
    %154 = arith.mulf %153, %152 : vector<16x64xf32>
    %155 = math.tanh %154 : vector<16x64xf32>
    %cst_84 = arith.constant 1.000000e+00 : f32
    %156 = vector.broadcast %cst_84 : f32 to vector<16x64xf32>
    %157 = arith.addf %156, %155 : vector<16x64xf32>
    %158 = arith.mulf %147, %157 : vector<16x64xf32>
    %c0_85 = arith.constant 0 : index
    %c0_86 = arith.constant 0 : index
    %c0_87 = arith.constant 0 : index
    %159 = vector.load %arg6[%c0_85, %c0_86, %c0_87] : memref<2x64x32xf32, #tpu.memory_space<vmem>>, vector<1x64x32xf32>
    %160 = vector.shape_cast %159 : vector<1x64x32xf32> to vector<64x32xf32>
    %cst_88 = arith.constant dense<0.000000e+00> : vector<16x32xf32>
    %161 = tpu.matmul %158, %160, %cst_88 {dimension_numbers = #tpu.dot_dimension_numbers<[1], [0], [0], [1], [0, 0, 1, 1], [], []>} : vector<16x64xf32>, vector<64x32xf32>, vector<16x32xf32> -> vector<16x32xf32>
    %c5_89 = arith.constant 5 : index
    %c0_90 = arith.constant 0 : index
    %162 = vector.load %arg8[%c5_89, %c0_90] : memref<15x32xf32, #tpu.memory_space<vmem>>, vector<1x32xf32>
    %163 = vector.broadcast %162 : vector<1x32xf32> to vector<16x32xf32>
    %164 = arith.addf %161, %163 : vector<16x32xf32>
    %165 = arith.addf %164, %138 : vector<16x32xf32>
    %c6 = arith.constant 6 : index
    %c0_91 = arith.constant 0 : index
    %166 = vector.load %arg8[%c6, %c0_91] : memref<15x32xf32, #tpu.memory_space<vmem>>, vector<1x32xf32>
    %c7 = arith.constant 7 : index
    %c0_92 = arith.constant 0 : index
    %167 = vector.load %arg8[%c7, %c0_92] : memref<15x32xf32, #tpu.memory_space<vmem>>, vector<1x32xf32>
    %cst_93 = arith.constant dense<0.000000e+00> : vector<16xf32>
    %168 = vector.multi_reduction <add>, %165, %cst_93 [1] : vector<16x32xf32> to vector<16xf32>
    %169 = vector.shape_cast %168 : vector<16xf32> to vector<16x1xf32>
    %cst_94 = arith.constant 3.200000e+01 : f32
    %170 = vector.broadcast %cst_94 : f32 to vector<16x1xf32>
    %171 = arith.divf %169, %170 : vector<16x1xf32>
    %172 = vector.broadcast %171 : vector<16x1xf32> to vector<16x32xf32>
    %173 = arith.subf %165, %172 : vector<16x32xf32>
    %174 = arith.mulf %173, %173 : vector<16x32xf32>
    %cst_95 = arith.constant dense<0.000000e+00> : vector<16xf32>
    %175 = vector.multi_reduction <add>, %174, %cst_95 [1] : vector<16x32xf32> to vector<16xf32>
    %176 = vector.shape_cast %175 : vector<16xf32> to vector<16x1xf32>
    %cst_96 = arith.constant 3.200000e+01 : f32
    %177 = vector.broadcast %cst_96 : f32 to vector<16x1xf32>
    %178 = arith.divf %176, %177 : vector<16x1xf32>
    %179 = vector.broadcast %171 : vector<16x1xf32> to vector<16x32xf32>
    %180 = arith.subf %165, %179 : vector<16x32xf32>
    %cst_97 = arith.constant 9.99999996E-13 : f32
    %181 = vector.broadcast %cst_97 : f32 to vector<16x1xf32>
    %182 = arith.addf %178, %181 : vector<16x1xf32>
    %183 = math.rsqrt %182 : vector<16x1xf32>
    %184 = vector.broadcast %183 : vector<16x1xf32> to vector<16x32xf32>
    %185 = arith.mulf %180, %184 : vector<16x32xf32>
    %186 = vector.broadcast %166 : vector<1x32xf32> to vector<16x32xf32>
    %187 = arith.mulf %185, %186 : vector<16x32xf32>
    %188 = vector.broadcast %167 : vector<1x32xf32> to vector<16x32xf32>
    %189 = arith.addf %187, %188 : vector<16x32xf32>
    %c2_98 = arith.constant 2 : index
    %c0_99 = arith.constant 0 : index
    %c0_100 = arith.constant 0 : index
    %190 = vector.load %arg2[%c2_98, %c0_99, %c0_100] : memref<12x32x16xf32, #tpu.memory_space<vmem>>, vector<1x32x16xf32>
    %191 = vector.shape_cast %190 : vector<1x32x16xf32> to vector<32x16xf32>
    %cst_101 = arith.constant dense<0.000000e+00> : vector<16x16xf32>
    %192 = tpu.matmul %189, %191, %cst_101 {dimension_numbers = #tpu.dot_dimension_numbers<[1], [0], [0], [1], [0, 0, 1, 1], [], []>} : vector<16x32xf32>, vector<32x16xf32>, vector<16x16xf32> -> vector<16x16xf32>
    %c2_102 = arith.constant 2 : index
    %c0_103 = arith.constant 0 : index
    %c0_104 = arith.constant 0 : index
    %193 = vector.load %arg3[%c2_102, %c0_103, %c0_104] : memref<12x1x16xf32, #tpu.memory_space<vmem>>, vector<1x1x16xf32>
    %194 = vector.shape_cast %193 : vector<1x1x16xf32> to vector<1x16xf32>
    %195 = vector.broadcast %194 : vector<1x16xf32> to vector<16x16xf32>
    %196 = arith.addf %192, %195 : vector<16x16xf32>
    %c6_105 = arith.constant 6 : index
    %c0_106 = arith.constant 0 : index
    %c0_107 = arith.constant 0 : index
    %197 = vector.load %arg2[%c6_105, %c0_106, %c0_107] : memref<12x32x16xf32, #tpu.memory_space<vmem>>, vector<1x32x16xf32>
    %198 = vector.shape_cast %197 : vector<1x32x16xf32> to vector<32x16xf32>
    %cst_108 = arith.constant dense<0.000000e+00> : vector<16x16xf32>
    %199 = tpu.matmul %189, %198, %cst_108 {dimension_numbers = #tpu.dot_dimension_numbers<[1], [0], [0], [1], [0, 0, 1, 1], [], []>} : vector<16x32xf32>, vector<32x16xf32>, vector<16x16xf32> -> vector<16x16xf32>
    %c6_109 = arith.constant 6 : index
    %c0_110 = arith.constant 0 : index
    %c0_111 = arith.constant 0 : index
    %200 = vector.load %arg3[%c6_109, %c0_110, %c0_111] : memref<12x1x16xf32, #tpu.memory_space<vmem>>, vector<1x1x16xf32>
    %201 = vector.shape_cast %200 : vector<1x1x16xf32> to vector<1x16xf32>
    %202 = vector.broadcast %201 : vector<1x16xf32> to vector<16x16xf32>
    %203 = arith.addf %199, %202 : vector<16x16xf32>
    %c10 = arith.constant 10 : index
    %c0_112 = arith.constant 0 : index
    %c0_113 = arith.constant 0 : index
    %204 = vector.load %arg2[%c10, %c0_112, %c0_113] : memref<12x32x16xf32, #tpu.memory_space<vmem>>, vector<1x32x16xf32>
    %205 = vector.shape_cast %204 : vector<1x32x16xf32> to vector<32x16xf32>
    %cst_114 = arith.constant dense<0.000000e+00> : vector<16x16xf32>
    %206 = tpu.matmul %189, %205, %cst_114 {dimension_numbers = #tpu.dot_dimension_numbers<[1], [0], [0], [1], [0, 0, 1, 1], [], []>} : vector<16x32xf32>, vector<32x16xf32>, vector<16x16xf32> -> vector<16x16xf32>
    %c10_115 = arith.constant 10 : index
    %c0_116 = arith.constant 0 : index
    %c0_117 = arith.constant 0 : index
    %207 = vector.load %arg3[%c10_115, %c0_116, %c0_117] : memref<12x1x16xf32, #tpu.memory_space<vmem>>, vector<1x1x16xf32>
    %208 = vector.shape_cast %207 : vector<1x1x16xf32> to vector<1x16xf32>
    %209 = vector.broadcast %208 : vector<1x16xf32> to vector<16x16xf32>
    %210 = arith.addf %206, %209 : vector<16x16xf32>
    %211 = vector.shape_cast %196 : vector<16x16xf32> to vector<2x8x16xf32>
    %212 = vector.shape_cast %203 : vector<16x16xf32> to vector<2x8x16xf32>
    %213 = vector.shape_cast %210 : vector<16x16xf32> to vector<2x8x16xf32>
    "tpu.trace_start"() <{level = 10 : i32, message = "bqd,bkd->bqk"}> : () -> ()
    %cst_118 = arith.constant dense<0.000000e+00> : vector<2x8x8xf32>
    %214 = tpu.matmul %211, %212, %cst_118 {dimension_numbers = #tpu.dot_dimension_numbers<[2], [2], [1], [1], [0, 0, 0, 1, 1, 1], [0], [0]>} : vector<2x8x16xf32>, vector<2x8x16xf32>, vector<2x8x8xf32> -> vector<2x8x8xf32>
    "tpu.trace_stop"() : () -> ()
    %215 = vector.broadcast %25 : vector<2x1x8xf32> to vector<2x8x8xf32>
    %216 = arith.addf %214, %215 : vector<2x8x8xf32>
    %cst_119 = arith.constant dense<0xFF800000> : vector<2x8xf32>
    %217 = vector.multi_reduction <maximumf>, %216, %cst_119 [2] : vector<2x8x8xf32> to vector<2x8xf32>
    %218 = vector.shape_cast %217 : vector<2x8xf32> to vector<2x8x1xf32>
    %219 = vector.broadcast %218 : vector<2x8x1xf32> to vector<2x8x8xf32>
    %220 = arith.subf %216, %219 : vector<2x8x8xf32>
    %221 = math.exp %220 : vector<2x8x8xf32>
    %cst_120 = arith.constant dense<0.000000e+00> : vector<2x8xf32>
    %222 = vector.multi_reduction <add>, %221, %cst_120 [2] : vector<2x8x8xf32> to vector<2x8xf32>
    %223 = vector.shape_cast %222 : vector<2x8xf32> to vector<2x8x1xf32>
    %224 = tpu.reciprocal %223 {approx = true} : vector<2x8x1xf32> -> vector<2x8x1xf32>
    %225 = vector.broadcast %224 : vector<2x8x1xf32> to vector<2x8x8xf32>
    %226 = arith.mulf %221, %225 : vector<2x8x8xf32>
    "tpu.trace_start"() <{level = 10 : i32, message = "bqk,bkd->bqd"}> : () -> ()
    %cst_121 = arith.constant dense<0.000000e+00> : vector<2x8x16xf32>
    %227 = tpu.matmul %226, %213, %cst_121 {dimension_numbers = #tpu.dot_dimension_numbers<[2], [1], [1], [2], [0, 0, 0, 1, 1, 2], [0], [0]>} : vector<2x8x8xf32>, vector<2x8x16xf32>, vector<2x8x16xf32> -> vector<2x8x16xf32>
    "tpu.trace_stop"() : () -> ()
    %228 = vector.shape_cast %227 : vector<2x8x16xf32> to vector<16x16xf32>
    %c2_122 = arith.constant 2 : index
    %c0_123 = arith.constant 0 : index
    %c0_124 = arith.constant 0 : index
    %229 = vector.load %arg4[%c2_122, %c0_123, %c0_124] : memref<4x16x32xf32, #tpu.memory_space<vmem>>, vector<1x16x32xf32>
    %230 = vector.shape_cast %229 : vector<1x16x32xf32> to vector<16x32xf32>
    %cst_125 = arith.constant dense<0.000000e+00> : vector<16x32xf32>
    %231 = tpu.matmul %228, %230, %cst_125 {dimension_numbers = #tpu.dot_dimension_numbers<[1], [0], [0], [1], [0, 0, 1, 1], [], []>} : vector<16x16xf32>, vector<16x32xf32>, vector<16x32xf32> -> vector<16x32xf32>
    %c3_126 = arith.constant 3 : index
    %c0_127 = arith.constant 0 : index
    %c0_128 = arith.constant 0 : index
    %232 = vector.load %arg2[%c3_126, %c0_127, %c0_128] : memref<12x32x16xf32, #tpu.memory_space<vmem>>, vector<1x32x16xf32>
    %233 = vector.shape_cast %232 : vector<1x32x16xf32> to vector<32x16xf32>
    %cst_129 = arith.constant dense<0.000000e+00> : vector<16x16xf32>
    %234 = tpu.matmul %189, %233, %cst_129 {dimension_numbers = #tpu.dot_dimension_numbers<[1], [0], [0], [1], [0, 0, 1, 1], [], []>} : vector<16x32xf32>, vector<32x16xf32>, vector<16x16xf32> -> vector<16x16xf32>
    %c3_130 = arith.constant 3 : index
    %c0_131 = arith.constant 0 : index
    %c0_132 = arith.constant 0 : index
    %235 = vector.load %arg3[%c3_130, %c0_131, %c0_132] : memref<12x1x16xf32, #tpu.memory_space<vmem>>, vector<1x1x16xf32>
    %236 = vector.shape_cast %235 : vector<1x1x16xf32> to vector<1x16xf32>
    %237 = vector.broadcast %236 : vector<1x16xf32> to vector<16x16xf32>
    %238 = arith.addf %234, %237 : vector<16x16xf32>
    %c7_133 = arith.constant 7 : index
    %c0_134 = arith.constant 0 : index
    %c0_135 = arith.constant 0 : index
    %239 = vector.load %arg2[%c7_133, %c0_134, %c0_135] : memref<12x32x16xf32, #tpu.memory_space<vmem>>, vector<1x32x16xf32>
    %240 = vector.shape_cast %239 : vector<1x32x16xf32> to vector<32x16xf32>
    %cst_136 = arith.constant dense<0.000000e+00> : vector<16x16xf32>
    %241 = tpu.matmul %189, %240, %cst_136 {dimension_numbers = #tpu.dot_dimension_numbers<[1], [0], [0], [1], [0, 0, 1, 1], [], []>} : vector<16x32xf32>, vector<32x16xf32>, vector<16x16xf32> -> vector<16x16xf32>
    %c7_137 = arith.constant 7 : index
    %c0_138 = arith.constant 0 : index
    %c0_139 = arith.constant 0 : index
    %242 = vector.load %arg3[%c7_137, %c0_138, %c0_139] : memref<12x1x16xf32, #tpu.memory_space<vmem>>, vector<1x1x16xf32>
    %243 = vector.shape_cast %242 : vector<1x1x16xf32> to vector<1x16xf32>
    %244 = vector.broadcast %243 : vector<1x16xf32> to vector<16x16xf32>
    %245 = arith.addf %241, %244 : vector<16x16xf32>
    %c11 = arith.constant 11 : index
    %c0_140 = arith.constant 0 : index
    %c0_141 = arith.constant 0 : index
    %246 = vector.load %arg2[%c11, %c0_140, %c0_141] : memref<12x32x16xf32, #tpu.memory_space<vmem>>, vector<1x32x16xf32>
    %247 = vector.shape_cast %246 : vector<1x32x16xf32> to vector<32x16xf32>
    %cst_142 = arith.constant dense<0.000000e+00> : vector<16x16xf32>
    %248 = tpu.matmul %189, %247, %cst_142 {dimension_numbers = #tpu.dot_dimension_numbers<[1], [0], [0], [1], [0, 0, 1, 1], [], []>} : vector<16x32xf32>, vector<32x16xf32>, vector<16x16xf32> -> vector<16x16xf32>
    %c11_143 = arith.constant 11 : index
    %c0_144 = arith.constant 0 : index
    %c0_145 = arith.constant 0 : index
    %249 = vector.load %arg3[%c11_143, %c0_144, %c0_145] : memref<12x1x16xf32, #tpu.memory_space<vmem>>, vector<1x1x16xf32>
    %250 = vector.shape_cast %249 : vector<1x1x16xf32> to vector<1x16xf32>
    %251 = vector.broadcast %250 : vector<1x16xf32> to vector<16x16xf32>
    %252 = arith.addf %248, %251 : vector<16x16xf32>
    %253 = vector.shape_cast %238 : vector<16x16xf32> to vector<2x8x16xf32>
    %254 = vector.shape_cast %245 : vector<16x16xf32> to vector<2x8x16xf32>
    %255 = vector.shape_cast %252 : vector<16x16xf32> to vector<2x8x16xf32>
    "tpu.trace_start"() <{level = 10 : i32, message = "bqd,bkd->bqk"}> : () -> ()
    %cst_146 = arith.constant dense<0.000000e+00> : vector<2x8x8xf32>
    %256 = tpu.matmul %253, %254, %cst_146 {dimension_numbers = #tpu.dot_dimension_numbers<[2], [2], [1], [1], [0, 0, 0, 1, 1, 1], [0], [0]>} : vector<2x8x16xf32>, vector<2x8x16xf32>, vector<2x8x8xf32> -> vector<2x8x8xf32>
    "tpu.trace_stop"() : () -> ()
    %257 = vector.broadcast %25 : vector<2x1x8xf32> to vector<2x8x8xf32>
    %258 = arith.addf %256, %257 : vector<2x8x8xf32>
    %cst_147 = arith.constant dense<0xFF800000> : vector<2x8xf32>
    %259 = vector.multi_reduction <maximumf>, %258, %cst_147 [2] : vector<2x8x8xf32> to vector<2x8xf32>
    %260 = vector.shape_cast %259 : vector<2x8xf32> to vector<2x8x1xf32>
    %261 = vector.broadcast %260 : vector<2x8x1xf32> to vector<2x8x8xf32>
    %262 = arith.subf %258, %261 : vector<2x8x8xf32>
    %263 = math.exp %262 : vector<2x8x8xf32>
    %cst_148 = arith.constant dense<0.000000e+00> : vector<2x8xf32>
    %264 = vector.multi_reduction <add>, %263, %cst_148 [2] : vector<2x8x8xf32> to vector<2x8xf32>
    %265 = vector.shape_cast %264 : vector<2x8xf32> to vector<2x8x1xf32>
    %266 = tpu.reciprocal %265 {approx = true} : vector<2x8x1xf32> -> vector<2x8x1xf32>
    %267 = vector.broadcast %266 : vector<2x8x1xf32> to vector<2x8x8xf32>
    %268 = arith.mulf %263, %267 : vector<2x8x8xf32>
    "tpu.trace_start"() <{level = 10 : i32, message = "bqk,bkd->bqd"}> : () -> ()
    %cst_149 = arith.constant dense<0.000000e+00> : vector<2x8x16xf32>
    %269 = tpu.matmul %268, %255, %cst_149 {dimension_numbers = #tpu.dot_dimension_numbers<[2], [1], [1], [2], [0, 0, 0, 1, 1, 2], [0], [0]>} : vector<2x8x8xf32>, vector<2x8x16xf32>, vector<2x8x16xf32> -> vector<2x8x16xf32>
    "tpu.trace_stop"() : () -> ()
    %270 = vector.shape_cast %269 : vector<2x8x16xf32> to vector<16x16xf32>
    %c3_150 = arith.constant 3 : index
    %c0_151 = arith.constant 0 : index
    %c0_152 = arith.constant 0 : index
    %271 = vector.load %arg4[%c3_150, %c0_151, %c0_152] : memref<4x16x32xf32, #tpu.memory_space<vmem>>, vector<1x16x32xf32>
    %272 = vector.shape_cast %271 : vector<1x16x32xf32> to vector<16x32xf32>
    %cst_153 = arith.constant dense<0.000000e+00> : vector<16x32xf32>
    %273 = tpu.matmul %270, %272, %cst_153 {dimension_numbers = #tpu.dot_dimension_numbers<[1], [0], [0], [1], [0, 0, 1, 1], [], []>} : vector<16x16xf32>, vector<16x32xf32>, vector<16x32xf32> -> vector<16x32xf32>
    %274 = arith.addf %231, %273 : vector<16x32xf32>
    %c8_154 = arith.constant 8 : index
    %c0_155 = arith.constant 0 : index
    %275 = vector.load %arg8[%c8_154, %c0_155] : memref<15x32xf32, #tpu.memory_space<vmem>>, vector<1x32xf32>
    %276 = vector.broadcast %275 : vector<1x32xf32> to vector<16x32xf32>
    %277 = arith.addf %274, %276 : vector<16x32xf32>
    %278 = arith.addf %277, %189 : vector<16x32xf32>
    %c9_156 = arith.constant 9 : index
    %c0_157 = arith.constant 0 : index
    %279 = vector.load %arg8[%c9_156, %c0_157] : memref<15x32xf32, #tpu.memory_space<vmem>>, vector<1x32xf32>
    %c10_158 = arith.constant 10 : index
    %c0_159 = arith.constant 0 : index
    %280 = vector.load %arg8[%c10_158, %c0_159] : memref<15x32xf32, #tpu.memory_space<vmem>>, vector<1x32xf32>
    %cst_160 = arith.constant dense<0.000000e+00> : vector<16xf32>
    %281 = vector.multi_reduction <add>, %278, %cst_160 [1] : vector<16x32xf32> to vector<16xf32>
    %282 = vector.shape_cast %281 : vector<16xf32> to vector<16x1xf32>
    %cst_161 = arith.constant 3.200000e+01 : f32
    %283 = vector.broadcast %cst_161 : f32 to vector<16x1xf32>
    %284 = arith.divf %282, %283 : vector<16x1xf32>
    %285 = vector.broadcast %284 : vector<16x1xf32> to vector<16x32xf32>
    %286 = arith.subf %278, %285 : vector<16x32xf32>
    %287 = arith.mulf %286, %286 : vector<16x32xf32>
    %cst_162 = arith.constant dense<0.000000e+00> : vector<16xf32>
    %288 = vector.multi_reduction <add>, %287, %cst_162 [1] : vector<16x32xf32> to vector<16xf32>
    %289 = vector.shape_cast %288 : vector<16xf32> to vector<16x1xf32>
    %cst_163 = arith.constant 3.200000e+01 : f32
    %290 = vector.broadcast %cst_163 : f32 to vector<16x1xf32>
    %291 = arith.divf %289, %290 : vector<16x1xf32>
    %292 = vector.broadcast %284 : vector<16x1xf32> to vector<16x32xf32>
    %293 = arith.subf %278, %292 : vector<16x32xf32>
    %cst_164 = arith.constant 9.99999996E-13 : f32
    %294 = vector.broadcast %cst_164 : f32 to vector<16x1xf32>
    %295 = arith.addf %291, %294 : vector<16x1xf32>
    %296 = math.rsqrt %295 : vector<16x1xf32>
    %297 = vector.broadcast %296 : vector<16x1xf32> to vector<16x32xf32>
    %298 = arith.mulf %293, %297 : vector<16x32xf32>
    %299 = vector.broadcast %279 : vector<1x32xf32> to vector<16x32xf32>
    %300 = arith.mulf %298, %299 : vector<16x32xf32>
    %301 = vector.broadcast %280 : vector<1x32xf32> to vector<16x32xf32>
    %302 = arith.addf %300, %301 : vector<16x32xf32>
    %c1_165 = arith.constant 1 : index
    %c0_166 = arith.constant 0 : index
    %c0_167 = arith.constant 0 : index
    %303 = vector.load %arg5[%c1_165, %c0_166, %c0_167] : memref<2x32x64xf32, #tpu.memory_space<vmem>>, vector<1x32x64xf32>
    %304 = vector.shape_cast %303 : vector<1x32x64xf32> to vector<32x64xf32>
    %cst_168 = arith.constant dense<0.000000e+00> : vector<16x64xf32>
    %305 = tpu.matmul %302, %304, %cst_168 {dimension_numbers = #tpu.dot_dimension_numbers<[1], [0], [0], [1], [0, 0, 1, 1], [], []>} : vector<16x32xf32>, vector<32x64xf32>, vector<16x64xf32> -> vector<16x64xf32>
    %c1_169 = arith.constant 1 : index
    %c0_170 = arith.constant 0 : index
    %c0_171 = arith.constant 0 : index
    %306 = vector.load %arg7[%c1_169, %c0_170, %c0_171] : memref<2x1x64xf32, #tpu.memory_space<vmem>>, vector<1x1x64xf32>
    %307 = vector.shape_cast %306 : vector<1x1x64xf32> to vector<1x64xf32>
    %308 = vector.broadcast %307 : vector<1x64xf32> to vector<16x64xf32>
    %309 = arith.addf %305, %308 : vector<16x64xf32>
    %cst_172 = arith.constant 5.000000e-01 : f32
    %310 = vector.broadcast %cst_172 : f32 to vector<16x64xf32>
    %311 = arith.mulf %310, %309 : vector<16x64xf32>
    %cst_173 = arith.constant 4.471500e-02 : f32
    %312 = vector.broadcast %cst_173 : f32 to vector<16x64xf32>
    %313 = arith.mulf %312, %309 : vector<16x64xf32>
    %314 = arith.mulf %313, %309 : vector<16x64xf32>
    %315 = arith.mulf %314, %309 : vector<16x64xf32>
    %316 = arith.addf %309, %315 : vector<16x64xf32>
    %cst_174 = arith.constant 0.797884583 : f32
    %317 = vector.broadcast %cst_174 : f32 to vector<16x64xf32>
    %318 = arith.mulf %317, %316 : vector<16x64xf32>
    %319 = math.tanh %318 : vector<16x64xf32>
    %cst_175 = arith.constant 1.000000e+00 : f32
    %320 = vector.broadcast %cst_175 : f32 to vector<16x64xf32>
    %321 = arith.addf %320, %319 : vector<16x64xf32>
    %322 = arith.mulf %311, %321 : vector<16x64xf32>
    %c1_176 = arith.constant 1 : index
    %c0_177 = arith.constant 0 : index
    %c0_178 = arith.constant 0 : index
    %323 = vector.load %arg6[%c1_176, %c0_177, %c0_178] : memref<2x64x32xf32, #tpu.memory_space<vmem>>, vector<1x64x32xf32>
    %324 = vector.shape_cast %323 : vector<1x64x32xf32> to vector<64x32xf32>
    %cst_179 = arith.constant dense<0.000000e+00> : vector<16x32xf32>
    %325 = tpu.matmul %322, %324, %cst_179 {dimension_numbers = #tpu.dot_dimension_numbers<[1], [0], [0], [1], [0, 0, 1, 1], [], []>} : vector<16x64xf32>, vector<64x32xf32>, vector<16x32xf32> -> vector<16x32xf32>
    %c11_180 = arith.constant 11 : index
    %c0_181 = arith.constant 0 : index
    %326 = vector.load %arg8[%c11_180, %c0_181] : memref<15x32xf32, #tpu.memory_space<vmem>>, vector<1x32xf32>
    %327 = vector.broadcast %326 : vector<1x32xf32> to vector<16x32xf32>
    %328 = arith.addf %325, %327 : vector<16x32xf32>
    %329 = arith.addf %328, %302 : vector<16x32xf32>
    %c12 = arith.constant 12 : index
    %c0_182 = arith.constant 0 : index
    %330 = vector.load %arg8[%c12, %c0_182] : memref<15x32xf32, #tpu.memory_space<vmem>>, vector<1x32xf32>
    %c13 = arith.constant 13 : index
    %c0_183 = arith.constant 0 : index
    %331 = vector.load %arg8[%c13, %c0_183] : memref<15x32xf32, #tpu.memory_space<vmem>>, vector<1x32xf32>
    %cst_184 = arith.constant dense<0.000000e+00> : vector<16xf32>
    %332 = vector.multi_reduction <add>, %329, %cst_184 [1] : vector<16x32xf32> to vector<16xf32>
    %333 = vector.shape_cast %332 : vector<16xf32> to vector<16x1xf32>
    %cst_185 = arith.constant 3.200000e+01 : f32
    %334 = vector.broadcast %cst_185 : f32 to vector<16x1xf32>
    %335 = arith.divf %333, %334 : vector<16x1xf32>
    %336 = vector.broadcast %335 : vector<16x1xf32> to vector<16x32xf32>
    %337 = arith.subf %329, %336 : vector<16x32xf32>
    %338 = arith.mulf %337, %337 : vector<16x32xf32>
    %cst_186 = arith.constant dense<0.000000e+00> : vector<16xf32>
    %339 = vector.multi_reduction <add>, %338, %cst_186 [1] : vector<16x32xf32> to vector<16xf32>
    %340 = vector.shape_cast %339 : vector<16xf32> to vector<16x1xf32>
    %cst_187 = arith.constant 3.200000e+01 : f32
    %341 = vector.broadcast %cst_187 : f32 to vector<16x1xf32>
    %342 = arith.divf %340, %341 : vector<16x1xf32>
    %343 = vector.broadcast %335 : vector<16x1xf32> to vector<16x32xf32>
    %344 = arith.subf %329, %343 : vector<16x32xf32>
    %cst_188 = arith.constant 9.99999996E-13 : f32
    %345 = vector.broadcast %cst_188 : f32 to vector<16x1xf32>
    %346 = arith.addf %342, %345 : vector<16x1xf32>
    %347 = math.rsqrt %346 : vector<16x1xf32>
    %348 = vector.broadcast %347 : vector<16x1xf32> to vector<16x32xf32>
    %349 = arith.mulf %344, %348 : vector<16x32xf32>
    %350 = vector.broadcast %330 : vector<1x32xf32> to vector<16x32xf32>
    %351 = arith.mulf %349, %350 : vector<16x32xf32>
    %352 = vector.broadcast %331 : vector<1x32xf32> to vector<16x32xf32>
    %353 = arith.addf %351, %352 : vector<16x32xf32>
    %354 = vector.shape_cast %353 : vector<16x32xf32> to vector<2x8x32xf32>
    %355 = vector.extract_strided_slice %354 {offsets = [0, 0, 0], sizes = [2, 1, 32], strides = [1, 1, 1]} : vector<2x8x32xf32> to vector<2x1x32xf32>
    %356 = vector.shape_cast %355 : vector<2x1x32xf32> to vector<2x32xf32>
    %c0_189 = arith.constant 0 : index
    %c0_190 = arith.constant 0 : index
    %357 = vector.load %arg9[%c0_189, %c0_190] : memref<32x32xf32, #tpu.memory_space<vmem>>, vector<32x32xf32>
    %cst_191 = arith.constant dense<0.000000e+00> : vector<2x32xf32>
    %358 = tpu.matmul %356, %357, %cst_191 {dimension_numbers = #tpu.dot_dimension_numbers<[1], [0], [0], [1], [0, 0, 1, 1], [], []>} : vector<2x32xf32>, vector<32x32xf32>, vector<2x32xf32> -> vector<2x32xf32>
    %c14 = arith.constant 14 : index
    %c0_192 = arith.constant 0 : index
    %359 = vector.load %arg8[%c14, %c0_192] : memref<15x32xf32, #tpu.memory_space<vmem>>, vector<1x32xf32>
    %360 = vector.broadcast %359 : vector<1x32xf32> to vector<2x32xf32>
    %361 = arith.addf %358, %360 : vector<2x32xf32>
    %362 = math.tanh %361 : vector<2x32xf32>
    %c0_193 = arith.constant 0 : index
    %c0_194 = arith.constant 0 : index
    %363 = vector.load %arg10[%c0_193, %c0_194] : memref<32x512xf32, #tpu.memory_space<vmem>>, vector<32x512xf32>
    %cst_195 = arith.constant dense<0.000000e+00> : vector<2x512xf32>
    %364 = tpu.matmul %362, %363, %cst_195 {dimension_numbers = #tpu.dot_dimension_numbers<[1], [0], [0], [1], [0, 0, 1, 1], [], []>} : vector<2x32xf32>, vector<32x512xf32>, vector<2x512xf32> -> vector<2x512xf32>
    %c0_196 = arith.constant 0 : index
    %c0_197 = arith.constant 0 : index
    %365 = vector.load %arg15[%c0_196, %c0_197] : memref<1x929xf32, #tpu.memory_space<vmem>>, vector<1x512xf32>
    %366 = vector.broadcast %365 : vector<1x512xf32> to vector<2x512xf32>
    %367 = arith.addf %364, %366 : vector<2x512xf32>
    %cst_198 = arith.constant 0.000000e+00 : f32
    %368 = vector.broadcast %cst_198 : f32 to vector<2x512xf32>
    %369 = arith.maximumf %367, %368 : vector<2x512xf32>
    %c0_199 = arith.constant 0 : index
    %c0_200 = arith.constant 0 : index
    %370 = vector.load %arg11[%c0_199, %c0_200] : memref<512x256xf32, #tpu.memory_space<vmem>>, vector<512x256xf32>
    %cst_201 = arith.constant dense<0.000000e+00> : vector<2x256xf32>
    %371 = tpu.matmul %369, %370, %cst_201 {dimension_numbers = #tpu.dot_dimension_numbers<[1], [0], [0], [1], [0, 0, 1, 1], [], []>} : vector<2x512xf32>, vector<512x256xf32>, vector<2x256xf32> -> vector<2x256xf32>
    %c0_202 = arith.constant 0 : index
    %c512 = arith.constant 512 : index
    %372 = vector.load %arg15[%c0_202, %c512] : memref<1x929xf32, #tpu.memory_space<vmem>>, vector<1x256xf32>
    %373 = vector.broadcast %372 : vector<1x256xf32> to vector<2x256xf32>
    %374 = arith.addf %371, %373 : vector<2x256xf32>
    %cst_203 = arith.constant 0.000000e+00 : f32
    %375 = vector.broadcast %cst_203 : f32 to vector<2x256xf32>
    %376 = arith.maximumf %374, %375 : vector<2x256xf32>
    %c0_204 = arith.constant 0 : index
    %c0_205 = arith.constant 0 : index
    %377 = vector.load %arg12[%c0_204, %c0_205] : memref<256x128xf32, #tpu.memory_space<vmem>>, vector<256x128xf32>
    %cst_206 = arith.constant dense<0.000000e+00> : vector<2x128xf32>
    %378 = tpu.matmul %376, %377, %cst_206 {dimension_numbers = #tpu.dot_dimension_numbers<[1], [0], [0], [1], [0, 0, 1, 1], [], []>} : vector<2x256xf32>, vector<256x128xf32>, vector<2x128xf32> -> vector<2x128xf32>
    %c0_207 = arith.constant 0 : index
    %c768 = arith.constant 768 : index
    %379 = vector.load %arg15[%c0_207, %c768] : memref<1x929xf32, #tpu.memory_space<vmem>>, vector<1x128xf32>
    %380 = vector.broadcast %379 : vector<1x128xf32> to vector<2x128xf32>
    %381 = arith.addf %378, %380 : vector<2x128xf32>
    %cst_208 = arith.constant 0.000000e+00 : f32
    %382 = vector.broadcast %cst_208 : f32 to vector<2x128xf32>
    %383 = arith.maximumf %381, %382 : vector<2x128xf32>
    %c0_209 = arith.constant 0 : index
    %c0_210 = arith.constant 0 : index
    %384 = vector.load %arg13[%c0_209, %c0_210] : memref<128x32xf32, #tpu.memory_space<vmem>>, vector<128x32xf32>
    %cst_211 = arith.constant dense<0.000000e+00> : vector<2x32xf32>
    %385 = tpu.matmul %383, %384, %cst_211 {dimension_numbers = #tpu.dot_dimension_numbers<[1], [0], [0], [1], [0, 0, 1, 1], [], []>} : vector<2x128xf32>, vector<128x32xf32>, vector<2x32xf32> -> vector<2x32xf32>
    %c0_212 = arith.constant 0 : index
    %c896 = arith.constant 896 : index
    %386 = vector.load %arg15[%c0_212, %c896] : memref<1x929xf32, #tpu.memory_space<vmem>>, vector<1x32xf32>
    %387 = vector.broadcast %386 : vector<1x32xf32> to vector<2x32xf32>
    %388 = arith.addf %385, %387 : vector<2x32xf32>
    %cst_213 = arith.constant 0.000000e+00 : f32
    %389 = vector.broadcast %cst_213 : f32 to vector<2x32xf32>
    %390 = arith.maximumf %388, %389 : vector<2x32xf32>
    %c0_214 = arith.constant 0 : index
    %c0_215 = arith.constant 0 : index
    %391 = vector.load %arg14[%c0_214, %c0_215] : memref<32x1xf32, #tpu.memory_space<vmem>>, vector<32x1xf32>
    %cst_216 = arith.constant dense<0.000000e+00> : vector<2x1xf32>
    %392 = tpu.matmul %390, %391, %cst_216 {dimension_numbers = #tpu.dot_dimension_numbers<[1], [0], [0], [1], [0, 0, 1, 1], [], []>} : vector<2x32xf32>, vector<32x1xf32>, vector<2x1xf32> -> vector<2x1xf32>
    %c0_217 = arith.constant 0 : index
    %c928 = arith.constant 928 : index
    %393 = vector.load %arg15[%c0_217, %c928] : memref<1x929xf32, #tpu.memory_space<vmem>>, vector<1x1xf32>
    %394 = vector.broadcast %393 : vector<1x1xf32> to vector<2x1xf32>
    %395 = arith.addf %392, %394 : vector<2x1xf32>
    %c0_218 = arith.constant 0 : index
    %c0_219 = arith.constant 0 : index
    %396 = vector.load %arg16[%c0_218, %c0_219] : memref<2x1xf32, #tpu.memory_space<vmem>>, vector<2x1xf32>
    tpu.vector_store %arg16[%c0_218, %c0_219], %395 {strides = array<i32>} : memref<2x1xf32, #tpu.memory_space<vmem>>, vector<2x1xf32>,
    return
  }
}

</mosaic_0001>

<llo_original>
// kernel: bert_finetune_forward.1
$region0: #{bert_finetune_forward.1}
  #allocation0 [shape = 'u32[]', space=smem, size = 0x4, offset = 0x4, fixed_abs, tag = 'smem constant byte address 0x4 - core index']
  #allocation1 [shape = 'u32[72,128]{1,0:T(1,128)}', space=vmem, size = 0x9000, scoped, tag = 'internal scratch']
  %s0 = inlined_call_operand.vmem [shape: f32[16,32], index: 0, kind: input, shape index: {}]
  %s1 = inlined_call_operand.vmem [shape: f32[2,1,8], index: 1, kind: input, shape index: {}]
  %s2 = inlined_call_operand.hbm [shape: f32[12,32,16], index: 2, kind: input, shape index: {}]
  %s3 = inlined_call_operand.vmem [shape: f32[12,1,16], index: 3, kind: input, shape index: {}]
  %s4 = inlined_call_operand.hbm [shape: f32[4,16,32], index: 4, kind: input, shape index: {}]
  %s5 = inlined_call_operand.vmem [shape: f32[2,32,64], index: 5, kind: input, shape index: {}]
  %s6 = inlined_call_operand.hbm [shape: f32[2,64,32], index: 6, kind: input, shape index: {}]
  %s7 = inlined_call_operand.vmem [shape: f32[2,1,64], index: 7, kind: input, shape index: {}]
  %s8 = inlined_call_operand.vmem [shape: f32[15,32], index: 8, kind: input, shape index: {}]
  %s9 = inlined_call_operand.hbm [shape: f32[32,32], index: 9, kind: input, shape index: {}]
  %s10 = inlined_call_operand.hbm [shape: f32[32,512], index: 10, kind: input, shape index: {}]
  %s11 = inlined_call_operand.hbm [shape: f32[512,256], index: 11, kind: input, shape index: {}]
  %s12 = inlined_call_operand.hbm [shape: f32[256,128], index: 12, kind: input, shape index: {}]
  %s13 = inlined_call_operand.vmem [shape: f32[128,32], index: 13, kind: input, shape index: {}]
  %s14 = inlined_call_operand.hbm [shape: f32[32,1], index: 14, kind: input, shape index: {}]
  %s15 = inlined_call_operand.vmem [shape: f32[1,929], index: 15, kind: input, shape index: {}]
  %s16 = inlined_call_operand.vmem [shape: f32[2,1], index: 16, kind: output, shape index: {}]
  %s17 = sld [smem:[#allocation0]]
  $region106: #{bert_finetune_forward.1} parent=0
    _
  %s19 = ssub.s32 1, %s17
  %s20 = scalar_select 0, %s19, %s17
  $region1: #{bert_finetune_forward.1} parent=0
    #allocation2 [shape = 'u8[196608]{0}', space=vmem, size = 0x30000, scoped, tag = 'input window, operand 2, single buffered']
    #allocation3 [shape = 's32[1]{0}', space=sflag, size = 0x4, scoped, tag = 'scoped memory for bert_finetune_forward.1']
    #allocation4 [shape = 'u8[32768]{0}', space=vmem, size = 0x8000, scoped, tag = 'input window, operand 4, single buffered']
    #allocation5 [shape = 's32[1]{0}', space=sflag, size = 0x4, scoped, tag = 'scoped memory for bert_finetune_forward.1']
    #allocation6 [shape = 'u8[65536]{0}', space=vmem, size = 0x10000, scoped, tag = 'input window, operand 6, single buffered']
    #allocation7 [shape = 'u8[16384]{0}', space=vmem, size = 0x4000, scoped, tag = 'input window, operand 9, single buffered']
    #allocation8 [shape = 's32[1]{0}', space=sflag, size = 0x4, scoped, tag = 'scoped memory for bert_finetune_forward.1']
    #allocation9 [shape = 'u8[65536]{0}', space=vmem, size = 0x10000, scoped, tag = 'input window, operand 10, single buffered']
    #allocation10 [shape = 'u8[524288]{0}', space=vmem, size = 0x80000, scoped, tag = 'input window, operand 11, single buffered']
    #allocation11 [shape = 's32[1]{0}', space=sflag, size = 0x4, scoped, tag = 'scoped memory for bert_finetune_forward.1']
    #allocation12 [shape = 'u8[131072]{0}', space=vmem, size = 0x20000, scoped, tag = 'input window, operand 12, single buffered']
    #allocation13 [shape = 'u8[16384]{0}', space=vmem, size = 0x4000, scoped, tag = 'input window, operand 14, single buffered']
    #allocation14 [shape = 's32[1]{0}', space=sflag, size = 0x4, scoped, tag = 'scoped memory for bert_finetune_forward.1']
    %21 = vsyncpa [#allocation3], 0
    %22 = vsyncpa [#allocation5], 0
    %23 = vsyncpa [#allocation8], 0
    %24 = vsyncpa [#allocation11], 0
    %25 = vsyncpa [#allocation14], 0
    // Predicated region
    $region2: #{bert_finetune_forward.1} parent=1 // pred_check
      _
    $region3: #{bert_finetune_forward.1} parent=1 // pred_check_branch
      %27 = sbr.rel (0) target = $region5
    $region4: #{bert_finetune_forward.1} parent=1 // pred_region
      _
    $region5: #{bert_finetune_forward.1} parent=1 // pred_fallthru
      _
    // Predicated region
    $region6: #{bert_finetune_forward.1} parent=1 // pred_check
      _
    $region7: #{bert_finetune_forward.1} parent=1 // pred_check_branch
      %29 = sbr.rel (0) target = $region9
    $region8: #{bert_finetune_forward.1} parent=1 // pred_region
      _
    $region9: #{bert_finetune_forward.1} parent=1 // pred_fallthru
      _
    // Predicated region
    $region10: #{bert_finetune_forward.1} parent=1 // pred_check
      _
    $region11: #{bert_finetune_forward.1} parent=1 // pred_check_branch
      %31 = sbr.rel (0) target = $region13
    $region12: #{bert_finetune_forward.1} parent=1 // pred_region
      %33 = vsyncadd [#allocation3], 0
      %s34 = sshll.u32 %s2, 4
      %s35 = int_to_ptr.hbm [resolvable:$true] %s34
      %s36 = sshll.u32 [#allocation2], 4
      %s37 = int_to_ptr.vmem [resolvable:$true] %s36
      %42 = dma.hbm_to_vmem [thread:$0]  %s35, 6144, %s37, [#allocation3], 128, 128, 8
    $region13: #{bert_finetune_forward.1} parent=1 // pred_fallthru
      _
    // Predicated region
    $region14: #{bert_finetune_forward.1} parent=1 // pred_check
      _
    $region15: #{bert_finetune_forward.1} parent=1 // pred_check_branch
      %44 = sbr.rel (0) target = $region17
    $region16: #{bert_finetune_forward.1} parent=1 // pred_region
      _
    $region17: #{bert_finetune_forward.1} parent=1 // pred_fallthru
      _
    // Predicated region
    $region18: #{bert_finetune_forward.1} parent=1 // pred_check
      _
    $region19: #{bert_finetune_forward.1} parent=1 // pred_check_branch
      %46 = sbr.rel (0) target = $region21
    $region20: #{bert_finetune_forward.1} parent=1 // pred_region
      %48 = vsyncadd [#allocation5], 0
      %s49 = sshll.u32 %s4, 4
      %s50 = int_to_ptr.hbm [resolvable:$true] %s49
      %s51 = sshll.u32 [#allocation4], 4
      %s52 = int_to_ptr.vmem [resolvable:$true] %s51
      %57 = dma.hbm_to_vmem [thread:$0]  %s50, 1024, %s52, [#allocation5], 128, 128, 8
    $region21: #{bert_finetune_forward.1} parent=1 // pred_fallthru
      _
    // Predicated region
    $region22: #{bert_finetune_forward.1} parent=1 // pred_check
      _
    $region23: #{bert_finetune_forward.1} parent=1 // pred_check_branch
      %59 = sbr.rel (0) target = $region25
    $region24: #{bert_finetune_forward.1} parent=1 // pred_region
      _
    $region25: #{bert_finetune_forward.1} parent=1 // pred_fallthru
      _
    // Predicated region
    $region26: #{bert_finetune_forward.1} parent=1 // pred_check
      _
    $region27: #{bert_finetune_forward.1} parent=1 // pred_check_branch
      %61 = sbr.rel (0) target = $region29
    $region28: #{bert_finetune_forward.1} parent=1 // pred_region
      %63 = vsyncadd [#allocation5], 0
      %s64 = sshll.u32 %s6, 4
      %s65 = int_to_ptr.hbm [resolvable:$true] %s64
      %s66 = sshll.u32 [#allocation6], 4
      %s67 = int_to_ptr.vmem [resolvable:$true] %s66
      %72 = dma.hbm_to_vmem [thread:$0]  %s65, 2048, %s67, [#allocation5], 128, 128, 8
    $region29: #{bert_finetune_forward.1} parent=1 // pred_fallthru
      _
    // Predicated region
    $region30: #{bert_finetune_forward.1} parent=1 // pred_check
      _
    $region31: #{bert_finetune_forward.1} parent=1 // pred_check_branch
      %74 = sbr.rel (0) target = $region33
    $region32: #{bert_finetune_forward.1} parent=1 // pred_region
      _
    $region33: #{bert_finetune_forward.1} parent=1 // pred_fallthru
      _
    // Predicated region
    $region34: #{bert_finetune_forward.1} parent=1 // pred_check
      _
    $region35: #{bert_finetune_forward.1} parent=1 // pred_check_branch
      %76 = sbr.rel (0) target = $region37
    $region36: #{bert_finetune_forward.1} parent=1 // pred_region
      _
    $region37: #{bert_finetune_forward.1} parent=1 // pred_fallthru
      _
    // Predicated region
    $region38: #{bert_finetune_forward.1} parent=1 // pred_check
      _
    $region39: #{bert_finetune_forward.1} parent=1 // pred_check_branch
      %78 = sbr.rel (0) target = $region41
    $region40: #{bert_finetune_forward.1} parent=1 // pred_region
      %80 = vsyncadd [#allocation8], 0
      %s81 = sshll.u32 %s9, 4
      %s82 = int_to_ptr.hbm [resolvable:$true] %s81
      %s83 = sshll.u32 [#allocation7], 4
      %s84 = int_to_ptr.vmem [resolvable:$true] %s83
      %89 = dma.hbm_to_vmem [thread:$0]  %s82, 512, %s84, [#allocation8], 128, 128, 8
    $region41: #{bert_finetune_forward.1} parent=1 // pred_fallthru
      _
    // Predicated region
    $region42: #{bert_finetune_forward.1} parent=1 // pred_check
      _
    $region43: #{bert_finetune_forward.1} parent=1 // pred_check_branch
      %91 = sbr.rel (0) target = $region45
    $region44: #{bert_finetune_forward.1} parent=1 // pred_region
      %93 = vsyncadd [#allocation8], 0
      %s94 = sshll.u32 %s10, 4
      %s95 = int_to_ptr.hbm [resolvable:$true] %s94
      %s96 = sshll.u32 [#allocation9], 4
      %s97 = int_to_ptr.vmem [resolvable:$true] %s96
      %102 = dma.hbm_to_vmem [thread:$0]  %s95, 2048, %s97, [#allocation8], 512, 512, 32
    $region45: #{bert_finetune_forward.1} parent=1 // pred_fallthru
      _
    // Predicated region
    $region46: #{bert_finetune_forward.1} parent=1 // pred_check
      _
    $region47: #{bert_finetune_forward.1} parent=1 // pred_check_branch
      %104 = sbr.rel (0) target = $region49
    $region48: #{bert_finetune_forward.1} parent=1 // pred_region
      %106 = vsyncadd [#allocation11], 0
      %s107 = sshll.u32 %s11, 4
      %s108 = int_to_ptr.hbm [resolvable:$true] %s107
      %s109 = sshll.u32 [#allocation10], 4
      %s110 = int_to_ptr.vmem [resolvable:$true] %s109
      %115 = dma.hbm_to_vmem [thread:$0]  %s108, 16384, %s110, [#allocation11], 256, 256, 16
    $region49: #{bert_finetune_forward.1} parent=1 // pred_fallthru
      _
    // Predicated region
    $region50: #{bert_finetune_forward.1} parent=1 // pred_check
      _
    $region51: #{bert_finetune_forward.1} parent=1 // pred_check_branch
      %117 = sbr.rel (0) target = $region53
    $region52: #{bert_finetune_forward.1} parent=1 // pred_region
      %119 = vsyncadd [#allocation11], 0
      %s120 = sshll.u32 %s12, 4
      %s121 = int_to_ptr.hbm [resolvable:$true] %s120
      %s122 = sshll.u32 [#allocation12], 4
      %s123 = int_to_ptr.vmem [resolvable:$true] %s122
      %128 = dma.hbm_to_vmem [thread:$0]  %s121, 4096, %s123, [#allocation11], 128, 128, 8
    $region53: #{bert_finetune_forward.1} parent=1 // pred_fallthru
      _
    // Predicated region
    $region54: #{bert_finetune_forward.1} parent=1 // pred_check
      _
    $region55: #{bert_finetune_forward.1} parent=1 // pred_check_branch
      %130 = sbr.rel (0) target = $region57
    $region56: #{bert_finetune_forward.1} parent=1 // pred_region
      _
    $region57: #{bert_finetune_forward.1} parent=1 // pred_fallthru
      _
    // Predicated region
    $region58: #{bert_finetune_forward.1} parent=1 // pred_check
      _
    $region59: #{bert_finetune_forward.1} parent=1 // pred_check_branch
      %132 = sbr.rel (0) target = $region61
    $region60: #{bert_finetune_forward.1} parent=1 // pred_region
      %134 = vsyncadd [#allocation14], 0
      %s135 = sshll.u32 %s14, 4
      %s136 = int_to_ptr.hbm [resolvable:$true] %s135
      %s137 = sshll.u32 [#allocation13], 4
      %s138 = int_to_ptr.vmem [resolvable:$true] %s137
      %143 = dma.hbm_to_vmem [thread:$0]  %s136, 512, %s138, [#allocation14], 128, 128, 8
    $region61: #{bert_finetune_forward.1} parent=1 // pred_fallthru
      _
    // Predicated region
    $region62: #{bert_finetune_forward.1} parent=1 // pred_check
      _
    $region63: #{bert_finetune_forward.1} parent=1 // pred_check_branch
      %145 = sbr.rel (0) target = $region65
    $region64: #{bert_finetune_forward.1} parent=1 // pred_region
      _
    $region65: #{bert_finetune_forward.1} parent=1 // pred_fallthru
      _
    // Predicated region
    $region66: #{bert_finetune_forward.1} parent=1 // pred_check
      _
    $region67: #{bert_finetune_forward.1} parent=1 // pred_check_branch
      %147 = sbr.rel (0) target = $region69
    $region68: #{bert_finetune_forward.1} parent=1 // pred_region
      %149 = dma.done [#allocation3], 6144
    $region69: #{bert_finetune_forward.1} parent=1 // pred_fallthru
      _
    // Predicated region
    $region70: #{bert_finetune_forward.1} parent=1 // pred_check
      _
    $region71: #{bert_finetune_forward.1} parent=1 // pred_check_branch
      %151 = sbr.rel (0) target = $region73
    $region72: #{bert_finetune_forward.1} parent=1 // pred_region
      %153 = dma.done [#allocation5], 1024
    $region73: #{bert_finetune_forward.1} parent=1 // pred_fallthru
      _
    // Predicated region
    $region74: #{bert_finetune_forward.1} parent=1 // pred_check
      _
    $region75: #{bert_finetune_forward.1} parent=1 // pred_check_branch
      %155 = sbr.rel (0) target = $region77
    $region76: #{bert_finetune_forward.1} parent=1 // pred_region
      %157 = dma.done [#allocation5], 2048
    $region77: #{bert_finetune_forward.1} parent=1 // pred_fallthru
      _
    // Predicated region
    $region78: #{bert_finetune_forward.1} parent=1 // pred_check
      _
    $region79: #{bert_finetune_forward.1} parent=1 // pred_check_branch
      %159 = sbr.rel (0) target = $region81
    $region80: #{bert_finetune_forward.1} parent=1 // pred_region
      %161 = dma.done [#allocation8], 512
    $region81: #{bert_finetune_forward.1} parent=1 // pred_fallthru
      _
    // Predicated region
    $region82: #{bert_finetune_forward.1} parent=1 // pred_check
      _
    $region83: #{bert_finetune_forward.1} parent=1 // pred_check_branch
      %163 = sbr.rel (0) target = $region85
    $region84: #{bert_finetune_forward.1} parent=1 // pred_region
      %165 = dma.done [#allocation8], 2048
    $region85: #{bert_finetune_forward.1} parent=1 // pred_fallthru
      _
    // Predicated region
    $region86: #{bert_finetune_forward.1} parent=1 // pred_check
      _
    $region87: #{bert_finetune_forward.1} parent=1 // pred_check_branch
      %167 = sbr.rel (0) target = $region89
    $region88: #{bert_finetune_forward.1} parent=1 // pred_region
      %169 = dma.done [#allocation11], 16384
    $region89: #{bert_finetune_forward.1} parent=1 // pred_fallthru
      _
    // Predicated region
    $region90: #{bert_finetune_forward.1} parent=1 // pred_check
      _
    $region91: #{bert_finetune_forward.1} parent=1 // pred_check_branch
      %171 = sbr.rel (0) target = $region93
    $region92: #{bert_finetune_forward.1} parent=1 // pred_region
      %173 = dma.done [#allocation11], 4096
    $region93: #{bert_finetune_forward.1} parent=1 // pred_fallthru
      _
    // Predicated region
    $region94: #{bert_finetune_forward.1} parent=1 // pred_check
      _
    $region95: #{bert_finetune_forward.1} parent=1 // pred_check_branch
      %175 = sbr.rel (0) target = $region97
    $region96: #{bert_finetune_forward.1} parent=1 // pred_region
      %177 = dma.done [#allocation14], 512
    $region97: #{bert_finetune_forward.1} parent=1 // pred_fallthru
      _
    %v178 = vld [vmem:[%s0] sm:$0xff]
    %v179 = vld [vmem:[%s0 + $0x8] sm:$0xff]
    %v180 = vld [vmem:[%s8] sm:$0x1]
    %v181 = vld [vmem:[%s8 + $0x1] sm:$0x1]
    %vm182 = vcmask 261120
    %v183 = vsel %vm182, %v178, 0.0
    %184 = vadd.xlane.f32.xlu0 %v183
    %v185 = vpop.xlane.xlu0 %184
    %v186 = vsel %vm182, %v179, 0.0
    %187 = vadd.xlane.f32.xlu0 %v186
    %v188 = vpop.xlane.xlu0 %187
    %v189 = vrcp.pop 32.0
    %v190 = vmul.f32 32.0, %v189
    %v191 = vsub.f32 1.0, %v190
    %v192 = vmul.f32 %v189, %v191
    %v193 = vadd.f32 %v189, %v192
    %vm194 = vweird.f32 %v189
    %v195 = vsel %vm194, %v189, %v193
    %v196 = vmul.f32 %v185, %v195
    %v197 = vmul.f32 %v188, %v195
    %v198 = vsub.f32 %v178, %v196
    %v199 = vsub.f32 %v179, %v197
    %v200 = vmul.f32 %v198, %v198
    %v201 = vmul.f32 %v199, %v199
    %v202 = vsel %vm182, %v200, 0.0
    %203 = vadd.xlane.f32.xlu0 %v202
    %v204 = vpop.xlane.xlu0 %203
    %v205 = vsel %vm182, %v201, 0.0
    %206 = vadd.xlane.f32.xlu0 %v205
    %v207 = vpop.xlane.xlu0 %206
    %v208 = vmul.f32 %v204, %v195
    %v209 = vmul.f32 %v207, %v195
    %v210 = vadd.f32 %v208, 1e-12
    %v211 = vadd.f32 %v209, 1e-12
    %v212 = vrsqrt.pop %v210
    %v213 = vmul.f32 %v212, %v210
    %v214 = vmul.f32 %v213, %v212
    %v215 = vmul.f32 0.5, %v214
    %v216 = vsub.f32 1.5, %v215
    %v217 = vmul.f32 %v212, %v216
    %vm218 = vweird.f32 %v210
    %vm219 = vweird.f32 %v212
    %vm220 = vmor %vm218, %vm219
    %v221 = vsel %vm220, %v212, %v217
    %v222 = vrsqrt.pop %v211
    %v223 = vmul.f32 %v222, %v211
    %v224 = vmul.f32 %v223, %v222
    %v225 = vmul.f32 0.5, %v224
    %v226 = vsub.f32 1.5, %v225
    %v227 = vmul.f32 %v222, %v226
    %vm228 = vweird.f32 %v211
    %vm229 = vweird.f32 %v222
    %vm230 = vmor %vm228, %vm229
    %v231 = vsel %vm230, %v222, %v227
    %v232 = vmul.f32 %v198, %v221
    %v233 = vmul.f32 %v199, %v231
    %v234 = vperm.slane %v180, 0
    %v235 = vmul.f32 %v232, %v234
    %v236 = vmul.f32 %v233, %v234
    %v237 = vperm.slane %v181, 0
    %v238 = vadd.f32 %v235, %v237
    %v239 = vadd.f32 %v236, %v237
    %v240 = vld [vmem:[%s1] sm:$0x1]
    %v241 = vld [vmem:[%s1 + $0x1] sm:$0x1]
    %v242 = vld [vmem:[#allocation2] sm:$0xff]
    %v243 = vld [vmem:[#allocation2 + $0x8] sm:$0xff]
    %v244 = vld [vmem:[#allocation2 + $0x10] sm:$0xff]
    %v245 = vld [vmem:[#allocation2 + $0x18] sm:$0xff]
    %v246 = vld [vmem:[%s3] sm:$0x1]
    %v248 = vperm.slane %v246, 0
    %v251 = vsel %vm182, %v238, 0
    %v254 = vsel %vm182, %v239, 0
    %256 = vmatpush.msra.mxu0 0.0
    %257 = vmatpush.msra.mxu0 0.0
    %258 = vmatpush.msra.mxu0 0.0
    %259 = vmatpush.msra.mxu0 0.0
    %260 = vmatpush.msra.mxu0 0.0
    %261 = vmatpush.msra.mxu0 0.0
    %262 = vmatpush.msra.mxu0 0.0
    %263 = vmatpush.msra.mxu0 0.0
    %264 = vmatpush.msra.mxu0 0.0
    %265 = vmatpush.msra.mxu0 0.0
    %266 = vmatpush.msra.mxu0 0.0
    %267 = vmatpush.msra.mxu0 0.0
    %268 = vmatpush.msra.mxu0 %v245
    %269 = vmatpush.msra.mxu0 %v244
    %270 = vmatpush.msra.mxu0 %v243
    %271 = vmatpush.msra.mxu0 %v242
    %272 = vmatmul.f32.gmra.mxu0 %v251
    %v273 = vpop.f32.mrf.mxu0
    %v274 = vadd.f32 %v248, %v273
    %275 = vmatmul.f32.gmra.mxu0 %v254
    %v276 = vpop.f32.mrf.mxu0
    %v277 = vadd.f32 %v248, %v276
    %278 = vdwg.mxu0
    %s279 = scalar_lea.vmem [#allocation2], 128
    %v280 = vld [vmem:[%s279] sm:$0xff]
    %v281 = vld [vmem:[%s279 + $0x8] sm:$0xff]
    %v282 = vld [vmem:[%s279 + $0x10] sm:$0xff]
    %v283 = vld [vmem:[%s279 + $0x18] sm:$0xff]
    %s284 = scalar_lea.vmem %s3, 4
    %v285 = vld [vmem:[%s284] sm:$0x1]
    %v287 = vperm.slane %v285, 0
    %289 = vmatpush.msra.mxu0 0.0
    %290 = vmatpush.msra.mxu0 0.0
    %291 = vmatpush.msra.mxu0 0.0
    %292 = vmatpush.msra.mxu0 0.0
    %293 = vmatpush.msra.mxu0 0.0
    %294 = vmatpush.msra.mxu0 0.0
    %295 = vmatpush.msra.mxu0 0.0
    %296 = vmatpush.msra.mxu0 0.0
    %297 = vmatpush.msra.mxu0 0.0
    %298 = vmatpush.msra.mxu0 0.0
    %299 = vmatpush.msra.mxu0 0.0
    %300 = vmatpush.msra.mxu0 0.0
    %301 = vmatpush.msra.mxu0 %v283
    %302 = vmatpush.msra.mxu0 %v282
    %303 = vmatpush.msra.mxu0 %v281
    %304 = vmatpush.msra.mxu0 %v280
    %305 = vmatmul.f32.gmra.mxu0 %v251
    %v306 = vpop.f32.mrf.mxu0
    %v307 = vadd.f32 %v287, %v306
    %308 = vmatmul.f32.gmra.mxu0 %v254
    %v309 = vpop.f32.mrf.mxu0
    %v310 = vadd.f32 %v287, %v309
    %311 = vdwg.mxu0
    %s312 = scalar_lea.vmem [#allocation2], 256
    %v313 = vld [vmem:[%s312] sm:$0xff]
    %v314 = vld [vmem:[%s312 + $0x8] sm:$0xff]
    %v315 = vld [vmem:[%s312 + $0x10] sm:$0xff]
    %v316 = vld [vmem:[%s312 + $0x18] sm:$0xff]
    %s317 = scalar_lea.vmem %s3, 8
    %v318 = vld [vmem:[%s317] sm:$0x1]
    %v320 = vperm.slane %v318, 0
    %322 = vmatpush.msra.mxu0 0.0
    %323 = vmatpush.msra.mxu0 0.0
    %324 = vmatpush.msra.mxu0 0.0
    %325 = vmatpush.msra.mxu0 0.0
    %326 = vmatpush.msra.mxu0 0.0
    %327 = vmatpush.msra.mxu0 0.0
    %328 = vmatpush.msra.mxu0 0.0
    %329 = vmatpush.msra.mxu0 0.0
    %330 = vmatpush.msra.mxu0 0.0
    %331 = vmatpush.msra.mxu0 0.0
    %332 = vmatpush.msra.mxu0 0.0
    %333 = vmatpush.msra.mxu0 0.0
    %334 = vmatpush.msra.mxu0 %v316
    %335 = vmatpush.msra.mxu0 %v315
    %336 = vmatpush.msra.mxu0 %v314
    %337 = vmatpush.msra.mxu0 %v313
    %338 = vmatmul.f32.gmra.mxu0 %v251
    %v339 = vpop.f32.mrf.mxu0
    %v340 = vadd.f32 %v320, %v339
    %341 = vmatmul.f32.gmra.mxu0 %v254
    %v342 = vpop.f32.mrf.mxu0
    %v343 = vadd.f32 %v320, %v342
    %344 = vdwg.mxu0
    %v347 = vperm.slane %v240, 0
    %v348 = vperm.slane %v241, 0
    %vm351 = vcmask 130048
    %v353 = vsel %vm351, %v274, 0
    %v356 = vsel %vm351, %v307, 0
    %358 = vmatpush.xpose.msra.mxu0 0.0
    %359 = vmatpush.xpose.msra.mxu0 0.0
    %360 = vmatpush.xpose.msra.mxu0 0.0
    %361 = vmatpush.xpose.msra.mxu0 0.0
    %362 = vmatpush.xpose.msra.mxu0 0.0
    %363 = vmatpush.xpose.msra.mxu0 0.0
    %364 = vmatpush.xpose.msra.mxu0 0.0
    %365 = vmatpush.xpose.msra.mxu0 0.0
    %366 = vmatpush.xpose.msra.mxu0 0.0
    %367 = vmatpush.xpose.msra.mxu0 0.0
    %368 = vmatpush.xpose.msra.mxu0 0.0
    %369 = vmatpush.xpose.msra.mxu0 0.0
    %370 = vmatpush.xpose.msra.mxu0 0.0
    %371 = vmatpush.xpose.msra.mxu0 0.0
    %372 = vmatpush.xpose.msra.mxu0 0.0
    %373 = vmatpush.xpose.msra.mxu0 %v356
    %374 = vmatmul.f32.gmra.mxu0 %v353
    %v375 = vpop.f32.mrf.mxu0
    %v376 = vadd.f32 %v347, %v375
    %377 = vdwg.mxu0
    %v379 = vsel %vm351, %v277, 0
    %v382 = vsel %vm351, %v310, 0
    %384 = vmatpush.xpose.msra.mxu0 0.0
    %385 = vmatpush.xpose.msra.mxu0 0.0
    %386 = vmatpush.xpose.msra.mxu0 0.0
    %387 = vmatpush.xpose.msra.mxu0 0.0
    %388 = vmatpush.xpose.msra.mxu0 0.0
    %389 = vmatpush.xpose.msra.mxu0 0.0
    %390 = vmatpush.xpose.msra.mxu0 0.0
    %391 = vmatpush.xpose.msra.mxu0 0.0
    %392 = vmatpush.xpose.msra.mxu0 0.0
    %393 = vmatpush.xpose.msra.mxu0 0.0
    %394 = vmatpush.xpose.msra.mxu0 0.0
    %395 = vmatpush.xpose.msra.mxu0 0.0
    %396 = vmatpush.xpose.msra.mxu0 0.0
    %397 = vmatpush.xpose.msra.mxu0 0.0
    %398 = vmatpush.xpose.msra.mxu0 0.0
    %399 = vmatpush.xpose.msra.mxu0 %v382
    %400 = vmatmul.f32.gmra.mxu0 %v379
    %v401 = vpop.f32.mrf.mxu0
    %v402 = vadd.f32 %v348, %v401
    %403 = vdwg.mxu0
    %vm404 = vcmask 64512
    %v405 = vsel %vm404, %v376, -inf
    %406 = vmax.xlane.f32.xlu0 %v405
    %v407 = vpop.xlane.xlu0 %406
    %v408 = vsel %vm404, %v402, -inf
    %409 = vmax.xlane.f32.xlu0 %v408
    %v410 = vpop.xlane.xlu0 %409
    %v411 = vsub.f32 %v376, %v407
    %v412 = vsub.f32 %v402, %v410
    %v413 = vmul.f32 %v411, 1.442695
    %v414 = vpow.pop %v413
    %v415 = vmul.f32 %v412, 1.442695
    %v416 = vpow.pop %v415
    %v417 = vsel %vm404, %v414, 0.0
    %418 = vadd.xlane.f32.xlu0 %v417
    %v419 = vpop.xlane.xlu0 %418
    %v420 = vsel %vm404, %v416, 0.0
    %421 = vadd.xlane.f32.xlu0 %v420
    %v422 = vpop.xlane.xlu0 %421
    %v423 = vrcp.pop %v419
    %v424 = vrcp.pop %v422
    %v425 = vmul.f32 %v414, %v423
    %v426 = vmul.f32 %v416, %v424
    %v428 = vsel %vm404, %v425, 0
    %430 = vmatpush.msra.mxu0 0.0
    %431 = vmatpush.msra.mxu0 0.0
    %432 = vmatpush.msra.mxu0 0.0
    %433 = vmatpush.msra.mxu0 0.0
    %434 = vmatpush.msra.mxu0 0.0
    %435 = vmatpush.msra.mxu0 0.0
    %436 = vmatpush.msra.mxu0 0.0
    %437 = vmatpush.msra.mxu0 0.0
    %438 = vmatpush.msra.mxu0 0.0
    %439 = vmatpush.msra.mxu0 0.0
    %440 = vmatpush.msra.mxu0 0.0
    %441 = vmatpush.msra.mxu0 0.0
    %442 = vmatpush.msra.mxu0 0.0
    %443 = vmatpush.msra.mxu0 0.0
    %444 = vmatpush.msra.mxu0 0.0
    %445 = vmatpush.msra.mxu0 %v340
    %446 = vmatmul.f32.gmra.mxu0 %v428
    %v447 = vpop.f32.mrf.mxu0
    %v448 = vadd.f32 0.0, %v447
    %449 = vdwg.mxu0
    %v451 = vsel %vm404, %v426, 0
    %453 = vmatpush.msra.mxu0 0.0
    %454 = vmatpush.msra.mxu0 0.0
    %455 = vmatpush.msra.mxu0 0.0
    %456 = vmatpush.msra.mxu0 0.0
    %457 = vmatpush.msra.mxu0 0.0
    %458 = vmatpush.msra.mxu0 0.0
    %459 = vmatpush.msra.mxu0 0.0
    %460 = vmatpush.msra.mxu0 0.0
    %461 = vmatpush.msra.mxu0 0.0
    %462 = vmatpush.msra.mxu0 0.0
    %463 = vmatpush.msra.mxu0 0.0
    %464 = vmatpush.msra.mxu0 0.0
    %465 = vmatpush.msra.mxu0 0.0
    %466 = vmatpush.msra.mxu0 0.0
    %467 = vmatpush.msra.mxu0 0.0
    %468 = vmatpush.msra.mxu0 %v343
    %469 = vmatmul.f32.gmra.mxu0 %v451
    %v470 = vpop.f32.mrf.mxu0
    %v471 = vadd.f32 0.0, %v470
    %472 = vdwg.mxu0
    %v473 = vld [vmem:[#allocation4] sm:$0xff]
    %v474 = vld [vmem:[#allocation4 + $0x8] sm:$0xff]
    %s475 = scalar_lea.vmem [#allocation2], 32
    %v476 = vld [vmem:[%s475] sm:$0xff]
    %v477 = vld [vmem:[%s475 + $0x8] sm:$0xff]
    %v478 = vld [vmem:[%s475 + $0x10] sm:$0xff]
    %v479 = vld [vmem:[%s475 + $0x18] sm:$0xff]
    %s480 = scalar_lea.vmem %s3, 1
    %v481 = vld [vmem:[%s480] sm:$0x1]
    %v483 = vperm.slane %v481, 0
    %485 = vmatpush.msra.mxu0 0.0
    %486 = vmatpush.msra.mxu0 0.0
    %487 = vmatpush.msra.mxu0 0.0
    %488 = vmatpush.msra.mxu0 0.0
    %489 = vmatpush.msra.mxu0 0.0
    %490 = vmatpush.msra.mxu0 0.0
    %491 = vmatpush.msra.mxu0 0.0
    %492 = vmatpush.msra.mxu0 0.0
    %493 = vmatpush.msra.mxu0 0.0
    %494 = vmatpush.msra.mxu0 0.0
    %495 = vmatpush.msra.mxu0 0.0
    %496 = vmatpush.msra.mxu0 0.0
    %497 = vmatpush.msra.mxu0 %v479
    %498 = vmatpush.msra.mxu0 %v478
    %499 = vmatpush.msra.mxu0 %v477
    %500 = vmatpush.msra.mxu0 %v476
    %501 = vmatmul.f32.gmra.mxu0 %v251
    %v502 = vpop.f32.mrf.mxu0
    %v503 = vadd.f32 %v483, %v502
    %504 = vmatmul.f32.gmra.mxu0 %v254
    %v505 = vpop.f32.mrf.mxu0
    %v506 = vadd.f32 %v483, %v505
    %507 = vdwg.mxu0
    %s508 = scalar_lea.vmem [#allocation2], 160
    %v509 = vld [vmem:[%s508] sm:$0xff]
    %v510 = vld [vmem:[%s508 + $0x8] sm:$0xff]
    %v511 = vld [vmem:[%s508 + $0x10] sm:$0xff]
    %v512 = vld [vmem:[%s508 + $0x18] sm:$0xff]
    %s513 = scalar_lea.vmem %s3, 5
    %v514 = vld [vmem:[%s513] sm:$0x1]
    %v516 = vperm.slane %v514, 0
    %518 = vmatpush.msra.mxu0 0.0
    %519 = vmatpush.msra.mxu0 0.0
    %520 = vmatpush.msra.mxu0 0.0
    %521 = vmatpush.msra.mxu0 0.0
    %522 = vmatpush.msra.mxu0 0.0
    %523 = vmatpush.msra.mxu0 0.0
    %524 = vmatpush.msra.mxu0 0.0
    %525 = vmatpush.msra.mxu0 0.0
    %526 = vmatpush.msra.mxu0 0.0
    %527 = vmatpush.msra.mxu0 0.0
    %528 = vmatpush.msra.mxu0 0.0
    %529 = vmatpush.msra.mxu0 0.0
    %530 = vmatpush.msra.mxu0 %v512
    %531 = vmatpush.msra.mxu0 %v511
    %532 = vmatpush.msra.mxu0 %v510
    %533 = vmatpush.msra.mxu0 %v509
    %534 = vmatmul.f32.gmra.mxu0 %v251
    %v535 = vpop.f32.mrf.mxu0
    %v536 = vadd.f32 %v516, %v535
    %537 = vmatmul.f32.gmra.mxu0 %v254
    %v538 = vpop.f32.mrf.mxu0
    %v539 = vadd.f32 %v516, %v538
    %540 = vdwg.mxu0
    %s541 = scalar_lea.vmem [#allocation2], 288
    %v542 = vld [vmem:[%s541] sm:$0xff]
    %v543 = vld [vmem:[%s541 + $0x8] sm:$0xff]
    %v544 = vld [vmem:[%s541 + $0x10] sm:$0xff]
    %v545 = vld [vmem:[%s541 + $0x18] sm:$0xff]
    %s546 = scalar_lea.vmem %s3, 9
    %v547 = vld [vmem:[%s546] sm:$0x1]
    %v549 = vperm.slane %v547, 0
    %551 = vmatpush.msra.mxu0 0.0
    %552 = vmatpush.msra.mxu0 0.0
    %553 = vmatpush.msra.mxu0 0.0
    %554 = vmatpush.msra.mxu0 0.0
    %555 = vmatpush.msra.mxu0 0.0
    %556 = vmatpush.msra.mxu0 0.0
    %557 = vmatpush.msra.mxu0 0.0
    %558 = vmatpush.msra.mxu0 0.0
    %559 = vmatpush.msra.mxu0 0.0
    %560 = vmatpush.msra.mxu0 0.0
    %561 = vmatpush.msra.mxu0 0.0
    %562 = vmatpush.msra.mxu0 0.0
    %563 = vmatpush.msra.mxu0 %v545
    %564 = vmatpush.msra.mxu0 %v544
    %565 = vmatpush.msra.mxu0 %v543
    %566 = vmatpush.msra.mxu0 %v542
    %567 = vmatmul.f32.gmra.mxu0 %v251
    %v568 = vpop.f32.mrf.mxu0
    %v569 = vadd.f32 %v549, %v568
    %570 = vmatmul.f32.gmra.mxu0 %v254
    %v571 = vpop.f32.mrf.mxu0
    %v572 = vadd.f32 %v549, %v571
    %573 = vdwg.mxu0
    %v575 = vsel %vm351, %v503, 0
    %v578 = vsel %vm351, %v536, 0
    %580 = vmatpush.xpose.msra.mxu0 0.0
    %581 = vmatpush.xpose.msra.mxu0 0.0
    %582 = vmatpush.xpose.msra.mxu0 0.0
    %583 = vmatpush.xpose.msra.mxu0 0.0
    %584 = vmatpush.xpose.msra.mxu0 0.0
    %585 = vmatpush.xpose.msra.mxu0 0.0
    %586 = vmatpush.xpose.msra.mxu0 0.0
    %587 = vmatpush.xpose.msra.mxu0 0.0
    %588 = vmatpush.xpose.msra.mxu0 0.0
    %589 = vmatpush.xpose.msra.mxu0 0.0
    %590 = vmatpush.xpose.msra.mxu0 0.0
    %591 = vmatpush.xpose.msra.mxu0 0.0
    %592 = vmatpush.xpose.msra.mxu0 0.0
    %593 = vmatpush.xpose.msra.mxu0 0.0
    %594 = vmatpush.xpose.msra.mxu0 0.0
    %595 = vmatpush.xpose.msra.mxu0 %v578
    %596 = vmatmul.f32.gmra.mxu0 %v575
    %v597 = vpop.f32.mrf.mxu0
    %v598 = vadd.f32 %v347, %v597
    %599 = vdwg.mxu0
    %v601 = vsel %vm351, %v506, 0
    %v604 = vsel %vm351, %v539, 0
    %606 = vmatpush.xpose.msra.mxu0 0.0
    %607 = vmatpush.xpose.msra.mxu0 0.0
    %608 = vmatpush.xpose.msra.mxu0 0.0
    %609 = vmatpush.xpose.msra.mxu0 0.0
    %610 = vmatpush.xpose.msra.mxu0 0.0
    %611 = vmatpush.xpose.msra.mxu0 0.0
    %612 = vmatpush.xpose.msra.mxu0 0.0
    %613 = vmatpush.xpose.msra.mxu0 0.0
    %614 = vmatpush.xpose.msra.mxu0 0.0
    %615 = vmatpush.xpose.msra.mxu0 0.0
    %616 = vmatpush.xpose.msra.mxu0 0.0
    %617 = vmatpush.xpose.msra.mxu0 0.0
    %618 = vmatpush.xpose.msra.mxu0 0.0
    %619 = vmatpush.xpose.msra.mxu0 0.0
    %620 = vmatpush.xpose.msra.mxu0 0.0
    %621 = vmatpush.xpose.msra.mxu0 %v604
    %622 = vmatmul.f32.gmra.mxu0 %v601
    %v623 = vpop.f32.mrf.mxu0
    %v624 = vadd.f32 %v348, %v623
    %625 = vdwg.mxu0
    %v626 = vsel %vm404, %v598, -inf
    %627 = vmax.xlane.f32.xlu0 %v626
    %v628 = vpop.xlane.xlu0 %627
    %v629 = vsel %vm404, %v624, -inf
    %630 = vmax.xlane.f32.xlu0 %v629
    %v631 = vpop.xlane.xlu0 %630
    %v632 = vsub.f32 %v598, %v628
    %v633 = vsub.f32 %v624, %v631
    %v634 = vmul.f32 %v632, 1.442695
    %v635 = vpow.pop %v634
    %v636 = vmul.f32 %v633, 1.442695
    %v637 = vpow.pop %v636
    %v638 = vsel %vm404, %v635, 0.0
    %639 = vadd.xlane.f32.xlu0 %v638
    %v640 = vpop.xlane.xlu0 %639
    %v641 = vsel %vm404, %v637, 0.0
    %642 = vadd.xlane.f32.xlu0 %v641
    %v643 = vpop.xlane.xlu0 %642
    %v644 = vrcp.pop %v640
    %v645 = vrcp.pop %v643
    %v646 = vmul.f32 %v635, %v644
    %v647 = vmul.f32 %v637, %v645
    %v649 = vsel %vm404, %v646, 0
    %651 = vmatpush.msra.mxu0 0.0
    %652 = vmatpush.msra.mxu0 0.0
    %653 = vmatpush.msra.mxu0 0.0
    %654 = vmatpush.msra.mxu0 0.0
    %655 = vmatpush.msra.mxu0 0.0
    %656 = vmatpush.msra.mxu0 0.0
    %657 = vmatpush.msra.mxu0 0.0
    %658 = vmatpush.msra.mxu0 0.0
    %659 = vmatpush.msra.mxu0 0.0
    %660 = vmatpush.msra.mxu0 0.0
    %661 = vmatpush.msra.mxu0 0.0
    %662 = vmatpush.msra.mxu0 0.0
    %663 = vmatpush.msra.mxu0 0.0
    %664 = vmatpush.msra.mxu0 0.0
    %665 = vmatpush.msra.mxu0 0.0
    %666 = vmatpush.msra.mxu0 %v569
    %667 = vmatmul.f32.gmra.mxu0 %v649
    %v668 = vpop.f32.mrf.mxu0
    %v669 = vadd.f32 0.0, %v668
    %670 = vdwg.mxu0
    %v672 = vsel %vm404, %v647, 0
    %674 = vmatpush.msra.mxu0 0.0
    %675 = vmatpush.msra.mxu0 0.0
    %676 = vmatpush.msra.mxu0 0.0
    %677 = vmatpush.msra.mxu0 0.0
    %678 = vmatpush.msra.mxu0 0.0
    %679 = vmatpush.msra.mxu0 0.0
    %680 = vmatpush.msra.mxu0 0.0
    %681 = vmatpush.msra.mxu0 0.0
    %682 = vmatpush.msra.mxu0 0.0
    %683 = vmatpush.msra.mxu0 0.0
    %684 = vmatpush.msra.mxu0 0.0
    %685 = vmatpush.msra.mxu0 0.0
    %686 = vmatpush.msra.mxu0 0.0
    %687 = vmatpush.msra.mxu0 0.0
    %688 = vmatpush.msra.mxu0 0.0
    %689 = vmatpush.msra.mxu0 %v572
    %690 = vmatmul.f32.gmra.mxu0 %v672
    %v691 = vpop.f32.mrf.mxu0
    %v692 = vadd.f32 0.0, %v691
    %693 = vdwg.mxu0
    %s694 = scalar_lea.vmem [#allocation4], 16
    %v695 = vld [vmem:[%s694] sm:$0xff]
    %v696 = vld [vmem:[%s694 + $0x8] sm:$0xff]
    %v698 = vsel %vm351, %v669, 0
    %v701 = vsel %vm351, %v692, 0
    %703 = vmatpush.msra.mxu0 0.0
    %704 = vmatpush.msra.mxu0 0.0
    %705 = vmatpush.msra.mxu0 0.0
    %706 = vmatpush.msra.mxu0 0.0
    %707 = vmatpush.msra.mxu0 0.0
    %708 = vmatpush.msra.mxu0 0.0
    %709 = vmatpush.msra.mxu0 0.0
    %710 = vmatpush.msra.mxu0 0.0
    %711 = vmatpush.msra.mxu0 0.0
    %712 = vmatpush.msra.mxu0 0.0
    %713 = vmatpush.msra.mxu0 0.0
    %714 = vmatpush.msra.mxu0 0.0
    %715 = vmatpush.msra.mxu0 0.0
    %716 = vmatpush.msra.mxu0 0.0
    %717 = vmatpush.msra.mxu0 %v696
    %718 = vmatpush.msra.mxu0 %v695
    %719 = vmatmul.f32.gmra.mxu0 %v698
    %v720 = vpop.f32.mrf.mxu0
    %v721 = vadd.f32 0.0, %v720
    %722 = vmatmul.f32.gmra.mxu0 %v701
    %v723 = vpop.f32.mrf.mxu0
    %v724 = vadd.f32 0.0, %v723
    %725 = vdwg.mxu0
    %v727 = vsel %vm351, %v448, 0
    %v730 = vsel %vm351, %v471, 0
    %732 = vmatpush.msra.mxu0 0.0
    %733 = vmatpush.msra.mxu0 0.0
    %734 = vmatpush.msra.mxu0 0.0
    %735 = vmatpush.msra.mxu0 0.0
    %736 = vmatpush.msra.mxu0 0.0
    %737 = vmatpush.msra.mxu0 0.0
    %738 = vmatpush.msra.mxu0 0.0
    %739 = vmatpush.msra.mxu0 0.0
    %740 = vmatpush.msra.mxu0 0.0
    %741 = vmatpush.msra.mxu0 0.0
    %742 = vmatpush.msra.mxu0 0.0
    %743 = vmatpush.msra.mxu0 0.0
    %744 = vmatpush.msra.mxu0 0.0
    %745 = vmatpush.msra.mxu0 0.0
    %746 = vmatpush.msra.mxu0 %v474
    %747 = vmatpush.msra.mxu0 %v473
    %748 = vmatmul.f32.gmra.mxu0 %v727
    %v749 = vpop.f32.mrf.mxu0
    %v750 = vadd.f32 %v721, %v749
    %751 = vmatmul.f32.gmra.mxu0 %v730
    %v752 = vpop.f32.mrf.mxu0
    %v753 = vadd.f32 %v724, %v752
    %754 = vdwg.mxu0
    %v755 = vld [vmem:[%s8 + $0x2] sm:$0x1]
    %v756 = vperm.slane %v755, 0
    %v757 = vadd.f32 %v750, %v756
    %v758 = vadd.f32 %v753, %v756
    %v759 = vadd.f32 %v757, %v238
    %v760 = vadd.f32 %v758, %v239
    %v761 = vld [vmem:[%s8 + $0x3] sm:$0x1]
    %v762 = vld [vmem:[%s8 + $0x4] sm:$0x1]
    %v763 = vsel %vm182, %v759, 0.0
    %764 = vadd.xlane.f32.xlu0 %v763
    %v765 = vpop.xlane.xlu0 %764
    %v766 = vsel %vm182, %v760, 0.0
    %767 = vadd.xlane.f32.xlu0 %v766
    %v768 = vpop.xlane.xlu0 %767
    %v769 = vmul.f32 %v765, %v195
    %v770 = vmul.f32 %v768, %v195
    %v771 = vsub.f32 %v759, %v769
    %v772 = vsub.f32 %v760, %v770
    %v773 = vmul.f32 %v771, %v771
    %v774 = vmul.f32 %v772, %v772
    %v775 = vsel %vm182, %v773, 0.0
    %776 = vadd.xlane.f32.xlu0 %v775
    %v777 = vpop.xlane.xlu0 %776
    %v778 = vsel %vm182, %v774, 0.0
    %779 = vadd.xlane.f32.xlu0 %v778
    %v780 = vpop.xlane.xlu0 %779
    %v781 = vmul.f32 %v777, %v195
    %v782 = vmul.f32 %v780, %v195
    %v783 = vadd.f32 %v781, 1e-12
    %v784 = vadd.f32 %v782, 1e-12
    %v785 = vrsqrt.pop %v783
    %v786 = vmul.f32 %v785, %v783
    %v787 = vmul.f32 %v786, %v785
    %v788 = vmul.f32 0.5, %v787
    %v789 = vsub.f32 1.5, %v788
    %v790 = vmul.f32 %v785, %v789
    %vm791 = vweird.f32 %v783
    %vm792 = vweird.f32 %v785
    %vm793 = vmor %vm791, %vm792
    %v794 = vsel %vm793, %v785, %v790
    %v795 = vrsqrt.pop %v784
    %v796 = vmul.f32 %v795, %v784
    %v797 = vmul.f32 %v796, %v795
    %v798 = vmul.f32 0.5, %v797
    %v799 = vsub.f32 1.5, %v798
    %v800 = vmul.f32 %v795, %v799
    %vm801 = vweird.f32 %v784
    %vm802 = vweird.f32 %v795
    %vm803 = vmor %vm801, %vm802
    %v804 = vsel %vm803, %v795, %v800
    %v805 = vmul.f32 %v771, %v794
    %v806 = vmul.f32 %v772, %v804
    %v807 = vperm.slane %v761, 0
    %v808 = vmul.f32 %v805, %v807
    %v809 = vmul.f32 %v806, %v807
    %v810 = vperm.slane %v762, 0
    %v811 = vadd.f32 %v808, %v810
    %v812 = vadd.f32 %v809, %v810
    %v813 = vld [vmem:[%s5] sm:$0xff]
    %v814 = vld [vmem:[%s5 + $0x8] sm:$0xff]
    %v815 = vld [vmem:[%s5 + $0x10] sm:$0xff]
    %v816 = vld [vmem:[%s5 + $0x18] sm:$0xff]
    %v817 = vld [vmem:[%s7] sm:$0x1]
    %v819 = vperm.slane %v817, 0
    %v822 = vsel %vm182, %v811, 0
    %v825 = vsel %vm182, %v812, 0
    %827 = vmatpush.msra.mxu0 0.0
    %828 = vmatpush.msra.mxu0 0.0
    %829 = vmatpush.msra.mxu0 0.0
    %830 = vmatpush.msra.mxu0 0.0
    %831 = vmatpush.msra.mxu0 0.0
    %832 = vmatpush.msra.mxu0 0.0
    %833 = vmatpush.msra.mxu0 0.0
    %834 = vmatpush.msra.mxu0 0.0
    %835 = vmatpush.msra.mxu0 0.0
    %836 = vmatpush.msra.mxu0 0.0
    %837 = vmatpush.msra.mxu0 0.0
    %838 = vmatpush.msra.mxu0 0.0
    %839 = vmatpush.msra.mxu0 %v816
    %840 = vmatpush.msra.mxu0 %v815
    %841 = vmatpush.msra.mxu0 %v814
    %842 = vmatpush.msra.mxu0 %v813
    %843 = vmatmul.f32.gmra.mxu0 %v822
    %v844 = vpop.f32.mrf.mxu0
    %v845 = vadd.f32 %v819, %v844
    %846 = vmatmul.f32.gmra.mxu0 %v825
    %v847 = vpop.f32.mrf.mxu0
    %v848 = vadd.f32 %v819, %v847
    %849 = vdwg.mxu0
    %v850 = vmul.f32 %v845, 0.5
    %v851 = vmul.f32 %v848, 0.5
    %v852 = vmul.f32 %v845, 0.044715
    %v853 = vmul.f32 %v848, 0.044715
    %v854 = vmul.f32 %v852, %v845
    %v855 = vmul.f32 %v853, %v848
    %v856 = vmul.f32 %v854, %v845
    %v857 = vmul.f32 %v855, %v848
    %v858 = vadd.f32 %v845, %v856
    %v859 = vadd.f32 %v848, %v857
    %v860 = vmul.f32 %v858, 0.7978846
    %v861 = vmul.f32 %v859, 0.7978846
    %v862 = vtanh.pop %v860
    %v863 = vtanh.pop %v861
    %v864 = vadd.f32 %v862, 1.0
    %v865 = vadd.f32 %v863, 1.0
    %v866 = vmul.f32 %v850, %v864
    %v867 = vmul.f32 %v851, %v865
    %v868 = vld [vmem:[#allocation6] sm:$0xff]
    %v869 = vld [vmem:[#allocation6 + $0x8] sm:$0xff]
    %v870 = vld [vmem:[#allocation6 + $0x10] sm:$0xff]
    %v871 = vld [vmem:[#allocation6 + $0x18] sm:$0xff]
    %v872 = vld [vmem:[#allocation6 + $0x20] sm:$0xff]
    %v873 = vld [vmem:[#allocation6 + $0x28] sm:$0xff]
    %v874 = vld [vmem:[#allocation6 + $0x30] sm:$0xff]
    %v875 = vld [vmem:[#allocation6 + $0x38] sm:$0xff]
    %v876 = vld [vmem:[%s8 + $0x5] sm:$0x1]
    %v877 = vperm.slane %v876, 0
    %vm878 = vcmask 523264
    %v880 = vsel %vm878, %v866, 0
    %v883 = vsel %vm878, %v867, 0
    %885 = vmatpush.msra.mxu0 0.0
    %886 = vmatpush.msra.mxu0 0.0
    %887 = vmatpush.msra.mxu0 0.0
    %888 = vmatpush.msra.mxu0 0.0
    %889 = vmatpush.msra.mxu0 0.0
    %890 = vmatpush.msra.mxu0 0.0
    %891 = vmatpush.msra.mxu0 0.0
    %892 = vmatpush.msra.mxu0 0.0
    %893 = vmatpush.msra.mxu0 %v875
    %894 = vmatpush.msra.mxu0 %v874
    %895 = vmatpush.msra.mxu0 %v873
    %896 = vmatpush.msra.mxu0 %v872
    %897 = vmatpush.msra.mxu0 %v871
    %898 = vmatpush.msra.mxu0 %v870
    %899 = vmatpush.msra.mxu0 %v869
    %900 = vmatpush.msra.mxu0 %v868
    %901 = vmatmul.f32.gmra.mxu0 %v880
    %v902 = vpop.f32.mrf.mxu0
    %v903 = vadd.f32 %v877, %v902
    %904 = vmatmul.f32.gmra.mxu0 %v883
    %v905 = vpop.f32.mrf.mxu0
    %v906 = vadd.f32 %v877, %v905
    %907 = vdwg.mxu0
    %v908 = vadd.f32 %v903, %v811
    %v909 = vadd.f32 %v906, %v812
    %v910 = vld [vmem:[%s8 + $0x6] sm:$0x1]
    %v911 = vld [vmem:[%s8 + $0x7] sm:$0x1]
    %v912 = vsel %vm182, %v908, 0.0
    %913 = vadd.xlane.f32.xlu0 %v912
    %v914 = vpop.xlane.xlu0 %913
    %v915 = vsel %vm182, %v909, 0.0
    %916 = vadd.xlane.f32.xlu0 %v915
    %v917 = vpop.xlane.xlu0 %916
    %v918 = vmul.f32 %v914, %v195
    %v919 = vmul.f32 %v917, %v195
    %v920 = vsub.f32 %v908, %v918
    %v921 = vsub.f32 %v909, %v919
    %v922 = vmul.f32 %v920, %v920
    %v923 = vmul.f32 %v921, %v921
    %v924 = vsel %vm182, %v922, 0.0
    %925 = vadd.xlane.f32.xlu0 %v924
    %v926 = vpop.xlane.xlu0 %925
    %v927 = vsel %vm182, %v923, 0.0
    %928 = vadd.xlane.f32.xlu0 %v927
    %v929 = vpop.xlane.xlu0 %928
    %v930 = vmul.f32 %v926, %v195
    %v931 = vmul.f32 %v929, %v195
    %v932 = vadd.f32 %v930, 1e-12
    %v933 = vadd.f32 %v931, 1e-12
    %v934 = vrsqrt.pop %v932
    %v935 = vmul.f32 %v934, %v932
    %v936 = vmul.f32 %v935, %v934
    %v937 = vmul.f32 0.5, %v936
    %v938 = vsub.f32 1.5, %v937
    %v939 = vmul.f32 %v934, %v938
    %vm940 = vweird.f32 %v932
    %vm941 = vweird.f32 %v934
    %vm942 = vmor %vm940, %vm941
    %v943 = vsel %vm942, %v934, %v939
    %v944 = vrsqrt.pop %v933
    %v945 = vmul.f32 %v944, %v933
    %v946 = vmul.f32 %v945, %v944
    %v947 = vmul.f32 0.5, %v946
    %v948 = vsub.f32 1.5, %v947
    %v949 = vmul.f32 %v944, %v948
    %vm950 = vweird.f32 %v933
    %vm951 = vweird.f32 %v944
    %vm952 = vmor %vm950, %vm951
    %v953 = vsel %vm952, %v944, %v949
    %v954 = vmul.f32 %v920, %v943
    %v955 = vmul.f32 %v921, %v953
    %v956 = vperm.slane %v910, 0
    %v957 = vmul.f32 %v954, %v956
    %v958 = vmul.f32 %v955, %v956
    %v959 = vperm.slane %v911, 0
    %v960 = vadd.f32 %v957, %v959
    %v961 = vadd.f32 %v958, %v959
    %s962 = scalar_lea.vmem [#allocation2], 64
    %v963 = vld [vmem:[%s962] sm:$0xff]
    %v964 = vld [vmem:[%s962 + $0x8] sm:$0xff]
    %v965 = vld [vmem:[%s962 + $0x10] sm:$0xff]
    %v966 = vld [vmem:[%s962 + $0x18] sm:$0xff]
    %s967 = scalar_lea.vmem %s3, 2
    %v968 = vld [vmem:[%s967] sm:$0x1]
    %v970 = vperm.slane %v968, 0
    %v973 = vsel %vm182, %v960, 0
    %v976 = vsel %vm182, %v961, 0
    %978 = vmatpush.msra.mxu0 0.0
    %979 = vmatpush.msra.mxu0 0.0
    %980 = vmatpush.msra.mxu0 0.0
    %981 = vmatpush.msra.mxu0 0.0
    %982 = vmatpush.msra.mxu0 0.0
    %983 = vmatpush.msra.mxu0 0.0
    %984 = vmatpush.msra.mxu0 0.0
    %985 = vmatpush.msra.mxu0 0.0
    %986 = vmatpush.msra.mxu0 0.0
    %987 = vmatpush.msra.mxu0 0.0
    %988 = vmatpush.msra.mxu0 0.0
    %989 = vmatpush.msra.mxu0 0.0
    %990 = vmatpush.msra.mxu0 %v966
    %991 = vmatpush.msra.mxu0 %v965
    %992 = vmatpush.msra.mxu0 %v964
    %993 = vmatpush.msra.mxu0 %v963
    %994 = vmatmul.f32.gmra.mxu0 %v973
    %v995 = vpop.f32.mrf.mxu0
    %v996 = vadd.f32 %v970, %v995
    %997 = vmatmul.f32.gmra.mxu0 %v976
    %v998 = vpop.f32.mrf.mxu0
    %v999 = vadd.f32 %v970, %v998
    %1000 = vdwg.mxu0
    %s1001 = scalar_lea.vmem [#allocation2], 192
    %v1002 = vld [vmem:[%s1001] sm:$0xff]
    %v1003 = vld [vmem:[%s1001 + $0x8] sm:$0xff]
    %v1004 = vld [vmem:[%s1001 + $0x10] sm:$0xff]
    %v1005 = vld [vmem:[%s1001 + $0x18] sm:$0xff]
    %s1006 = scalar_lea.vmem %s3, 6
    %v1007 = vld [vmem:[%s1006] sm:$0x1]
    %v1009 = vperm.slane %v1007, 0
    %1011 = vmatpush.msra.mxu0 0.0
    %1012 = vmatpush.msra.mxu0 0.0
    %1013 = vmatpush.msra.mxu0 0.0
    %1014 = vmatpush.msra.mxu0 0.0
    %1015 = vmatpush.msra.mxu0 0.0
    %1016 = vmatpush.msra.mxu0 0.0
    %1017 = vmatpush.msra.mxu0 0.0
    %1018 = vmatpush.msra.mxu0 0.0
    %1019 = vmatpush.msra.mxu0 0.0
    %1020 = vmatpush.msra.mxu0 0.0
    %1021 = vmatpush.msra.mxu0 0.0
    %1022 = vmatpush.msra.mxu0 0.0
    %1023 = vmatpush.msra.mxu0 %v1005
    %1024 = vmatpush.msra.mxu0 %v1004
    %1025 = vmatpush.msra.mxu0 %v1003
    %1026 = vmatpush.msra.mxu0 %v1002
    %1027 = vmatmul.f32.gmra.mxu0 %v973
    %v1028 = vpop.f32.mrf.mxu0
    %v1029 = vadd.f32 %v1009, %v1028
    %1030 = vmatmul.f32.gmra.mxu0 %v976
    %v1031 = vpop.f32.mrf.mxu0
    %v1032 = vadd.f32 %v1009, %v1031
    %1033 = vdwg.mxu0
    %s1034 = scalar_lea.vmem [#allocation2], 320
    %v1035 = vld [vmem:[%s1034] sm:$0xff]
    %v1036 = vld [vmem:[%s1034 + $0x8] sm:$0xff]
    %v1037 = vld [vmem:[%s1034 + $0x10] sm:$0xff]
    %v1038 = vld [vmem:[%s1034 + $0x18] sm:$0xff]
    %s1039 = scalar_lea.vmem %s3, 10
    %v1040 = vld [vmem:[%s1039] sm:$0x1]
    %v1042 = vperm.slane %v1040, 0
    %1044 = vmatpush.msra.mxu0 0.0
    %1045 = vmatpush.msra.mxu0 0.0
    %1046 = vmatpush.msra.mxu0 0.0
    %1047 = vmatpush.msra.mxu0 0.0
    %1048 = vmatpush.msra.mxu0 0.0
    %1049 = vmatpush.msra.mxu0 0.0
    %1050 = vmatpush.msra.mxu0 0.0
    %1051 = vmatpush.msra.mxu0 0.0
    %1052 = vmatpush.msra.mxu0 0.0
    %1053 = vmatpush.msra.mxu0 0.0
    %1054 = vmatpush.msra.mxu0 0.0
    %1055 = vmatpush.msra.mxu0 0.0
    %1056 = vmatpush.msra.mxu0 %v1038
    %1057 = vmatpush.msra.mxu0 %v1037
    %1058 = vmatpush.msra.mxu0 %v1036
    %1059 = vmatpush.msra.mxu0 %v1035
    %1060 = vmatmul.f32.gmra.mxu0 %v973
    %v1061 = vpop.f32.mrf.mxu0
    %v1062 = vadd.f32 %v1042, %v1061
    %1063 = vmatmul.f32.gmra.mxu0 %v976
    %v1064 = vpop.f32.mrf.mxu0
    %v1065 = vadd.f32 %v1042, %v1064
    %1066 = vdwg.mxu0
    %v1068 = vsel %vm351, %v996, 0
    %v1071 = vsel %vm351, %v1029, 0
    %1073 = vmatpush.xpose.msra.mxu0 0.0
    %1074 = vmatpush.xpose.msra.mxu0 0.0
    %1075 = vmatpush.xpose.msra.mxu0 0.0
    %1076 = vmatpush.xpose.msra.mxu0 0.0
    %1077 = vmatpush.xpose.msra.mxu0 0.0
    %1078 = vmatpush.xpose.msra.mxu0 0.0
    %1079 = vmatpush.xpose.msra.mxu0 0.0
    %1080 = vmatpush.xpose.msra.mxu0 0.0
    %1081 = vmatpush.xpose.msra.mxu0 0.0
    %1082 = vmatpush.xpose.msra.mxu0 0.0
    %1083 = vmatpush.xpose.msra.mxu0 0.0
    %1084 = vmatpush.xpose.msra.mxu0 0.0
    %1085 = vmatpush.xpose.msra.mxu0 0.0
    %1086 = vmatpush.xpose.msra.mxu0 0.0
    %1087 = vmatpush.xpose.msra.mxu0 0.0
    %1088 = vmatpush.xpose.msra.mxu0 %v1071
    %1089 = vmatmul.f32.gmra.mxu0 %v1068
    %v1090 = vpop.f32.mrf.mxu0
    %v1091 = vadd.f32 %v347, %v1090
    %1092 = vdwg.mxu0
    %v1094 = vsel %vm351, %v999, 0
    %v1097 = vsel %vm351, %v1032, 0
    %1099 = vmatpush.xpose.msra.mxu0 0.0
    %1100 = vmatpush.xpose.msra.mxu0 0.0
    %1101 = vmatpush.xpose.msra.mxu0 0.0
    %1102 = vmatpush.xpose.msra.mxu0 0.0
    %1103 = vmatpush.xpose.msra.mxu0 0.0
    %1104 = vmatpush.xpose.msra.mxu0 0.0
    %1105 = vmatpush.xpose.msra.mxu0 0.0
    %1106 = vmatpush.xpose.msra.mxu0 0.0
    %1107 = vmatpush.xpose.msra.mxu0 0.0
    %1108 = vmatpush.xpose.msra.mxu0 0.0
    %1109 = vmatpush.xpose.msra.mxu0 0.0
    %1110 = vmatpush.xpose.msra.mxu0 0.0
    %1111 = vmatpush.xpose.msra.mxu0 0.0
    %1112 = vmatpush.xpose.msra.mxu0 0.0
    %1113 = vmatpush.xpose.msra.mxu0 0.0
    %1114 = vmatpush.xpose.msra.mxu0 %v1097
    %1115 = vmatmul.f32.gmra.mxu0 %v1094
    %v1116 = vpop.f32.mrf.mxu0
    %v1117 = vadd.f32 %v348, %v1116
    %1118 = vdwg.mxu0
    %v1119 = vsel %vm404, %v1091, -inf
    %1120 = vmax.xlane.f32.xlu0 %v1119
    %v1121 = vpop.xlane.xlu0 %1120
    %v1122 = vsel %vm404, %v1117, -inf
    %1123 = vmax.xlane.f32.xlu0 %v1122
    %v1124 = vpop.xlane.xlu0 %1123
    %v1125 = vsub.f32 %v1091, %v1121
    %v1126 = vsub.f32 %v1117, %v1124
    %v1127 = vmul.f32 %v1125, 1.442695
    %v1128 = vpow.pop %v1127
    %v1129 = vmul.f32 %v1126, 1.442695
    %v1130 = vpow.pop %v1129
    %v1131 = vsel %vm404, %v1128, 0.0
    %1132 = vadd.xlane.f32.xlu0 %v1131
    %v1133 = vpop.xlane.xlu0 %1132
    %v1134 = vsel %vm404, %v1130, 0.0
    %1135 = vadd.xlane.f32.xlu0 %v1134
    %v1136 = vpop.xlane.xlu0 %1135
    %v1137 = vrcp.pop %v1133
    %v1138 = vrcp.pop %v1136
    %v1139 = vmul.f32 %v1128, %v1137
    %v1140 = vmul.f32 %v1130, %v1138
    %v1142 = vsel %vm404, %v1139, 0
    %1144 = vmatpush.msra.mxu0 0.0
    %1145 = vmatpush.msra.mxu0 0.0
    %1146 = vmatpush.msra.mxu0 0.0
    %1147 = vmatpush.msra.mxu0 0.0
    %1148 = vmatpush.msra.mxu0 0.0
    %1149 = vmatpush.msra.mxu0 0.0
    %1150 = vmatpush.msra.mxu0 0.0
    %1151 = vmatpush.msra.mxu0 0.0
    %1152 = vmatpush.msra.mxu0 0.0
    %1153 = vmatpush.msra.mxu0 0.0
    %1154 = vmatpush.msra.mxu0 0.0
    %1155 = vmatpush.msra.mxu0 0.0
    %1156 = vmatpush.msra.mxu0 0.0
    %1157 = vmatpush.msra.mxu0 0.0
    %1158 = vmatpush.msra.mxu0 0.0
    %1159 = vmatpush.msra.mxu0 %v1062
    %1160 = vmatmul.f32.gmra.mxu0 %v1142
    %v1161 = vpop.f32.mrf.mxu0
    %v1162 = vadd.f32 0.0, %v1161
    %1163 = vdwg.mxu0
    %v1165 = vsel %vm404, %v1140, 0
    %1167 = vmatpush.msra.mxu0 0.0
    %1168 = vmatpush.msra.mxu0 0.0
    %1169 = vmatpush.msra.mxu0 0.0
    %1170 = vmatpush.msra.mxu0 0.0
    %1171 = vmatpush.msra.mxu0 0.0
    %1172 = vmatpush.msra.mxu0 0.0
    %1173 = vmatpush.msra.mxu0 0.0
    %1174 = vmatpush.msra.mxu0 0.0
    %1175 = vmatpush.msra.mxu0 0.0
    %1176 = vmatpush.msra.mxu0 0.0
    %1177 = vmatpush.msra.mxu0 0.0
    %1178 = vmatpush.msra.mxu0 0.0
    %1179 = vmatpush.msra.mxu0 0.0
    %1180 = vmatpush.msra.mxu0 0.0
    %1181 = vmatpush.msra.mxu0 0.0
    %1182 = vmatpush.msra.mxu0 %v1065
    %1183 = vmatmul.f32.gmra.mxu0 %v1165
    %v1184 = vpop.f32.mrf.mxu0
    %v1185 = vadd.f32 0.0, %v1184
    %1186 = vdwg.mxu0
    %s1187 = scalar_lea.vmem [#allocation4], 32
    %v1188 = vld [vmem:[%s1187] sm:$0xff]
    %v1189 = vld [vmem:[%s1187 + $0x8] sm:$0xff]
    %s1190 = scalar_lea.vmem [#allocation2], 96
    %v1191 = vld [vmem:[%s1190] sm:$0xff]
    %v1192 = vld [vmem:[%s1190 + $0x8] sm:$0xff]
    %v1193 = vld [vmem:[%s1190 + $0x10] sm:$0xff]
    %v1194 = vld [vmem:[%s1190 + $0x18] sm:$0xff]
    %s1195 = scalar_lea.vmem %s3, 3
    %v1196 = vld [vmem:[%s1195] sm:$0x1]
    %v1198 = vperm.slane %v1196, 0
    %1200 = vmatpush.msra.mxu0 0.0
    %1201 = vmatpush.msra.mxu0 0.0
    %1202 = vmatpush.msra.mxu0 0.0
    %1203 = vmatpush.msra.mxu0 0.0
    %1204 = vmatpush.msra.mxu0 0.0
    %1205 = vmatpush.msra.mxu0 0.0
    %1206 = vmatpush.msra.mxu0 0.0
    %1207 = vmatpush.msra.mxu0 0.0
    %1208 = vmatpush.msra.mxu0 0.0
    %1209 = vmatpush.msra.mxu0 0.0
    %1210 = vmatpush.msra.mxu0 0.0
    %1211 = vmatpush.msra.mxu0 0.0
    %1212 = vmatpush.msra.mxu0 %v1194
    %1213 = vmatpush.msra.mxu0 %v1193
    %1214 = vmatpush.msra.mxu0 %v1192
    %1215 = vmatpush.msra.mxu0 %v1191
    %1216 = vmatmul.f32.gmra.mxu0 %v973
    %v1217 = vpop.f32.mrf.mxu0
    %v1218 = vadd.f32 %v1198, %v1217
    %1219 = vmatmul.f32.gmra.mxu0 %v976
    %v1220 = vpop.f32.mrf.mxu0
    %v1221 = vadd.f32 %v1198, %v1220
    %1222 = vdwg.mxu0
    %s1223 = scalar_lea.vmem [#allocation2], 224
    %v1224 = vld [vmem:[%s1223] sm:$0xff]
    %v1225 = vld [vmem:[%s1223 + $0x8] sm:$0xff]
    %v1226 = vld [vmem:[%s1223 + $0x10] sm:$0xff]
    %v1227 = vld [vmem:[%s1223 + $0x18] sm:$0xff]
    %s1228 = scalar_lea.vmem %s3, 7
    %v1229 = vld [vmem:[%s1228] sm:$0x1]
    %v1231 = vperm.slane %v1229, 0
    %1233 = vmatpush.msra.mxu0 0.0
    %1234 = vmatpush.msra.mxu0 0.0
    %1235 = vmatpush.msra.mxu0 0.0
    %1236 = vmatpush.msra.mxu0 0.0
    %1237 = vmatpush.msra.mxu0 0.0
    %1238 = vmatpush.msra.mxu0 0.0
    %1239 = vmatpush.msra.mxu0 0.0
    %1240 = vmatpush.msra.mxu0 0.0
    %1241 = vmatpush.msra.mxu0 0.0
    %1242 = vmatpush.msra.mxu0 0.0
    %1243 = vmatpush.msra.mxu0 0.0
    %1244 = vmatpush.msra.mxu0 0.0
    %1245 = vmatpush.msra.mxu0 %v1227
    %1246 = vmatpush.msra.mxu0 %v1226
    %1247 = vmatpush.msra.mxu0 %v1225
    %1248 = vmatpush.msra.mxu0 %v1224
    %1249 = vmatmul.f32.gmra.mxu0 %v973
    %v1250 = vpop.f32.mrf.mxu0
    %v1251 = vadd.f32 %v1231, %v1250
    %1252 = vmatmul.f32.gmra.mxu0 %v976
    %v1253 = vpop.f32.mrf.mxu0
    %v1254 = vadd.f32 %v1231, %v1253
    %1255 = vdwg.mxu0
    %s1256 = scalar_lea.vmem [#allocation2], 352
    %v1257 = vld [vmem:[%s1256] sm:$0xff]
    %v1258 = vld [vmem:[%s1256 + $0x8] sm:$0xff]
    %v1259 = vld [vmem:[%s1256 + $0x10] sm:$0xff]
    %v1260 = vld [vmem:[%s1256 + $0x18] sm:$0xff]
    %s1261 = scalar_lea.vmem %s3, 11
    %v1262 = vld [vmem:[%s1261] sm:$0x1]
    %v1264 = vperm.slane %v1262, 0
    %1266 = vmatpush.msra.mxu0 0.0
    %1267 = vmatpush.msra.mxu0 0.0
    %1268 = vmatpush.msra.mxu0 0.0
    %1269 = vmatpush.msra.mxu0 0.0
    %1270 = vmatpush.msra.mxu0 0.0
    %1271 = vmatpush.msra.mxu0 0.0
    %1272 = vmatpush.msra.mxu0 0.0
    %1273 = vmatpush.msra.mxu0 0.0
    %1274 = vmatpush.msra.mxu0 0.0
    %1275 = vmatpush.msra.mxu0 0.0
    %1276 = vmatpush.msra.mxu0 0.0
    %1277 = vmatpush.msra.mxu0 0.0
    %1278 = vmatpush.msra.mxu0 %v1260
    %1279 = vmatpush.msra.mxu0 %v1259
    %1280 = vmatpush.msra.mxu0 %v1258
    %1281 = vmatpush.msra.mxu0 %v1257
    %1282 = vmatmul.f32.gmra.mxu0 %v973
    %v1283 = vpop.f32.mrf.mxu0
    %v1284 = vadd.f32 %v1264, %v1283
    %1285 = vmatmul.f32.gmra.mxu0 %v976
    %v1286 = vpop.f32.mrf.mxu0
    %v1287 = vadd.f32 %v1264, %v1286
    %1288 = vdwg.mxu0
    %v1290 = vsel %vm351, %v1218, 0
    %v1293 = vsel %vm351, %v1251, 0
    %1295 = vmatpush.xpose.msra.mxu0 0.0
    %1296 = vmatpush.xpose.msra.mxu0 0.0
    %1297 = vmatpush.xpose.msra.mxu0 0.0
    %1298 = vmatpush.xpose.msra.mxu0 0.0
    %1299 = vmatpush.xpose.msra.mxu0 0.0
    %1300 = vmatpush.xpose.msra.mxu0 0.0
    %1301 = vmatpush.xpose.msra.mxu0 0.0
    %1302 = vmatpush.xpose.msra.mxu0 0.0
    %1303 = vmatpush.xpose.msra.mxu0 0.0
    %1304 = vmatpush.xpose.msra.mxu0 0.0
    %1305 = vmatpush.xpose.msra.mxu0 0.0
    %1306 = vmatpush.xpose.msra.mxu0 0.0
    %1307 = vmatpush.xpose.msra.mxu0 0.0
    %1308 = vmatpush.xpose.msra.mxu0 0.0
    %1309 = vmatpush.xpose.msra.mxu0 0.0
    %1310 = vmatpush.xpose.msra.mxu0 %v1293
    %1311 = vmatmul.f32.gmra.mxu0 %v1290
    %v1312 = vpop.f32.mrf.mxu0
    %v1313 = vadd.f32 %v347, %v1312
    %1314 = vdwg.mxu0
    %v1316 = vsel %vm351, %v1221, 0
    %v1319 = vsel %vm351, %v1254, 0
    %1321 = vmatpush.xpose.msra.mxu0 0.0
    %1322 = vmatpush.xpose.msra.mxu0 0.0
    %1323 = vmatpush.xpose.msra.mxu0 0.0
    %1324 = vmatpush.xpose.msra.mxu0 0.0
    %1325 = vmatpush.xpose.msra.mxu0 0.0
    %1326 = vmatpush.xpose.msra.mxu0 0.0
    %1327 = vmatpush.xpose.msra.mxu0 0.0
    %1328 = vmatpush.xpose.msra.mxu0 0.0
    %1329 = vmatpush.xpose.msra.mxu0 0.0
    %1330 = vmatpush.xpose.msra.mxu0 0.0
    %1331 = vmatpush.xpose.msra.mxu0 0.0
    %1332 = vmatpush.xpose.msra.mxu0 0.0
    %1333 = vmatpush.xpose.msra.mxu0 0.0
    %1334 = vmatpush.xpose.msra.mxu0 0.0
    %1335 = vmatpush.xpose.msra.mxu0 0.0
    %1336 = vmatpush.xpose.msra.mxu0 %v1319
    %1337 = vmatmul.f32.gmra.mxu0 %v1316
    %v1338 = vpop.f32.mrf.mxu0
    %v1339 = vadd.f32 %v348, %v1338
    %1340 = vdwg.mxu0
    %v1341 = vsel %vm404, %v1313, -inf
    %1342 = vmax.xlane.f32.xlu0 %v1341
    %v1343 = vpop.xlane.xlu0 %1342
    %v1344 = vsel %vm404, %v1339, -inf
    %1345 = vmax.xlane.f32.xlu0 %v1344
    %v1346 = vpop.xlane.xlu0 %1345
    %v1347 = vsub.f32 %v1313, %v1343
    %v1348 = vsub.f32 %v1339, %v1346
    %v1349 = vmul.f32 %v1347, 1.442695
    %v1350 = vpow.pop %v1349
    %v1351 = vmul.f32 %v1348, 1.442695
    %v1352 = vpow.pop %v1351
    %v1353 = vsel %vm404, %v1350, 0.0
    %1354 = vadd.xlane.f32.xlu0 %v1353
    %v1355 = vpop.xlane.xlu0 %1354
    %v1356 = vsel %vm404, %v1352, 0.0
    %1357 = vadd.xlane.f32.xlu0 %v1356
    %v1358 = vpop.xlane.xlu0 %1357
    %v1359 = vrcp.pop %v1355
    %v1360 = vrcp.pop %v1358
    %v1361 = vmul.f32 %v1350, %v1359
    %v1362 = vmul.f32 %v1352, %v1360
    %v1364 = vsel %vm404, %v1361, 0
    %1366 = vmatpush.msra.mxu0 0.0
    %1367 = vmatpush.msra.mxu0 0.0
    %1368 = vmatpush.msra.mxu0 0.0
    %1369 = vmatpush.msra.mxu0 0.0
    %1370 = vmatpush.msra.mxu0 0.0
    %1371 = vmatpush.msra.mxu0 0.0
    %1372 = vmatpush.msra.mxu0 0.0
    %1373 = vmatpush.msra.mxu0 0.0
    %1374 = vmatpush.msra.mxu0 0.0
    %1375 = vmatpush.msra.mxu0 0.0
    %1376 = vmatpush.msra.mxu0 0.0
    %1377 = vmatpush.msra.mxu0 0.0
    %1378 = vmatpush.msra.mxu0 0.0
    %1379 = vmatpush.msra.mxu0 0.0
    %1380 = vmatpush.msra.mxu0 0.0
    %1381 = vmatpush.msra.mxu0 %v1284
    %1382 = vmatmul.f32.gmra.mxu0 %v1364
    %v1383 = vpop.f32.mrf.mxu0
    %v1384 = vadd.f32 0.0, %v1383
    %1385 = vdwg.mxu0
    %v1387 = vsel %vm404, %v1362, 0
    %1389 = vmatpush.msra.mxu0 0.0
    %1390 = vmatpush.msra.mxu0 0.0
    %1391 = vmatpush.msra.mxu0 0.0
    %1392 = vmatpush.msra.mxu0 0.0
    %1393 = vmatpush.msra.mxu0 0.0
    %1394 = vmatpush.msra.mxu0 0.0
    %1395 = vmatpush.msra.mxu0 0.0
    %1396 = vmatpush.msra.mxu0 0.0
    %1397 = vmatpush.msra.mxu0 0.0
    %1398 = vmatpush.msra.mxu0 0.0
    %1399 = vmatpush.msra.mxu0 0.0
    %1400 = vmatpush.msra.mxu0 0.0
    %1401 = vmatpush.msra.mxu0 0.0
    %1402 = vmatpush.msra.mxu0 0.0
    %1403 = vmatpush.msra.mxu0 0.0
    %1404 = vmatpush.msra.mxu0 %v1287
    %1405 = vmatmul.f32.gmra.mxu0 %v1387
    %v1406 = vpop.f32.mrf.mxu0
    %v1407 = vadd.f32 0.0, %v1406
    %1408 = vdwg.mxu0
    %s1409 = scalar_lea.vmem [#allocation4], 48
    %v1410 = vld [vmem:[%s1409] sm:$0xff]
    %v1411 = vld [vmem:[%s1409 + $0x8] sm:$0xff]
    %v1413 = vsel %vm351, %v1384, 0
    %v1416 = vsel %vm351, %v1407, 0
    %1418 = vmatpush.msra.mxu0 0.0
    %1419 = vmatpush.msra.mxu0 0.0
    %1420 = vmatpush.msra.mxu0 0.0
    %1421 = vmatpush.msra.mxu0 0.0
    %1422 = vmatpush.msra.mxu0 0.0
    %1423 = vmatpush.msra.mxu0 0.0
    %1424 = vmatpush.msra.mxu0 0.0
    %1425 = vmatpush.msra.mxu0 0.0
    %1426 = vmatpush.msra.mxu0 0.0
    %1427 = vmatpush.msra.mxu0 0.0
    %1428 = vmatpush.msra.mxu0 0.0
    %1429 = vmatpush.msra.mxu0 0.0
    %1430 = vmatpush.msra.mxu0 0.0
    %1431 = vmatpush.msra.mxu0 0.0
    %1432 = vmatpush.msra.mxu0 %v1411
    %1433 = vmatpush.msra.mxu0 %v1410
    %1434 = vmatmul.f32.gmra.mxu0 %v1413
    %v1435 = vpop.f32.mrf.mxu0
    %v1436 = vadd.f32 0.0, %v1435
    %1437 = vmatmul.f32.gmra.mxu0 %v1416
    %v1438 = vpop.f32.mrf.mxu0
    %v1439 = vadd.f32 0.0, %v1438
    %1440 = vdwg.mxu0
    %v1442 = vsel %vm351, %v1162, 0
    %v1445 = vsel %vm351, %v1185, 0
    %1447 = vmatpush.msra.mxu0 0.0
    %1448 = vmatpush.msra.mxu0 0.0
    %1449 = vmatpush.msra.mxu0 0.0
    %1450 = vmatpush.msra.mxu0 0.0
    %1451 = vmatpush.msra.mxu0 0.0
    %1452 = vmatpush.msra.mxu0 0.0
    %1453 = vmatpush.msra.mxu0 0.0
    %1454 = vmatpush.msra.mxu0 0.0
    %1455 = vmatpush.msra.mxu0 0.0
    %1456 = vmatpush.msra.mxu0 0.0
    %1457 = vmatpush.msra.mxu0 0.0
    %1458 = vmatpush.msra.mxu0 0.0
    %1459 = vmatpush.msra.mxu0 0.0
    %1460 = vmatpush.msra.mxu0 0.0
    %1461 = vmatpush.msra.mxu0 %v1189
    %1462 = vmatpush.msra.mxu0 %v1188
    %1463 = vmatmul.f32.gmra.mxu0 %v1442
    %v1464 = vpop.f32.mrf.mxu0
    %v1465 = vadd.f32 %v1436, %v1464
    %1466 = vmatmul.f32.gmra.mxu0 %v1445
    %v1467 = vpop.f32.mrf.mxu0
    %v1468 = vadd.f32 %v1439, %v1467
    %1469 = vdwg.mxu0
    %v1470 = vld [vmem:[%s8 + $0x8] sm:$0x1]
    %v1471 = vperm.slane %v1470, 0
    %v1472 = vadd.f32 %v1465, %v1471
    %v1473 = vadd.f32 %v1468, %v1471
    %v1474 = vadd.f32 %v1472, %v960
    %v1475 = vadd.f32 %v1473, %v961
    %v1476 = vld [vmem:[%s8 + $0x9] sm:$0x1]
    %v1477 = vld [vmem:[%s8 + $0xa] sm:$0x1]
    %v1478 = vsel %vm182, %v1474, 0.0
    %1479 = vadd.xlane.f32.xlu0 %v1478
    %v1480 = vpop.xlane.xlu0 %1479
    %v1481 = vsel %vm182, %v1475, 0.0
    %1482 = vadd.xlane.f32.xlu0 %v1481
    %v1483 = vpop.xlane.xlu0 %1482
    %v1484 = vmul.f32 %v1480, %v195
    %v1485 = vmul.f32 %v1483, %v195
    %v1486 = vsub.f32 %v1474, %v1484
    %v1487 = vsub.f32 %v1475, %v1485
    %v1488 = vmul.f32 %v1486, %v1486
    %v1489 = vmul.f32 %v1487, %v1487
    %v1490 = vsel %vm182, %v1488, 0.0
    %1491 = vadd.xlane.f32.xlu0 %v1490
    %v1492 = vpop.xlane.xlu0 %1491
    %v1493 = vsel %vm182, %v1489, 0.0
    %1494 = vadd.xlane.f32.xlu0 %v1493
    %v1495 = vpop.xlane.xlu0 %1494
    %v1496 = vmul.f32 %v1492, %v195
    %v1497 = vmul.f32 %v1495, %v195
    %v1498 = vadd.f32 %v1496, 1e-12
    %v1499 = vadd.f32 %v1497, 1e-12
    %v1500 = vrsqrt.pop %v1498
    %v1501 = vmul.f32 %v1500, %v1498
    %v1502 = vmul.f32 %v1501, %v1500
    %v1503 = vmul.f32 0.5, %v1502
    %v1504 = vsub.f32 1.5, %v1503
    %v1505 = vmul.f32 %v1500, %v1504
    %vm1506 = vweird.f32 %v1498
    %vm1507 = vweird.f32 %v1500
    %vm1508 = vmor %vm1506, %vm1507
    %v1509 = vsel %vm1508, %v1500, %v1505
    %v1510 = vrsqrt.pop %v1499
    %v1511 = vmul.f32 %v1510, %v1499
    %v1512 = vmul.f32 %v1511, %v1510
    %v1513 = vmul.f32 0.5, %v1512
    %v1514 = vsub.f32 1.5, %v1513
    %v1515 = vmul.f32 %v1510, %v1514
    %vm1516 = vweird.f32 %v1499
    %vm1517 = vweird.f32 %v1510
    %vm1518 = vmor %vm1516, %vm1517
    %v1519 = vsel %vm1518, %v1510, %v1515
    %v1520 = vmul.f32 %v1486, %v1509
    %v1521 = vmul.f32 %v1487, %v1519
    %v1522 = vperm.slane %v1476, 0
    %v1523 = vmul.f32 %v1520, %v1522
    %v1524 = vmul.f32 %v1521, %v1522
    %v1525 = vperm.slane %v1477, 0
    %v1526 = vadd.f32 %v1523, %v1525
    %v1527 = vadd.f32 %v1524, %v1525
    %s1528 = scalar_lea.vmem %s5, 32
    %v1529 = vld [vmem:[%s1528] sm:$0xff]
    %v1530 = vld [vmem:[%s1528 + $0x8] sm:$0xff]
    %v1531 = vld [vmem:[%s1528 + $0x10] sm:$0xff]
    %v1532 = vld [vmem:[%s1528 + $0x18] sm:$0xff]
    %s1533 = scalar_lea.vmem %s7, 1
    %v1534 = vld [vmem:[%s1533] sm:$0x1]
    %v1536 = vperm.slane %v1534, 0
    %v1539 = vsel %vm182, %v1526, 0
    %v1542 = vsel %vm182, %v1527, 0
    %1544 = vmatpush.msra.mxu0 0.0
    %1545 = vmatpush.msra.mxu0 0.0
    %1546 = vmatpush.msra.mxu0 0.0
    %1547 = vmatpush.msra.mxu0 0.0
    %1548 = vmatpush.msra.mxu0 0.0
    %1549 = vmatpush.msra.mxu0 0.0
    %1550 = vmatpush.msra.mxu0 0.0
    %1551 = vmatpush.msra.mxu0 0.0
    %1552 = vmatpush.msra.mxu0 0.0
    %1553 = vmatpush.msra.mxu0 0.0
    %1554 = vmatpush.msra.mxu0 0.0
    %1555 = vmatpush.msra.mxu0 0.0
    %1556 = vmatpush.msra.mxu0 %v1532
    %1557 = vmatpush.msra.mxu0 %v1531
    %1558 = vmatpush.msra.mxu0 %v1530
    %1559 = vmatpush.msra.mxu0 %v1529
    %1560 = vmatmul.f32.gmra.mxu0 %v1539
    %v1561 = vpop.f32.mrf.mxu0
    %v1562 = vadd.f32 %v1536, %v1561
    %1563 = vmatmul.f32.gmra.mxu0 %v1542
    %v1564 = vpop.f32.mrf.mxu0
    %v1565 = vadd.f32 %v1536, %v1564
    %1566 = vdwg.mxu0
    %v1567 = vmul.f32 %v1562, 0.5
    %v1568 = vmul.f32 %v1565, 0.5
    %v1569 = vmul.f32 %v1562, 0.044715
    %v1570 = vmul.f32 %v1565, 0.044715
    %v1571 = vmul.f32 %v1569, %v1562
    %v1572 = vmul.f32 %v1570, %v1565
    %v1573 = vmul.f32 %v1571, %v1562
    %v1574 = vmul.f32 %v1572, %v1565
    %v1575 = vadd.f32 %v1562, %v1573
    %v1576 = vadd.f32 %v1565, %v1574
    %v1577 = vmul.f32 %v1575, 0.7978846
    %v1578 = vmul.f32 %v1576, 0.7978846
    %v1579 = vtanh.pop %v1577
    %v1580 = vtanh.pop %v1578
    %v1581 = vadd.f32 %v1579, 1.0
    %v1582 = vadd.f32 %v1580, 1.0
    %v1583 = vmul.f32 %v1567, %v1581
    %v1584 = vmul.f32 %v1568, %v1582
    %s1585 = scalar_lea.vmem [#allocation6], 64
    %v1586 = vld [vmem:[%s1585] sm:$0xff]
    %v1587 = vld [vmem:[%s1585 + $0x8] sm:$0xff]
    %v1588 = vld [vmem:[%s1585 + $0x10] sm:$0xff]
    %v1589 = vld [vmem:[%s1585 + $0x18] sm:$0xff]
    %v1590 = vld [vmem:[%s1585 + $0x20] sm:$0xff]
    %v1591 = vld [vmem:[%s1585 + $0x28] sm:$0xff]
    %v1592 = vld [vmem:[%s1585 + $0x30] sm:$0xff]
    %v1593 = vld [vmem:[%s1585 + $0x38] sm:$0xff]
    %v1594 = vld [vmem:[%s8 + $0xb] sm:$0x1]
    %v1595 = vperm.slane %v1594, 0
    %v1597 = vsel %vm878, %v1583, 0
    %v1600 = vsel %vm878, %v1584, 0
    %1602 = vmatpush.msra.mxu0 0.0
    %1603 = vmatpush.msra.mxu0 0.0
    %1604 = vmatpush.msra.mxu0 0.0
    %1605 = vmatpush.msra.mxu0 0.0
    %1606 = vmatpush.msra.mxu0 0.0
    %1607 = vmatpush.msra.mxu0 0.0
    %1608 = vmatpush.msra.mxu0 0.0
    %1609 = vmatpush.msra.mxu0 0.0
    %1610 = vmatpush.msra.mxu0 %v1593
    %1611 = vmatpush.msra.mxu0 %v1592
    %1612 = vmatpush.msra.mxu0 %v1591
    %1613 = vmatpush.msra.mxu0 %v1590
    %1614 = vmatpush.msra.mxu0 %v1589
    %1615 = vmatpush.msra.mxu0 %v1588
    %1616 = vmatpush.msra.mxu0 %v1587
    %1617 = vmatpush.msra.mxu0 %v1586
    %1618 = vmatmul.f32.gmra.mxu0 %v1597
    %v1619 = vpop.f32.mrf.mxu0
    %v1620 = vadd.f32 %v1595, %v1619
    %1621 = vmatmul.f32.gmra.mxu0 %v1600
    %v1622 = vpop.f32.mrf.mxu0
    %v1623 = vadd.f32 %v1595, %v1622
    %1624 = vdwg.mxu0
    %v1625 = vadd.f32 %v1620, %v1526
    %v1626 = vadd.f32 %v1623, %v1527
    %v1627 = vld [vmem:[%s8 + $0xc] sm:$0x1]
    %v1628 = vld [vmem:[%s8 + $0xd] sm:$0x1]
    %v1629 = vsel %vm182, %v1625, 0.0
    %1630 = vadd.xlane.f32.xlu0 %v1629
    %v1631 = vpop.xlane.xlu0 %1630
    %v1632 = vsel %vm182, %v1626, 0.0
    %1633 = vadd.xlane.f32.xlu0 %v1632
    %v1634 = vpop.xlane.xlu0 %1633
    %v1635 = vmul.f32 %v1631, %v195
    %v1636 = vmul.f32 %v1634, %v195
    %v1637 = vsub.f32 %v1625, %v1635
    %v1638 = vsub.f32 %v1626, %v1636
    %v1639 = vmul.f32 %v1637, %v1637
    %v1640 = vmul.f32 %v1638, %v1638
    %v1641 = vsel %vm182, %v1639, 0.0
    %1642 = vadd.xlane.f32.xlu0 %v1641
    %v1643 = vpop.xlane.xlu0 %1642
    %v1644 = vsel %vm182, %v1640, 0.0
    %1645 = vadd.xlane.f32.xlu0 %v1644
    %v1646 = vpop.xlane.xlu0 %1645
    %v1647 = vmul.f32 %v1643, %v195
    %v1648 = vmul.f32 %v1646, %v195
    %v1649 = vadd.f32 %v1647, 1e-12
    %v1650 = vadd.f32 %v1648, 1e-12
    %v1651 = vrsqrt.pop %v1649
    %v1652 = vmul.f32 %v1651, %v1649
    %v1653 = vmul.f32 %v1652, %v1651
    %v1654 = vmul.f32 0.5, %v1653
    %v1655 = vsub.f32 1.5, %v1654
    %v1656 = vmul.f32 %v1651, %v1655
    %vm1657 = vweird.f32 %v1649
    %vm1658 = vweird.f32 %v1651
    %vm1659 = vmor %vm1657, %vm1658
    %v1660 = vsel %vm1659, %v1651, %v1656
    %v1661 = vrsqrt.pop %v1650
    %v1662 = vmul.f32 %v1661, %v1650
    %v1663 = vmul.f32 %v1662, %v1661
    %v1664 = vmul.f32 0.5, %v1663
    %v1665 = vsub.f32 1.5, %v1664
    %v1666 = vmul.f32 %v1661, %v1665
    %vm1667 = vweird.f32 %v1650
    %vm1668 = vweird.f32 %v1661
    %vm1669 = vmor %vm1667, %vm1668
    %v1670 = vsel %vm1669, %v1661, %v1666
    %v1671 = vmul.f32 %v1637, %v1660
    %v1672 = vmul.f32 %v1638, %v1670
    %v1673 = vperm.slane %v1627, 0
    %v1674 = vmul.f32 %v1671, %v1673
    %v1675 = vmul.f32 %v1672, %v1673
    %v1676 = vperm.slane %v1628, 0
    %v1677 = vadd.f32 %v1674, %v1676
    %v1678 = vadd.f32 %v1675, %v1676
    %v1679 = vld [vmem:[#allocation7] sm:$0xff]
    %v1680 = vld [vmem:[#allocation7 + $0x8] sm:$0xff]
    %v1681 = vld [vmem:[#allocation7 + $0x10] sm:$0xff]
    %v1682 = vld [vmem:[#allocation7 + $0x18] sm:$0xff]
    %v1683 = vld [vmem:[%s8 + $0xe] sm:$0x1]
    %v1684 = vperm.slane %v1683, 0
    %v1687 = vrot.slane %v1678, 7
    %vm1688 = vcmask 1041409
    %v1689 = vsel %vm1688, %v1687, %v1677
    %v1690 = vsel %vm182, %v1689, 0
    %1692 = vmatpush.msra.mxu0 0.0
    %1693 = vmatpush.msra.mxu0 0.0
    %1694 = vmatpush.msra.mxu0 0.0
    %1695 = vmatpush.msra.mxu0 0.0
    %1696 = vmatpush.msra.mxu0 0.0
    %1697 = vmatpush.msra.mxu0 0.0
    %1698 = vmatpush.msra.mxu0 0.0
    %1699 = vmatpush.msra.mxu0 0.0
    %1700 = vmatpush.msra.mxu0 0.0
    %1701 = vmatpush.msra.mxu0 0.0
    %1702 = vmatpush.msra.mxu0 0.0
    %1703 = vmatpush.msra.mxu0 0.0
    %1704 = vmatpush.msra.mxu0 %v1682
    %1705 = vmatpush.msra.mxu0 %v1681
    %1706 = vmatpush.msra.mxu0 %v1680
    %1707 = vmatpush.msra.mxu0 %v1679
    %1708 = vmatmul.f32.gmra.mxu0 %v1690
    %v1709 = vpop.f32.mrf.mxu0
    %v1710 = vadd.f32 %v1684, %v1709
    %1711 = vdwg.mxu0
    %v1712 = vtanh.pop %v1710
    %v1713 = vld [vmem:[#allocation9] sm:$0xff]
    %v1714 = vld [vmem:[#allocation9 + $0x8] sm:$0xff]
    %v1715 = vld [vmem:[#allocation9 + $0x10] sm:$0xff]
    %v1716 = vld [vmem:[#allocation9 + $0x18] sm:$0xff]
    %v1717 = vld [vmem:[#allocation9 + $0x20] sm:$0xff]
    %v1718 = vld [vmem:[#allocation9 + $0x28] sm:$0xff]
    %v1719 = vld [vmem:[#allocation9 + $0x30] sm:$0xff]
    %v1720 = vld [vmem:[#allocation9 + $0x38] sm:$0xff]
    %v1721 = vld [vmem:[#allocation9 + $0x40] sm:$0xff]
    %v1722 = vld [vmem:[#allocation9 + $0x48] sm:$0xff]
    %v1723 = vld [vmem:[#allocation9 + $0x50] sm:$0xff]
    %v1724 = vld [vmem:[#allocation9 + $0x58] sm:$0xff]
    %v1725 = vld [vmem:[#allocation9 + $0x60] sm:$0xff]
    %v1726 = vld [vmem:[#allocation9 + $0x68] sm:$0xff]
    %v1727 = vld [vmem:[#allocation9 + $0x70] sm:$0xff]
    %v1728 = vld [vmem:[#allocation9 + $0x78] sm:$0xff]
    %v1729 = vld [vmem:[%s15] sm:$0xf]
    %v1731 = vperm.slane %v1729, 0
    %v1732 = vperm.slane %v1729, 1
    %v1733 = vperm.slane %v1729, 2
    %v1734 = vperm.slane %v1729, 3
    %v1740 = vsel %vm182, %v1712, 0
    %1742 = vmatpush.msra.mxu0 0.0
    %1743 = vmatpush.msra.mxu0 0.0
    %1744 = vmatpush.msra.mxu0 0.0
    %1745 = vmatpush.msra.mxu0 0.0
    %1746 = vmatpush.msra.mxu0 0.0
    %1747 = vmatpush.msra.mxu0 0.0
    %1748 = vmatpush.msra.mxu0 0.0
    %1749 = vmatpush.msra.mxu0 0.0
    %1750 = vmatpush.msra.mxu0 0.0
    %1751 = vmatpush.msra.mxu0 0.0
    %1752 = vmatpush.msra.mxu0 0.0
    %1753 = vmatpush.msra.mxu0 0.0
    %1754 = vmatpush.msra.mxu0 %v1725
    %1755 = vmatpush.msra.mxu0 %v1721
    %1756 = vmatpush.msra.mxu0 %v1717
    %1757 = vmatpush.msra.mxu0 %v1713
    %1758 = vmatmul.f32.gmra.mxu0 %v1740
    %v1759 = vpop.f32.mrf.mxu0
    %v1760 = vadd.f32 %v1731, %v1759
    %1761 = vdwg.mxu0
    %1762 = vmatpush.msra.mxu0 0.0
    %1763 = vmatpush.msra.mxu0 0.0
    %1764 = vmatpush.msra.mxu0 0.0
    %1765 = vmatpush.msra.mxu0 0.0
    %1766 = vmatpush.msra.mxu0 0.0
    %1767 = vmatpush.msra.mxu0 0.0
    %1768 = vmatpush.msra.mxu0 0.0
    %1769 = vmatpush.msra.mxu0 0.0
    %1770 = vmatpush.msra.mxu0 0.0
    %1771 = vmatpush.msra.mxu0 0.0
    %1772 = vmatpush.msra.mxu0 0.0
    %1773 = vmatpush.msra.mxu0 0.0
    %1774 = vmatpush.msra.mxu0 %v1726
    %1775 = vmatpush.msra.mxu0 %v1722
    %1776 = vmatpush.msra.mxu0 %v1718
    %1777 = vmatpush.msra.mxu0 %v1714
    %1778 = vmatmul.f32.gmra.mxu0 %v1740
    %v1779 = vpop.f32.mrf.mxu0
    %v1780 = vadd.f32 %v1732, %v1779
    %1781 = vdwg.mxu0
    %1782 = vmatpush.msra.mxu0 0.0
    %1783 = vmatpush.msra.mxu0 0.0
    %1784 = vmatpush.msra.mxu0 0.0
    %1785 = vmatpush.msra.mxu0 0.0
    %1786 = vmatpush.msra.mxu0 0.0
    %1787 = vmatpush.msra.mxu0 0.0
    %1788 = vmatpush.msra.mxu0 0.0
    %1789 = vmatpush.msra.mxu0 0.0
    %1790 = vmatpush.msra.mxu0 0.0
    %1791 = vmatpush.msra.mxu0 0.0
    %1792 = vmatpush.msra.mxu0 0.0
    %1793 = vmatpush.msra.mxu0 0.0
    %1794 = vmatpush.msra.mxu0 %v1727
    %1795 = vmatpush.msra.mxu0 %v1723
    %1796 = vmatpush.msra.mxu0 %v1719
    %1797 = vmatpush.msra.mxu0 %v1715
    %1798 = vmatmul.f32.gmra.mxu0 %v1740
    %v1799 = vpop.f32.mrf.mxu0
    %v1800 = vadd.f32 %v1733, %v1799
    %1801 = vdwg.mxu0
    %1802 = vmatpush.msra.mxu0 0.0
    %1803 = vmatpush.msra.mxu0 0.0
    %1804 = vmatpush.msra.mxu0 0.0
    %1805 = vmatpush.msra.mxu0 0.0
    %1806 = vmatpush.msra.mxu0 0.0
    %1807 = vmatpush.msra.mxu0 0.0
    %1808 = vmatpush.msra.mxu0 0.0
    %1809 = vmatpush.msra.mxu0 0.0
    %1810 = vmatpush.msra.mxu0 0.0
    %1811 = vmatpush.msra.mxu0 0.0
    %1812 = vmatpush.msra.mxu0 0.0
    %1813 = vmatpush.msra.mxu0 0.0
    %1814 = vmatpush.msra.mxu0 %v1728
    %1815 = vmatpush.msra.mxu0 %v1724
    %1816 = vmatpush.msra.mxu0 %v1720
    %1817 = vmatpush.msra.mxu0 %v1716
    %1818 = vmatmul.f32.gmra.mxu0 %v1740
    %v1819 = vpop.f32.mrf.mxu0
    %v1820 = vadd.f32 %v1734, %v1819
    %1821 = vdwg.mxu0
    %v1822 = vmax.f32 %v1760, 0.0
    %v1823 = vmax.f32 %v1780, 0.0
    %v1824 = vmax.f32 %v1800, 0.0
    %v1825 = vmax.f32 %v1820, 0.0
    %v1826 = vld [vmem:[#allocation10] sm:$0xff]
    %v1827 = vld [vmem:[#allocation10 + $0x8] sm:$0xff]
    %v1828 = vld [vmem:[#allocation10 + $0x10] sm:$0xff]
    %v1829 = vld [vmem:[#allocation10 + $0x18] sm:$0xff]
    %v1830 = vld [vmem:[#allocation10 + $0x20] sm:$0xff]
    %v1831 = vld [vmem:[#allocation10 + $0x28] sm:$0xff]
    %v1832 = vld [vmem:[#allocation10 + $0x30] sm:$0xff]
    %v1833 = vld [vmem:[#allocation10 + $0x38] sm:$0xff]
    %v1834 = vld [vmem:[#allocation10 + $0x40] sm:$0xff]
    %v1835 = vld [vmem:[#allocation10 + $0x48] sm:$0xff]
    %v1836 = vld [vmem:[#allocation10 + $0x50] sm:$0xff]
    %v1837 = vld [vmem:[#allocation10 + $0x58] sm:$0xff]
    %v1838 = vld [vmem:[#allocation10 + $0x60] sm:$0xff]
    %v1839 = vld [vmem:[#allocation10 + $0x68] sm:$0xff]
    %v1840 = vld [vmem:[#allocation10 + $0x70] sm:$0xff]
    %v1841 = vld [vmem:[#allocation10 + $0x78] sm:$0xff]
    %v1842 = vld [vmem:[#allocation10 + $0x80] sm:$0xff]
    %v1843 = vld [vmem:[#allocation10 + $0x88] sm:$0xff]
    %v1844 = vld [vmem:[#allocation10 + $0x90] sm:$0xff]
    %v1845 = vld [vmem:[#allocation10 + $0x98] sm:$0xff]
    %v1846 = vld [vmem:[#allocation10 + $0xa0] sm:$0xff]
    %v1847 = vld [vmem:[#allocation10 + $0xa8] sm:$0xff]
    %v1848 = vld [vmem:[#allocation10 + $0xb0] sm:$0xff]
    %v1849 = vld [vmem:[#allocation10 + $0xb8] sm:$0xff]
    %v1850 = vld [vmem:[#allocation10 + $0xc0] sm:$0xff]
    %v1851 = vld [vmem:[#allocation10 + $0xc8] sm:$0xff]
    %v1852 = vld [vmem:[#allocation10 + $0xd0] sm:$0xff]
    %v1853 = vld [vmem:[#allocation10 + $0xd8] sm:$0xff]
    %v1854 = vld [vmem:[#allocation10 + $0xe0] sm:$0xff]
    %v1855 = vld [vmem:[#allocation10 + $0xe8] sm:$0xff]
    %v1856 = vld [vmem:[#allocation10 + $0xf0] sm:$0xff]
    %v1857 = vld [vmem:[#allocation10 + $0xf8] sm:$0xff]
    %v1858 = vld [vmem:[#allocation10 + $0x100] sm:$0xff]
    %v1859 = vld [vmem:[#allocation10 + $0x108] sm:$0xff]
    %v1860 = vld [vmem:[#allocation10 + $0x110] sm:$0xff]
    %v1861 = vld [vmem:[#allocation10 + $0x118] sm:$0xff]
    %v1862 = vld [vmem:[#allocation10 + $0x120] sm:$0xff]
    %v1863 = vld [vmem:[#allocation10 + $0x128] sm:$0xff]
    %v1864 = vld [vmem:[#allocation10 + $0x130] sm:$0xff]
    %v1865 = vld [vmem:[#allocation10 + $0x138] sm:$0xff]
    %v1866 = vld [vmem:[#allocation10 + $0x140] sm:$0xff]
    %v1867 = vld [vmem:[#allocation10 + $0x148] sm:$0xff]
    %v1868 = vld [vmem:[#allocation10 + $0x150] sm:$0xff]
    %v1869 = vld [vmem:[#allocation10 + $0x158] sm:$0xff]
    %v1870 = vld [vmem:[#allocation10 + $0x160] sm:$0xff]
    %v1871 = vld [vmem:[#allocation10 + $0x168] sm:$0xff]
    %v1872 = vld [vmem:[#allocation10 + $0x170] sm:$0xff]
    %v1873 = vld [vmem:[#allocation10 + $0x178] sm:$0xff]
    %v1874 = vld [vmem:[#allocation10 + $0x180] sm:$0xff]
    %v1875 = vld [vmem:[#allocation10 + $0x188] sm:$0xff]
    %v1876 = vld [vmem:[#allocation10 + $0x190] sm:$0xff]
    %v1877 = vld [vmem:[#allocation10 + $0x198] sm:$0xff]
    %v1878 = vld [vmem:[#allocation10 + $0x1a0] sm:$0xff]
    %v1879 = vld [vmem:[#allocation10 + $0x1a8] sm:$0xff]
    %v1880 = vld [vmem:[#allocation10 + $0x1b0] sm:$0xff]
    %v1881 = vld [vmem:[#allocation10 + $0x1b8] sm:$0xff]
    %v1882 = vld [vmem:[#allocation10 + $0x1c0] sm:$0xff]
    %v1883 = vld [vmem:[#allocation10 + $0x1c8] sm:$0xff]
    %v1884 = vld [vmem:[#allocation10 + $0x1d0] sm:$0xff]
    %v1885 = vld [vmem:[#allocation10 + $0x1d8] sm:$0xff]
    %v1886 = vld [vmem:[#allocation10 + $0x1e0] sm:$0xff]
    %v1887 = vld [vmem:[#allocation10 + $0x1e8] sm:$0xff]
    %v1888 = vld [vmem:[#allocation10 + $0x1f0] sm:$0xff]
    %v1889 = vld [vmem:[#allocation10 + $0x1f8] sm:$0xff]
    %v1890 = vld [vmem:[#allocation10 + $0x200] sm:$0xff]
    %v1891 = vld [vmem:[#allocation10 + $0x208] sm:$0xff]
    %v1892 = vld [vmem:[#allocation10 + $0x210] sm:$0xff]
    %v1893 = vld [vmem:[#allocation10 + $0x218] sm:$0xff]
    %v1894 = vld [vmem:[#allocation10 + $0x220] sm:$0xff]
    %v1895 = vld [vmem:[#allocation10 + $0x228] sm:$0xff]
    %v1896 = vld [vmem:[#allocation10 + $0x230] sm:$0xff]
    %v1897 = vld [vmem:[#allocation10 + $0x238] sm:$0xff]
    %v1898 = vld [vmem:[#allocation10 + $0x240] sm:$0xff]
    %v1899 = vld [vmem:[#allocation10 + $0x248] sm:$0xff]
    %v1900 = vld [vmem:[#allocation10 + $0x250] sm:$0xff]
    %v1901 = vld [vmem:[#allocation10 + $0x258] sm:$0xff]
    %v1902 = vld [vmem:[#allocation10 + $0x260] sm:$0xff]
    %v1903 = vld [vmem:[#allocation10 + $0x268] sm:$0xff]
    %v1904 = vld [vmem:[#allocation10 + $0x270] sm:$0xff]
    %v1905 = vld [vmem:[#allocation10 + $0x278] sm:$0xff]
    %v1906 = vld [vmem:[#allocation10 + $0x280] sm:$0xff]
    %v1907 = vld [vmem:[#allocation10 + $0x288] sm:$0xff]
    %v1908 = vld [vmem:[#allocation10 + $0x290] sm:$0xff]
    %v1909 = vld [vmem:[#allocation10 + $0x298] sm:$0xff]
    %v1910 = vld [vmem:[#allocation10 + $0x2a0] sm:$0xff]
    %v1911 = vld [vmem:[#allocation10 + $0x2a8] sm:$0xff]
    %v1912 = vld [vmem:[#allocation10 + $0x2b0] sm:$0xff]
    %v1913 = vld [vmem:[#allocation10 + $0x2b8] sm:$0xff]
    %v1914 = vld [vmem:[#allocation10 + $0x2c0] sm:$0xff]
    %v1915 = vld [vmem:[#allocation10 + $0x2c8] sm:$0xff]
    %v1916 = vld [vmem:[#allocation10 + $0x2d0] sm:$0xff]
    %v1917 = vld [vmem:[#allocation10 + $0x2d8] sm:$0xff]
    %v1918 = vld [vmem:[#allocation10 + $0x2e0] sm:$0xff]
    %v1919 = vld [vmem:[#allocation10 + $0x2e8] sm:$0xff]
    %v1920 = vld [vmem:[#allocation10 + $0x2f0] sm:$0xff]
    %v1921 = vld [vmem:[#allocation10 + $0x2f8] sm:$0xff]
    %v1922 = vld [vmem:[#allocation10 + $0x300] sm:$0xff]
    %v1923 = vld [vmem:[#allocation10 + $0x308] sm:$0xff]
    %v1924 = vld [vmem:[#allocation10 + $0x310] sm:$0xff]
    %v1925 = vld [vmem:[#allocation10 + $0x318] sm:$0xff]
    %v1926 = vld [vmem:[#allocation10 + $0x320] sm:$0xff]
    %v1927 = vld [vmem:[#allocation10 + $0x328] sm:$0xff]
    %v1928 = vld [vmem:[#allocation10 + $0x330] sm:$0xff]
    %v1929 = vld [vmem:[#allocation10 + $0x338] sm:$0xff]
    %v1930 = vld [vmem:[#allocation10 + $0x340] sm:$0xff]
    %v1931 = vld [vmem:[#allocation10 + $0x348] sm:$0xff]
    %v1932 = vld [vmem:[#allocation10 + $0x350] sm:$0xff]
    %v1933 = vld [vmem:[#allocation10 + $0x358] sm:$0xff]
    %v1934 = vld [vmem:[#allocation10 + $0x360] sm:$0xff]
    %v1935 = vld [vmem:[#allocation10 + $0x368] sm:$0xff]
    %v1936 = vld [vmem:[#allocation10 + $0x370] sm:$0xff]
    %v1937 = vld [vmem:[#allocation10 + $0x378] sm:$0xff]
    %v1938 = vld [vmem:[#allocation10 + $0x380] sm:$0xff]
    %v1939 = vld [vmem:[#allocation10 + $0x388] sm:$0xff]
    %v1940 = vld [vmem:[#allocation10 + $0x390] sm:$0xff]
    %v1941 = vld [vmem:[#allocation10 + $0x398] sm:$0xff]
    %v1942 = vld [vmem:[#allocation10 + $0x3a0] sm:$0xff]
    %v1943 = vld [vmem:[#allocation10 + $0x3a8] sm:$0xff]
    %v1944 = vld [vmem:[#allocation10 + $0x3b0] sm:$0xff]
    %v1945 = vld [vmem:[#allocation10 + $0x3b8] sm:$0xff]
    %v1946 = vld [vmem:[#allocation10 + $0x3c0] sm:$0xff]
    %v1947 = vld [vmem:[#allocation10 + $0x3c8] sm:$0xff]
    %v1948 = vld [vmem:[#allocation10 + $0x3d0] sm:$0xff]
    %v1949 = vld [vmem:[#allocation10 + $0x3d8] sm:$0xff]
    %v1950 = vld [vmem:[#allocation10 + $0x3e0] sm:$0xff]
    %v1951 = vld [vmem:[#allocation10 + $0x3e8] sm:$0xff]
    %v1952 = vld [vmem:[#allocation10 + $0x3f0] sm:$0xff]
    %v1953 = vld [vmem:[#allocation10 + $0x3f8] sm:$0xff]
    %v1954 = vld [vmem:[%s15 + $0x4] sm:$0x3]
    %v1956 = vperm.slane %v1954, 0
    %v1957 = vperm.slane %v1954, 1
    %1960 = vmatpush.msra.mxu0 %v1856
    %1961 = vmatpush.msra.mxu0 %v1854
    %1962 = vmatpush.msra.mxu0 %v1852
    %1963 = vmatpush.msra.mxu0 %v1850
    %1964 = vmatpush.msra.mxu0 %v1848
    %1965 = vmatpush.msra.mxu0 %v1846
    %1966 = vmatpush.msra.mxu0 %v1844
    %1967 = vmatpush.msra.mxu0 %v1842
    %1968 = vmatpush.msra.mxu0 %v1840
    %1969 = vmatpush.msra.mxu0 %v1838
    %1970 = vmatpush.msra.mxu0 %v1836
    %1971 = vmatpush.msra.mxu0 %v1834
    %1972 = vmatpush.msra.mxu0 %v1832
    %1973 = vmatpush.msra.mxu0 %v1830
    %1974 = vmatpush.msra.mxu0 %v1828
    %1975 = vmatpush.msra.mxu0 %v1826
    %1976 = vmatmul.f32.gmra.mxu0 %v1822
    %v1977 = vpop.f32.mrf.mxu0
    %v1978 = vadd.f32 %v1956, %v1977
    %1979 = vdwg.mxu0
    %1980 = vmatpush.msra.mxu0 %v1888
    %1981 = vmatpush.msra.mxu0 %v1886
    %1982 = vmatpush.msra.mxu0 %v1884
    %1983 = vmatpush.msra.mxu0 %v1882
    %1984 = vmatpush.msra.mxu0 %v1880
    %1985 = vmatpush.msra.mxu0 %v1878
    %1986 = vmatpush.msra.mxu0 %v1876
    %1987 = vmatpush.msra.mxu0 %v1874
    %1988 = vmatpush.msra.mxu0 %v1872
    %1989 = vmatpush.msra.mxu0 %v1870
    %1990 = vmatpush.msra.mxu0 %v1868
    %1991 = vmatpush.msra.mxu0 %v1866
    %1992 = vmatpush.msra.mxu0 %v1864
    %1993 = vmatpush.msra.mxu0 %v1862
    %1994 = vmatpush.msra.mxu0 %v1860
    %1995 = vmatpush.msra.mxu0 %v1858
    %1996 = vmatmul.f32.gmra.mxu0 %v1823
    %v1997 = vpop.f32.mrf.mxu0
    %v1998 = vadd.f32 %v1978, %v1997
    %1999 = vdwg.mxu0
    %2000 = vmatpush.msra.mxu0 %v1920
    %2001 = vmatpush.msra.mxu0 %v1918
    %2002 = vmatpush.msra.mxu0 %v1916
    %2003 = vmatpush.msra.mxu0 %v1914
    %2004 = vmatpush.msra.mxu0 %v1912
    %2005 = vmatpush.msra.mxu0 %v1910
    %2006 = vmatpush.msra.mxu0 %v1908
    %2007 = vmatpush.msra.mxu0 %v1906
    %2008 = vmatpush.msra.mxu0 %v1904
    %2009 = vmatpush.msra.mxu0 %v1902
    %2010 = vmatpush.msra.mxu0 %v1900
    %2011 = vmatpush.msra.mxu0 %v1898
    %2012 = vmatpush.msra.mxu0 %v1896
    %2013 = vmatpush.msra.mxu0 %v1894
    %2014 = vmatpush.msra.mxu0 %v1892
    %2015 = vmatpush.msra.mxu0 %v1890
    %2016 = vmatmul.f32.gmra.mxu0 %v1824
    %v2017 = vpop.f32.mrf.mxu0
    %v2018 = vadd.f32 %v1998, %v2017
    %2019 = vdwg.mxu0
    %2020 = vmatpush.msra.mxu0 %v1952
    %2021 = vmatpush.msra.mxu0 %v1950
    %2022 = vmatpush.msra.mxu0 %v1948
    %2023 = vmatpush.msra.mxu0 %v1946
    %2024 = vmatpush.msra.mxu0 %v1944
    %2025 = vmatpush.msra.mxu0 %v1942
    %2026 = vmatpush.msra.mxu0 %v1940
    %2027 = vmatpush.msra.mxu0 %v1938
    %2028 = vmatpush.msra.mxu0 %v1936
    %2029 = vmatpush.msra.mxu0 %v1934
    %2030 = vmatpush.msra.mxu0 %v1932
    %2031 = vmatpush.msra.mxu0 %v1930
    %2032 = vmatpush.msra.mxu0 %v1928
    %2033 = vmatpush.msra.mxu0 %v1926
    %2034 = vmatpush.msra.mxu0 %v1924
    %2035 = vmatpush.msra.mxu0 %v1922
    %2036 = vmatmul.f32.gmra.mxu0 %v1825
    %v2037 = vpop.f32.mrf.mxu0
    %v2038 = vadd.f32 %v2018, %v2037
    %2039 = vdwg.mxu0
    %2040 = vmatpush.msra.mxu0 %v1857
    %2041 = vmatpush.msra.mxu0 %v1855
    %2042 = vmatpush.msra.mxu0 %v1853
    %2043 = vmatpush.msra.mxu0 %v1851
    %2044 = vmatpush.msra.mxu0 %v1849
    %2045 = vmatpush.msra.mxu0 %v1847
    %2046 = vmatpush.msra.mxu0 %v1845
    %2047 = vmatpush.msra.mxu0 %v1843
    %2048 = vmatpush.msra.mxu0 %v1841
    %2049 = vmatpush.msra.mxu0 %v1839
    %2050 = vmatpush.msra.mxu0 %v1837
    %2051 = vmatpush.msra.mxu0 %v1835
    %2052 = vmatpush.msra.mxu0 %v1833
    %2053 = vmatpush.msra.mxu0 %v1831
    %2054 = vmatpush.msra.mxu0 %v1829
    %2055 = vmatpush.msra.mxu0 %v1827
    %2056 = vmatmul.f32.gmra.mxu0 %v1822
    %v2057 = vpop.f32.mrf.mxu0
    %v2058 = vadd.f32 %v1957, %v2057
    %2059 = vdwg.mxu0
    %2060 = vmatpush.msra.mxu0 %v1889
    %2061 = vmatpush.msra.mxu0 %v1887
    %2062 = vmatpush.msra.mxu0 %v1885
    %2063 = vmatpush.msra.mxu0 %v1883
    %2064 = vmatpush.msra.mxu0 %v1881
    %2065 = vmatpush.msra.mxu0 %v1879
    %2066 = vmatpush.msra.mxu0 %v1877
    %2067 = vmatpush.msra.mxu0 %v1875
    %2068 = vmatpush.msra.mxu0 %v1873
    %2069 = vmatpush.msra.mxu0 %v1871
    %2070 = vmatpush.msra.mxu0 %v1869
    %2071 = vmatpush.msra.mxu0 %v1867
    %2072 = vmatpush.msra.mxu0 %v1865
    %2073 = vmatpush.msra.mxu0 %v1863
    %2074 = vmatpush.msra.mxu0 %v1861
    %2075 = vmatpush.msra.mxu0 %v1859
    %2076 = vmatmul.f32.gmra.mxu0 %v1823
    %v2077 = vpop.f32.mrf.mxu0
    %v2078 = vadd.f32 %v2058, %v2077
    %2079 = vdwg.mxu0
    %2080 = vmatpush.msra.mxu0 %v1921
    %2081 = vmatpush.msra.mxu0 %v1919
    %2082 = vmatpush.msra.mxu0 %v1917
    %2083 = vmatpush.msra.mxu0 %v1915
    %2084 = vmatpush.msra.mxu0 %v1913
    %2085 = vmatpush.msra.mxu0 %v1911
    %2086 = vmatpush.msra.mxu0 %v1909
    %2087 = vmatpush.msra.mxu0 %v1907
    %2088 = vmatpush.msra.mxu0 %v1905
    %2089 = vmatpush.msra.mxu0 %v1903
    %2090 = vmatpush.msra.mxu0 %v1901
    %2091 = vmatpush.msra.mxu0 %v1899
    %2092 = vmatpush.msra.mxu0 %v1897
    %2093 = vmatpush.msra.mxu0 %v1895
    %2094 = vmatpush.msra.mxu0 %v1893
    %2095 = vmatpush.msra.mxu0 %v1891
    %2096 = vmatmul.f32.gmra.mxu0 %v1824
    %v2097 = vpop.f32.mrf.mxu0
    %v2098 = vadd.f32 %v2078, %v2097
    %2099 = vdwg.mxu0
    %2100 = vmatpush.msra.mxu0 %v1953
    %2101 = vmatpush.msra.mxu0 %v1951
    %2102 = vmatpush.msra.mxu0 %v1949
    %2103 = vmatpush.msra.mxu0 %v1947
    %2104 = vmatpush.msra.mxu0 %v1945
    %2105 = vmatpush.msra.mxu0 %v1943
    %2106 = vmatpush.msra.mxu0 %v1941
    %2107 = vmatpush.msra.mxu0 %v1939
    %2108 = vmatpush.msra.mxu0 %v1937
    %2109 = vmatpush.msra.mxu0 %v1935
    %2110 = vmatpush.msra.mxu0 %v1933
    %2111 = vmatpush.msra.mxu0 %v1931
    %2112 = vmatpush.msra.mxu0 %v1929
    %2113 = vmatpush.msra.mxu0 %v1927
    %2114 = vmatpush.msra.mxu0 %v1925
    %2115 = vmatpush.msra.mxu0 %v1923
    %2116 = vmatmul.f32.gmra.mxu0 %v1825
    %v2117 = vpop.f32.mrf.mxu0
    %v2118 = vadd.f32 %v2098, %v2117
    %2119 = vdwg.mxu0
    %v2120 = vmax.f32 %v2038, 0.0
    %v2121 = vmax.f32 %v2118, 0.0
    %v2122 = vld [vmem:[#allocation12] sm:$0xff]
    %v2123 = vld [vmem:[#allocation12 + $0x8] sm:$0xff]
    %v2124 = vld [vmem:[#allocation12 + $0x10] sm:$0xff]
    %v2125 = vld [vmem:[#allocation12 + $0x18] sm:$0xff]
    %v2126 = vld [vmem:[#allocation12 + $0x20] sm:$0xff]
    %v2127 = vld [vmem:[#allocation12 + $0x28] sm:$0xff]
    %v2128 = vld [vmem:[#allocation12 + $0x30] sm:$0xff]
    %v2129 = vld [vmem:[#allocation12 + $0x38] sm:$0xff]
    %v2130 = vld [vmem:[#allocation12 + $0x40] sm:$0xff]
    %v2131 = vld [vmem:[#allocation12 + $0x48] sm:$0xff]
    %v2132 = vld [vmem:[#allocation12 + $0x50] sm:$0xff]
    %v2133 = vld [vmem:[#allocation12 + $0x58] sm:$0xff]
    %v2134 = vld [vmem:[#allocation12 + $0x60] sm:$0xff]
    %v2135 = vld [vmem:[#allocation12 + $0x68] sm:$0xff]
    %v2136 = vld [vmem:[#allocation12 + $0x70] sm:$0xff]
    %v2137 = vld [vmem:[#allocation12 + $0x78] sm:$0xff]
    %v2138 = vld [vmem:[#allocation12 + $0x80] sm:$0xff]
    %v2139 = vld [vmem:[#allocation12 + $0x88] sm:$0xff]
    %v2140 = vld [vmem:[#allocation12 + $0x90] sm:$0xff]
    %v2141 = vld [vmem:[#allocation12 + $0x98] sm:$0xff]
    %v2142 = vld [vmem:[#allocation12 + $0xa0] sm:$0xff]
    %v2143 = vld [vmem:[#allocation12 + $0xa8] sm:$0xff]
    %v2144 = vld [vmem:[#allocation12 + $0xb0] sm:$0xff]
    %v2145 = vld [vmem:[#allocation12 + $0xb8] sm:$0xff]
    %v2146 = vld [vmem:[#allocation12 + $0xc0] sm:$0xff]
    %v2147 = vld [vmem:[#allocation12 + $0xc8] sm:$0xff]
    %v2148 = vld [vmem:[#allocation12 + $0xd0] sm:$0xff]
    %v2149 = vld [vmem:[#allocation12 + $0xd8] sm:$0xff]
    %v2150 = vld [vmem:[#allocation12 + $0xe0] sm:$0xff]
    %v2151 = vld [vmem:[#allocation12 + $0xe8] sm:$0xff]
    %v2152 = vld [vmem:[#allocation12 + $0xf0] sm:$0xff]
    %v2153 = vld [vmem:[#allocation12 + $0xf8] sm:$0xff]
    %v2154 = vld [vmem:[%s15 + $0x6] sm:$0x1]
    %v2156 = vperm.slane %v2154, 0
    %2158 = vmatpush.msra.mxu0 %v2137
    %2159 = vmatpush.msra.mxu0 %v2136
    %2160 = vmatpush.msra.mxu0 %v2135
    %2161 = vmatpush.msra.mxu0 %v2134
    %2162 = vmatpush.msra.mxu0 %v2133
    %2163 = vmatpush.msra.mxu0 %v2132
    %2164 = vmatpush.msra.mxu0 %v2131
    %2165 = vmatpush.msra.mxu0 %v2130
    %2166 = vmatpush.msra.mxu0 %v2129
    %2167 = vmatpush.msra.mxu0 %v2128
    %2168 = vmatpush.msra.mxu0 %v2127
    %2169 = vmatpush.msra.mxu0 %v2126
    %2170 = vmatpush.msra.mxu0 %v2125
    %2171 = vmatpush.msra.mxu0 %v2124
    %2172 = vmatpush.msra.mxu0 %v2123
    %2173 = vmatpush.msra.mxu0 %v2122
    %2174 = vmatmul.f32.gmra.mxu0 %v2120
    %v2175 = vpop.f32.mrf.mxu0
    %v2176 = vadd.f32 %v2156, %v2175
    %2177 = vdwg.mxu0
    %2178 = vmatpush.msra.mxu0 %v2153
    %2179 = vmatpush.msra.mxu0 %v2152
    %2180 = vmatpush.msra.mxu0 %v2151
    %2181 = vmatpush.msra.mxu0 %v2150
    %2182 = vmatpush.msra.mxu0 %v2149
    %2183 = vmatpush.msra.mxu0 %v2148
    %2184 = vmatpush.msra.mxu0 %v2147
    %2185 = vmatpush.msra.mxu0 %v2146
    %2186 = vmatpush.msra.mxu0 %v2145
    %2187 = vmatpush.msra.mxu0 %v2144
    %2188 = vmatpush.msra.mxu0 %v2143
    %2189 = vmatpush.msra.mxu0 %v2142
    %2190 = vmatpush.msra.mxu0 %v2141
    %2191 = vmatpush.msra.mxu0 %v2140
    %2192 = vmatpush.msra.mxu0 %v2139
    %2193 = vmatpush.msra.mxu0 %v2138
    %2194 = vmatmul.f32.gmra.mxu0 %v2121
    %v2195 = vpop.f32.mrf.mxu0
    %v2196 = vadd.f32 %v2176, %v2195
    %2197 = vdwg.mxu0
    %v2198 = vmax.f32 %v2196, 0.0
    %v2199 = vld [vmem:[%s13] sm:$0xff]
    %v2200 = vld [vmem:[%s13 + $0x8] sm:$0xff]
    %v2201 = vld [vmem:[%s13 + $0x10] sm:$0xff]
    %v2202 = vld [vmem:[%s13 + $0x18] sm:$0xff]
    %v2203 = vld [vmem:[%s13 + $0x20] sm:$0xff]
    %v2204 = vld [vmem:[%s13 + $0x28] sm:$0xff]
    %v2205 = vld [vmem:[%s13 + $0x30] sm:$0xff]
    %v2206 = vld [vmem:[%s13 + $0x38] sm:$0xff]
    %v2207 = vld [vmem:[%s13 + $0x40] sm:$0xff]
    %v2208 = vld [vmem:[%s13 + $0x48] sm:$0xff]
    %v2209 = vld [vmem:[%s13 + $0x50] sm:$0xff]
    %v2210 = vld [vmem:[%s13 + $0x58] sm:$0xff]
    %v2211 = vld [vmem:[%s13 + $0x60] sm:$0xff]
    %v2212 = vld [vmem:[%s13 + $0x68] sm:$0xff]
    %v2213 = vld [vmem:[%s13 + $0x70] sm:$0xff]
    %v2214 = vld [vmem:[%s13 + $0x78] sm:$0xff]
    %v2215 = vld [vmem:[%s15 + $0x7] sm:$0x1]
    %v2217 = vperm.slane %v2215, 0
    %2219 = vmatpush.msra.mxu0 %v2214
    %2220 = vmatpush.msra.mxu0 %v2213
    %2221 = vmatpush.msra.mxu0 %v2212
    %2222 = vmatpush.msra.mxu0 %v2211
    %2223 = vmatpush.msra.mxu0 %v2210
    %2224 = vmatpush.msra.mxu0 %v2209
    %2225 = vmatpush.msra.mxu0 %v2208
    %2226 = vmatpush.msra.mxu0 %v2207
    %2227 = vmatpush.msra.mxu0 %v2206
    %2228 = vmatpush.msra.mxu0 %v2205
    %2229 = vmatpush.msra.mxu0 %v2204
    %2230 = vmatpush.msra.mxu0 %v2203
    %2231 = vmatpush.msra.mxu0 %v2202
    %2232 = vmatpush.msra.mxu0 %v2201
    %2233 = vmatpush.msra.mxu0 %v2200
    %2234 = vmatpush.msra.mxu0 %v2199
    %2235 = vmatmul.f32.gmra.mxu0 %v2198
    %v2236 = vpop.f32.mrf.mxu0
    %v2237 = vadd.f32 %v2217, %v2236
    %2238 = vdwg.mxu0
    %v2239 = vmax.f32 %v2237, 0.0
    %v2240 = vld [vmem:[#allocation13] sm:$0xff]
    %v2241 = vld [vmem:[#allocation13 + $0x8] sm:$0xff]
    %v2242 = vld [vmem:[#allocation13 + $0x10] sm:$0xff]
    %v2243 = vld [vmem:[#allocation13 + $0x18] sm:$0xff]
    %2244 = vrot.lane.b32.xlu0 %v2217, 96
    %v2245 = vpop.permute.xlu0 %2244
    %v2248 = vsel %vm182, %v2239, 0
    %2250 = vmatpush.msra.mxu0 0.0
    %2251 = vmatpush.msra.mxu0 0.0
    %2252 = vmatpush.msra.mxu0 0.0
    %2253 = vmatpush.msra.mxu0 0.0
    %2254 = vmatpush.msra.mxu0 0.0
    %2255 = vmatpush.msra.mxu0 0.0
    %2256 = vmatpush.msra.mxu0 0.0
    %2257 = vmatpush.msra.mxu0 0.0
    %2258 = vmatpush.msra.mxu0 0.0
    %2259 = vmatpush.msra.mxu0 0.0
    %2260 = vmatpush.msra.mxu0 0.0
    %2261 = vmatpush.msra.mxu0 0.0
    %2262 = vmatpush.msra.mxu0 %v2243
    %2263 = vmatpush.msra.mxu0 %v2242
    %2264 = vmatpush.msra.mxu0 %v2241
    %2265 = vmatpush.msra.mxu0 %v2240
    %2266 = vmatmul.f32.gmra.mxu0 %v2248
    %v2267 = vpop.f32.mrf.mxu0
    %v2268 = vadd.f32 %v2245, %v2267
    %2269 = vdwg.mxu0
    %vm2270 = vcmask 1024
    %2271 = vst.msk [vmem:[%s16] sm:$0x3] %vm2270, %v2268
    // Predicated region
    $region98: #{bert_finetune_forward.1} parent=1 // pred_check
      _
    $region99: #{bert_finetune_forward.1} parent=1 // pred_check_branch
      %2273 = sbr.rel (0) target = $region101
    $region100: #{bert_finetune_forward.1} parent=1 // pred_region
      _
    $region101: #{bert_finetune_forward.1} parent=1 // pred_fallthru
      _
    // Predicated region
    $region102: #{bert_finetune_forward.1} parent=1 // pred_check
      _
    $region103: #{bert_finetune_forward.1} parent=1 // pred_check_branch
      %2275 = sbr.rel (0) target = $region105
    $region104: #{bert_finetune_forward.1} parent=1 // pred_region
      _
    $region105: #{bert_finetune_forward.1} parent=1 // pred_fallthru
      _
    %2276 = vsyncpa [#allocation3], 1
    %2277 = vsyncpa [#allocation5], 1
    %2278 = vsyncpa [#allocation8], 1
    %2279 = vsyncpa [#allocation11], 1
    %2280 = vsyncpa [#allocation14], 1

</llo_original>
